<compile_context>
chip_gen: v7x
topology: tpu7x:2x2x1
jax: 0.10.0
libtpu: 0.0.40
codegen_flags: <defaults>
</compile_context>

<pallas_src>
import jax
import jax.numpy as jnp
from jax import lax
from jax.experimental import pallas as pl
from jax.experimental.pallas import tpu as pltpu


# ---------------------------------------------------------------------------
# Per-generation VMEM budgeting.
# ---------------------------------------------------------------------------
def _vmem_budget():
    cap = None
    try:
        cap = getattr(pltpu.get_tpu_info(), "vmem_capacity_bytes", None)
    except Exception:
        cap = None
    if not cap:
        cap = 64 * 1024 * 1024          # conservative fallback: v7x physical VMEM
    limit = int(min(cap // 2, 48 * 1024 * 1024))   # scoped VMEM we request
    tile_budget = limit // 3                       # headroom for compiler temps
    return limit, tile_budget


def _largest_divisor(n, cap):
    cap = max(1, min(cap, n))
    for cand in range(cap, 0, -1):
        if n % cand == 0:
            return cand
    return 1


# ---------------------------------------------------------------------------
# Bilinear resize (align_corners=True) as separable matmuls.
# ---------------------------------------------------------------------------
def make_interp_matrix(out_size, in_size):
    """(out_size, in_size) row-stochastic 1-D linear interpolation matrix with
    PyTorch align_corners=True semantics (degenerate sizes handled)."""
    scale = (in_size - 1) / (out_size - 1) if out_size > 1 else 0.0
    src = jnp.arange(out_size, dtype=jnp.float32) * jnp.float32(scale)
    i0 = jnp.clip(jnp.floor(src), 0, in_size - 1).astype(jnp.int32)
    i1 = jnp.minimum(i0 + 1, in_size - 1)
    t = src - i0.astype(jnp.float32)
    a0 = jax.nn.one_hot(i0, in_size, dtype=jnp.float32) * (1.0 - t)[:, None]
    a1 = jax.nn.one_hot(i1, in_size, dtype=jnp.float32) * t[:, None]
    return a0 + a1


def _bilinear_kernel(x_ref, ah_ref, awt_ref, o_ref):
    # x_ref  : (cb, h, w)          f32  channel-blocked NCHW input planes
    # ah_ref : (out_h, h)          bf16 height interpolation matrix (resident)
    # awt_ref: (w, out_w)          bf16 transposed width interp matrix (resident)
    # o_ref  : (cb, out_h, out_w)  f32
    cb, h, w = x_ref.shape
    out_h = ah_ref.shape[0]
    out_w = awt_ref.shape[1]
    # Width interpolation: channel block folded into the matmul M dimension.
    x2 = x_ref[...].reshape(cb * h, w).astype(jnp.bfloat16)
    y = jnp.dot(x2, awt_ref[...], preferred_element_type=jnp.float32)
    y = y.reshape(cb, h, out_w).astype(jnp.bfloat16)
    # Height interpolation as a batched MXU matmul over the channel block; the
    # intermediate never touches HBM.
    # TODO(synk): fold cb into M/N of one big matmul (needs an in-kernel
    # minor-dim transpose); kept batched for lowering robustness, with the
    # bf16 A_h broadcast now counted in the VMEM budget.
    ah_b = jnp.broadcast_to(ah_ref[...], (cb, out_h, h))
    o = lax.dot_general(ah_b, y,
                        dimension_numbers=(((2,), (1,)), ((0,), (0,))),
                        preferred_element_type=jnp.float32)
    o_ref[...] = o.astype(o_ref.dtype)


def _pick_channel_block(n_planes, h, w, out_h, out_w, tile_budget, min_steps=8):
    # Per-plane VMEM footprint: DMA'd tiles (double-buffered) + in-kernel temps.
    per_plane = (
        (2 * 4 + 2) * h * w          # input tile: 2x f32 DMA buffers + bf16 copy
        + 2 * 4 * out_h * out_w      # output tile: 2x f32 DMA buffers
        + (4 + 2) * h * out_w        # width-interp intermediate y (f32 + bf16)
        + 2 * out_h * h              # broadcast A_h (bf16)
        + 4 * out_h * out_w          # height-interp result before the store cast
    )
    fixed = 2 * (out_h * h + w * out_w)          # resident interp matrices (bf16)
    cap = max(1, (tile_budget - fixed) // per_plane)
    # Keep >= ~min_steps grid iterations (2 TCs on v7x + pipeline overlap).
    cap = min(cap, max(1, n_planes // min_steps))
    return _largest_divisor(n_planes, cap)


def bilinear_resize(x, out_h, out_w):
    """NCHW bilinear resize, align_corners=True (matches F.interpolate)."""
    n, c, h, w = x.shape
    b = n * c
    limit, tile_budget = _vmem_budget()
    cb = _pick_channel_block(b, h, w, out_h, out_w, tile_budget)
    ah = make_interp_matrix(out_h, h).astype(jnp.bfloat16)       # (out_h, h)
    awt = make_interp_matrix(out_w, w).T.astype(jnp.bfloat16)    # (w, out_w)
    x2 = x.reshape(b, h, w).astype(jnp.float32)

    flops = 2 * b * (h * w * out_w + h * out_h * out_w)
    bytes_accessed = 4 * b * (h * w + out_h * out_w) + 2 * (out_h * h + w * out_w)

    out = pl.pallas_call(
        _bilinear_kernel,
        out_shape=jax.ShapeDtypeStruct((b, out_h, out_w), jnp.float32),
        grid_spec=pltpu.PrefetchScalarGridSpec(
            num_scalar_prefetch=0,
            grid=(b // cb,),
            in_specs=[
                pl.BlockSpec((cb, h, w), lambda i: (i, 0, 0)),
                pl.BlockSpec((out_h, h), lambda i: (0, 0)),      # stays resident
                pl.BlockSpec((w, out_w), lambda i: (0, 0)),      # stays resident
            ],
            out_specs=pl.BlockSpec((cb, out_h, out_w), lambda i: (i, 0, 0)),
        ),
        compiler_params=pltpu.CompilerParams(
            dimension_semantics=("parallel",),
            vmem_limit_bytes=limit),
        cost_estimate=pl.CostEstimate(flops=flops, transcendentals=0,
                                      bytes_accessed=bytes_accessed),
    )(x2, ah, awt)
    return out.reshape(n, c, out_h, out_w)


# ---------------------------------------------------------------------------
# Fused: q-projection + single-head cross attention + out-projection +
#        1x1 value_trans conv + biases + residual add, NCHW in / NCHW out.
# ---------------------------------------------------------------------------
def _attn_out_kernel(q_ref, k_ref, v_ref, res_ref,
                     wq_ref, bq_ref, wo_ref, bo_ref, wt_ref, bt_ref, o_ref):
    # q_ref  : (1, d, lq_blk)  NCHW-layout query-conv block
    # k_ref  : (1, lk, d)      pre-projected keys   (bias folded in)
    # v_ref  : (1, lk, d)      pre-projected values (bias folded in)
    # res_ref: (1, C, lq_blk)  NCHW-layout residual (lr_up) block
    # wq_ref : (d, d)   attention q in-proj weight  (out, in)
    # bq_ref : (1, d)
    # wo_ref : (d, d)   attention out-proj weight   (out, in)
    # bo_ref : (1, d)
    # wt_ref : (C, d)   value_trans 1x1 conv weight (out, in)
    # bt_ref : (C, 1)
    # o_ref  : (1, C, lq_blk)  NCHW-layout output block
    d = q_ref.shape[1]
    scale = 1.0 / float(d) ** 0.5

    # q projection straight off the NCHW tile: contract the channel axis.
    qn = q_ref[0].astype(jnp.bfloat16)                            # (d, lq_blk)
    q = lax.dot_general(qn, wq_ref[...].astype(jnp.bfloat16),
                        dimension_numbers=(((0,), (1,)), ((), ())),
                        preferred_element_type=jnp.float32)        # (lq_blk, d)
    q = (q + bq_ref[...]) * scale

    k = k_ref[0].astype(jnp.bfloat16)                              # (lk, d)
    v = v_ref[0].astype(jnp.bfloat16)

    s = lax.dot_general(q.astype(jnp.bfloat16), k,
                        dimension_numbers=(((1,), (1,)), ((), ())),
                        preferred_element_type=jnp.float32)        # (lq_blk, lk)
    s = s - jnp.max(s, axis=-1, keepdims=True)
    p = jnp.exp(s)
    denom = jnp.sum(p, axis=-1, keepdims=True)                     # (lq_blk, 1)
    attn = lax.dot_general(p.astype(jnp.bfloat16), v,
                           dimension_numbers=(((1,), (0,)), ((), ())),
                           preferred_element_type=jnp.float32)     # (lq_blk, d)
    # Normalize after PV: small tensor, EUP approx reciprocal (off the VALU).
    attn = attn * pl.reciprocal(denom, approx=True)

    attn_out = lax.dot_general(attn.astype(jnp.bfloat16),
                               wo_ref[...].astype(jnp.bfloat16),
                               dimension_numbers=(((1,), (1,)), ((), ())),
                               preferred_element_type=jnp.float32)  # (lq_blk, d)
    attn_out = attn_out + bo_ref[...]

    # 1x1 value_trans conv, produced directly in channel-major (NCHW) order.
    trans = lax.dot_general(wt_ref[...].astype(jnp.bfloat16),
                            attn_out.astype(jnp.bfloat16),
                            dimension_numbers=(((1,), (1,)), ((), ())),
                            preferred_element_type=jnp.float32)     # (C, lq_blk)
    o_ref[0] = (res_ref[0] + trans + bt_ref[...]).astype(o_ref.dtype)


def _pick_q_block(lq, lk, d, c, n_batch, tile_budget, min_steps=8):
    if lq % 128 != 0:
        return lq                                  # full-extent block is legal
    fixed = 4 * (4 * lk * d + 2 * d * d + c * d + 2 * d + c)   # K/V + weights
    per_row = (
        (2 * 4 + 2) * d          # q tile: 2x f32 DMA buffers + bf16 copy
        + 2 * 4 * c              # residual tile: 2x f32
        + 2 * 4 * c              # output tile: 2x f32
        + (4 + 4 + 2) * lk       # s, exp(s) and bf16 copy of p
        + 3 * (4 + 2) * d        # q_proj / attn / attn_out (f32 + bf16)
        + 4 * c                  # value_trans result before the residual add
    )
    cap = max(128, (tile_budget - fixed) // per_row)
    want_steps = max(1, -(-min_steps // max(1, n_batch)))       # ceil division
    cap = min(cap, max(128, lq // want_steps))
    best = 128
    m = 256
    while m <= cap:
        if lq % m == 0:
            best = m
        m += 128
    return best


def attention_fused(q_flat, k_proj, v_proj, res_flat, params, c, d):
    n, _, lq = q_flat.shape
    lk = k_proj.shape[1]
    limit, tile_budget = _vmem_budget()
    lq_blk = _pick_q_block(lq, lk, d, c, n, tile_budget)

    flops = 2 * n * lq * (2 * d * d + 2 * lk * d + d * c)
    transcendentals = n * lq * lk
    bytes_accessed = 4 * (n * lq * (d + 2 * c) + 2 * n * lk * d
                          + 2 * d * d + c * d + 2 * d + c)

    return pl.pallas_call(
        _attn_out_kernel,
        out_shape=jax.ShapeDtypeStruct((n, c, lq), jnp.float32),
        grid_spec=pltpu.PrefetchScalarGridSpec(
            num_scalar_prefetch=0,
            grid=(n, lq // lq_blk),
            in_specs=[
                pl.BlockSpec((1, d, lq_blk), lambda bi, qi: (bi, 0, qi)),
                pl.BlockSpec((1, lk, d), lambda bi, qi: (bi, 0, 0)),
                pl.BlockSpec((1, lk, d), lambda bi, qi: (bi, 0, 0)),
                pl.BlockSpec((1, c, lq_blk), lambda bi, qi: (bi, 0, qi)),
                pl.BlockSpec((d, d), lambda bi, qi: (0, 0)),
                pl.BlockSpec((1, d), lambda bi, qi: (0, 0)),
                pl.BlockSpec((d, d), lambda bi, qi: (0, 0)),
                pl.BlockSpec((1, d), lambda bi, qi: (0, 0)),
                pl.BlockSpec((c, d), lambda bi, qi: (0, 0)),
                pl.BlockSpec((c, 1), lambda bi, qi: (0, 0)),
            ],
            out_specs=pl.BlockSpec((1, c, lq_blk), lambda bi, qi: (bi, 0, qi)),
        ),
        compiler_params=pltpu.CompilerParams(
            dimension_semantics=("parallel", "parallel"),
            vmem_limit_bytes=limit),
        cost_estimate=pl.CostEstimate(flops=flops,
                                      transcendentals=transcendentals,
                                      bytes_accessed=bytes_accessed),
    )(q_flat.astype(jnp.float32), k_proj.astype(jnp.float32),
      v_proj.astype(jnp.float32), res_flat.astype(jnp.float32),
      params["wq"], params["bq"].reshape(1, d),
      params["wo"], params["bo"].reshape(1, d),
      params["w_t"], params["b_t"].reshape(c, 1))


# ---------------------------------------------------------------------------
# Glue (XLA): 3x3 convolutions.
# ---------------------------------------------------------------------------
def _conv3x3(x, w, b):
    # TODO(synk): 3x3 conv is left to XLA; a Pallas shifted-matmul conv kernel
    # is possible but not implemented here.
    y = lax.conv_general_dilated(
        x, w, window_strides=(1, 1), padding=((1, 1), (1, 1)),
        dimension_numbers=("NCHW", "OIHW", "NCHW"))
    return y + b[None, :, None, None]


# ---------------------------------------------------------------------------
# Full forward pass (all big tensors stay in NCHW layout end-to-end).
# ---------------------------------------------------------------------------
def forward(hr_feat, lr_feat, params):
    n, c, hh, ww = hr_feat.shape
    d = c // 4

    # 1. lr_feat -> (H, W)                           (Pallas bilinear kernel)
    lr_up = bilinear_resize(lr_feat, hh, ww)

    # 2. 3x3 convolutions                            (XLA glue)
    hr_value = _conv3x3(hr_feat, params["w_v3"], params["b_v3"])
    hr_key = _conv3x3(hr_feat, params["w_k3"], params["b_k3"])
    lr_query = _conv3x3(lr_up, params["w_q3"], params["b_q3"])

    # 3. key / value downsample to (H//16, W//16)    (same Pallas kernel)
    hk, wk = hh // 16, ww // 16
    key_s = bilinear_resize(hr_key, hk, wk)
    val_s = bilinear_resize(hr_value, hk, wk)

    # 4. K/V in-projections hoisted out of the attention kernel (tiny XLA
    #    einsums over the (H//16)*(W//16)-token sequences, bias folded in).
    lk = hk * wk
    k_flat = key_s.reshape(n, d, lk)
    v_flat = val_s.reshape(n, d, lk)
    k_proj = jnp.einsum("ndl,ed->nle", k_flat, params["wk"]) + params["bk"][None, None, :]
    v_proj = jnp.einsum("ndl,ed->nle", v_flat, params["wv"]) + params["bv"][None, None, :]

    # 5. fused attention + out-proj + 1x1 conv + residual, NCHW in / NCHW out
    q_flat = lr_query.reshape(n, d, hh * ww)
    res_flat = lr_up.reshape(n, c, hh * ww)
    out_flat = attention_fused(q_flat, k_proj, v_proj, res_flat, params, c, d)
    return out_flat.reshape(n, c, hh, ww)


# ---------------------------------------------------------------------------
# Pure-JAX reference (mirrors the PyTorch module) for validation.
# ---------------------------------------------------------------------------
def reference_forward(hr_feat, lr_feat, params):
    n, c, hh, ww = hr_feat.shape
    _, _, lh, lw = lr_feat.shape
    d = c // 4
    ah = make_interp_matrix(hh, lh)
    aw = make_interp_matrix(ww, lw)
    lr_up = jnp.einsum("Hh,nchw,Ww->ncHW", ah, lr_feat, aw)
    hr_value = _conv3x3(hr_feat, params["w_v3"], params["b_v3"])
    hr_key = _conv3x3(hr_feat, params["w_k3"], params["b_k3"])
    lr_query = _conv3x3(lr_up, params["w_q3"], params["b_q3"])
    hk, wk = hh // 16, ww // 16
    ahk = make_interp_matrix(hk, hh)
    awk = make_interp_matrix(wk, ww)
    key_s = jnp.einsum("Hh,nchw,Ww->ncHW", ahk, hr_key, awk)
    val_s = jnp.einsum("Hh,nchw,Ww->ncHW", ahk, hr_value, awk)
    q_seq = jnp.transpose(lr_query, (0, 2, 3, 1)).reshape(n, hh * ww, d)
    k_seq = jnp.transpose(key_s, (0, 2, 3, 1)).reshape(n, hk * wk, d)
    v_seq = jnp.transpose(val_s, (0, 2, 3, 1)).reshape(n, hk * wk, d)
    qp = (q_seq @ params["wq"].T + params["bq"]) * (1.0 / float(d) ** 0.5)
    kp = k_seq @ params["wk"].T + params["bk"]
    vp = v_seq @ params["wv"].T + params["bv"]
    s = jnp.einsum("nqd,nkd->nqk", qp, kp)
    p = jax.nn.softmax(s, axis=-1)
    core = jnp.einsum("nqk,nkd->nqd", p, vp)
    attn_out = core @ params["wo"].T + params["bo"]
    trans = attn_out @ params["w_t"].T + params["b_t"]
    return lr_up + jnp.transpose(trans.reshape(n, hh, ww, c), (0, 3, 1, 2))


def init_params(key, feat_dim):
    d = feat_dim // 4
    ks = jax.random.split(key, 16)
    nrm = jax.random.normal
    return {
        # 3x3 convs (C -> C//4)
        "w_q3": nrm(ks[0], (d, feat_dim, 3, 3), jnp.float32) * 0.08,
        "b_q3": nrm(ks[1], (d,), jnp.float32) * 0.02,
        "w_k3": nrm(ks[2], (d, feat_dim, 3, 3), jnp.float32) * 0.08,
        "b_k3": nrm(ks[3], (d,), jnp.float32) * 0.02,
        "w_v3": nrm(ks[4], (d, feat_dim, 3, 3), jnp.float32) * 0.08,
        "b_v3": nrm(ks[5], (d,), jnp.float32) * 0.02,
        # 1x1 value_trans conv (C//4 -> C), stored as a dense (C, C//4) matrix
        "w_t": nrm(ks[6], (feat_dim, d), jnp.float32) * 0.3,
        "b_t": nrm(ks[7], (feat_dim,), jnp.float32) * 0.02,
        # MultiheadAttention (embed_dim = C//4, 1 head)
        "wq": nrm(ks[8], (d, d), jnp.float32) * 0.4,
        "wk": nrm(ks[9], (d, d), jnp.float32) * 0.4,
        "wv": nrm(ks[10], (d, d), jnp.float32) * 0.4,
        "bq": nrm(ks[11], (d,), jnp.float32) * 0.02,
        "bk": nrm(ks[12], (d,), jnp.float32) * 0.02,
        "bv": nrm(ks[13], (d,), jnp.float32) * 0.02,
        "wo": nrm(ks[14], (d, d), jnp.float32) * 0.4,
        "bo": nrm(ks[15], (d,), jnp.float32) * 0.02,
    }


if __name__ == "__main__":
    key = jax.random.PRNGKey(0)
    n, feat_dim, hh, ww = 2, 16, 32, 32        # hr spatial must be a multiple of 16
    lh, lw = 16, 16
    k_hr, k_lr, k_par = jax.random.split(key, 3)
    hr_feat = jax.random.normal(k_hr, (n, feat_dim, hh, ww), jnp.float32)
    lr_feat = jax.random.normal(k_lr, (n, feat_dim, lh, lw), jnp.float32)
    params = init_params(k_par, feat_dim)

    out = jax.jit(forward)(hr_feat, lr_feat, params)
    out = jax.block_until_ready(out)
    assert out.shape == (n, feat_dim, hh, ww)

    ref = jax.block_until_ready(reference_forward(hr_feat, lr_feat, params))
    err = float(jnp.max(jnp.abs(out - ref)))
    scale = float(jnp.max(jnp.abs(ref)))
    tol = 5e-2 + 2e-2 * scale            # allows bf16-operand / f32-accum matmuls
    if not err < tol:
        raise SystemExit(
            "numerical mismatch vs reference: max abs err = %g (tol %g)" % (err, tol))
    print("KERNEL_OK")
</pallas_src>

<mosaic_0001>
module attributes {stable_mosaic.version = 11 : i64} {
  func.func @_bilinear_kernel(%arg0: i32, %arg1: memref<1x32x32xf32, #tpu.memory_space<vmem>>, %arg2: memref<2x32xbf16, #tpu.memory_space<vmem>>, %arg3: memref<32x2xbf16, #tpu.memory_space<vmem>>, %arg4: memref<1x2x2xf32, #tpu.memory_space<vmem>>) attributes {dimension_semantics = [#tpu.dimension_semantics<parallel>], iteration_bounds = array<i64: 8>, scalar_prefetch = 0 : i64, scratch_operands = 0 : i64, tpu.core_type = #tpu.core_type<tc>, window_params = [{transform_indices = @transform_0, window_bounds = array<i64: 1, 32, 32>}, {pipeline_mode = #tpu.pipeline_mode<synchronous>, transform_indices = @transform_1, window_bounds = array<i64: 2, 32>}, {pipeline_mode = #tpu.pipeline_mode<synchronous>, transform_indices = @transform_2, window_bounds = array<i64: 32, 2>}, {transform_indices = @transform_3, window_bounds = array<i64: 1, 2, 2>}]} {
    %c0 = arith.constant 0 : index
    %c0_0 = arith.constant 0 : index
    %c0_1 = arith.constant 0 : index
    %0 = vector.load %arg1[%c0, %c0_0, %c0_1] : memref<1x32x32xf32, #tpu.memory_space<vmem>>, vector<1x32x32xf32>
    %1 = vector.shape_cast %0 : vector<1x32x32xf32> to vector<32x32xf32>
    %2 = arith.truncf %1 : vector<32x32xf32> to vector<32x32xbf16>
    %c0_2 = arith.constant 0 : index
    %c0_3 = arith.constant 0 : index
    %3 = vector.load %arg3[%c0_2, %c0_3] : memref<32x2xbf16, #tpu.memory_space<vmem>>, vector<32x2xbf16>
    %cst = arith.constant dense<0.000000e+00> : vector<32x2xf32>
    %4 = tpu.matmul %2, %3, %cst {dimension_numbers = #tpu.dot_dimension_numbers<[1], [0], [0], [1], [0, 0, 1, 1], [], []>} : vector<32x32xbf16>, vector<32x2xbf16>, vector<32x2xf32> -> vector<32x2xf32>
    %5 = vector.shape_cast %4 : vector<32x2xf32> to vector<1x32x2xf32>
    %6 = arith.truncf %5 : vector<1x32x2xf32> to vector<1x32x2xbf16>
    %c0_4 = arith.constant 0 : index
    %c0_5 = arith.constant 0 : index
    %7 = vector.load %arg2[%c0_4, %c0_5] : memref<2x32xbf16, #tpu.memory_space<vmem>>, vector<2x32xbf16>
    %8 = vector.shape_cast %7 : vector<2x32xbf16> to vector<1x2x32xbf16>
    %cst_6 = arith.constant dense<0.000000e+00> : vector<1x2x2xf32>
    %9 = tpu.matmul %8, %6, %cst_6 {dimension_numbers = #tpu.dot_dimension_numbers<[2], [1], [1], [2], [0, 0, 0, 1, 1, 2], [0], [0]>} : vector<1x2x32xbf16>, vector<1x32x2xbf16>, vector<1x2x2xf32> -> vector<1x2x2xf32>
    %c0_7 = arith.constant 0 : index
    %c0_8 = arith.constant 0 : index
    %c0_9 = arith.constant 0 : index
    %10 = vector.load %arg4[%c0_7, %c0_8, %c0_9] : memref<1x2x2xf32, #tpu.memory_space<vmem>>, vector<1x2x2xf32>
    tpu.vector_store %arg4[%c0_7, %c0_8, %c0_9], %9 {strides = array<i32>} : memref<1x2x2xf32, #tpu.memory_space<vmem>>, vector<1x2x2xf32>,
    return
  }
  func.func @transform_0(%arg0: i32) -> (i32, i32, i32) {
    %c0_i32 = arith.constant 0 : i32
    %c0_i32_0 = arith.constant 0 : i32
    %c0_i32_1 = arith.constant 0 : i32
    return %arg0, %c0_i32, %c0_i32_0 : i32, i32, i32
  }
  func.func @transform_1(%arg0: i32) -> (i32, i32) {
    %c0_i32 = arith.constant 0 : i32
    %c0_i32_0 = arith.constant 0 : i32
    %c0_i32_1 = arith.constant 0 : i32
    return %c0_i32, %c0_i32_0 : i32, i32
  }
  func.func @transform_2(%arg0: i32) -> (i32, i32) {
    %c0_i32 = arith.constant 0 : i32
    %c0_i32_0 = arith.constant 0 : i32
    %c0_i32_1 = arith.constant 0 : i32
    return %c0_i32, %c0_i32_0 : i32, i32
  }
  func.func @transform_3(%arg0: i32) -> (i32, i32, i32) {
    %c0_i32 = arith.constant 0 : i32
    %c0_i32_0 = arith.constant 0 : i32
    %c0_i32_1 = arith.constant 0 : i32
    return %arg0, %c0_i32, %c0_i32_0 : i32, i32, i32
  }
}

module attributes {stable_mosaic.version = 11 : i64} {
  func.func @_bilinear_kernel(%arg0: i32, %arg1: memref<4x16x16xf32, #tpu.memory_space<vmem>>, %arg2: memref<32x16xbf16, #tpu.memory_space<vmem>>, %arg3: memref<16x32xbf16, #tpu.memory_space<vmem>>, %arg4: memref<4x32x32xf32, #tpu.memory_space<vmem>>) attributes {dimension_semantics = [#tpu.dimension_semantics<parallel>], iteration_bounds = array<i64: 8>, scalar_prefetch = 0 : i64, scratch_operands = 0 : i64, tpu.core_type = #tpu.core_type<tc>, window_params = [{transform_indices = @transform_0, window_bounds = array<i64: 4, 16, 16>}, {pipeline_mode = #tpu.pipeline_mode<synchronous>, transform_indices = @transform_1, window_bounds = array<i64: 32, 16>}, {pipeline_mode = #tpu.pipeline_mode<synchronous>, transform_indices = @transform_2, window_bounds = array<i64: 16, 32>}, {transform_indices = @transform_3, window_bounds = array<i64: 4, 32, 32>}]} {
    %c0 = arith.constant 0 : index
    %c0_0 = arith.constant 0 : index
    %c0_1 = arith.constant 0 : index
    %0 = vector.load %arg1[%c0, %c0_0, %c0_1] : memref<4x16x16xf32, #tpu.memory_space<vmem>>, vector<4x16x16xf32>
    %1 = vector.shape_cast %0 : vector<4x16x16xf32> to vector<64x16xf32>
    %2 = arith.truncf %1 : vector<64x16xf32> to vector<64x16xbf16>
    %c0_2 = arith.constant 0 : index
    %c0_3 = arith.constant 0 : index
    %3 = vector.load %arg3[%c0_2, %c0_3] : memref<16x32xbf16, #tpu.memory_space<vmem>>, vector<16x32xbf16>
    %cst = arith.constant dense<0.000000e+00> : vector<64x32xf32>
    %4 = tpu.matmul %2, %3, %cst {dimension_numbers = #tpu.dot_dimension_numbers<[1], [0], [0], [1], [0, 0, 1, 1], [], []>} : vector<64x16xbf16>, vector<16x32xbf16>, vector<64x32xf32> -> vector<64x32xf32>
    %5 = vector.shape_cast %4 : vector<64x32xf32> to vector<4x16x32xf32>
    %6 = arith.truncf %5 : vector<4x16x32xf32> to vector<4x16x32xbf16>
    %c0_4 = arith.constant 0 : index
    %c0_5 = arith.constant 0 : index
    %7 = vector.load %arg2[%c0_4, %c0_5] : memref<32x16xbf16, #tpu.memory_space<vmem>>, vector<32x16xbf16>
    %8 = vector.shape_cast %7 : vector<32x16xbf16> to vector<1x32x16xbf16>
    %9 = vector.broadcast %8 : vector<1x32x16xbf16> to vector<4x32x16xbf16>
    %cst_6 = arith.constant dense<0.000000e+00> : vector<4x32x32xf32>
    %10 = tpu.matmul %9, %6, %cst_6 {dimension_numbers = #tpu.dot_dimension_numbers<[2], [1], [1], [2], [0, 0, 0, 1, 1, 2], [0], [0]>} : vector<4x32x16xbf16>, vector<4x16x32xbf16>, vector<4x32x32xf32> -> vector<4x32x32xf32>
    %c0_7 = arith.constant 0 : index
    %c0_8 = arith.constant 0 : index
    %c0_9 = arith.constant 0 : index
    %11 = vector.load %arg4[%c0_7, %c0_8, %c0_9] : memref<4x32x32xf32, #tpu.memory_space<vmem>>, vector<4x32x32xf32>
    tpu.vector_store %arg4[%c0_7, %c0_8, %c0_9], %10 {strides = array<i32>} : memref<4x32x32xf32, #tpu.memory_space<vmem>>, vector<4x32x32xf32>,
    return
  }
  func.func @transform_0(%arg0: i32) -> (i32, i32, i32) {
    %c0_i32 = arith.constant 0 : i32
    %c0_i32_0 = arith.constant 0 : i32
    %c0_i32_1 = arith.constant 0 : i32
    return %arg0, %c0_i32, %c0_i32_0 : i32, i32, i32
  }
  func.func @transform_1(%arg0: i32) -> (i32, i32) {
    %c0_i32 = arith.constant 0 : i32
    %c0_i32_0 = arith.constant 0 : i32
    %c0_i32_1 = arith.constant 0 : i32
    return %c0_i32, %c0_i32_0 : i32, i32
  }
  func.func @transform_2(%arg0: i32) -> (i32, i32) {
    %c0_i32 = arith.constant 0 : i32
    %c0_i32_0 = arith.constant 0 : i32
    %c0_i32_1 = arith.constant 0 : i32
    return %c0_i32, %c0_i32_0 : i32, i32
  }
  func.func @transform_3(%arg0: i32) -> (i32, i32, i32) {
    %c0_i32 = arith.constant 0 : i32
    %c0_i32_0 = arith.constant 0 : i32
    %c0_i32_1 = arith.constant 0 : i32
    return %arg0, %c0_i32, %c0_i32_0 : i32, i32, i32
  }
}

module attributes {stable_mosaic.version = 11 : i64} {
  func.func @_attn_out_kernel(%arg0: i32, %arg1: i32, %arg2: memref<1x4x256xf32, #tpu.memory_space<vmem>>, %arg3: memref<1x4x4xf32, #tpu.memory_space<vmem>>, %arg4: memref<1x4x4xf32, #tpu.memory_space<vmem>>, %arg5: memref<1x16x256xf32, #tpu.memory_space<vmem>>, %arg6: memref<4x4xf32, #tpu.memory_space<vmem>>, %arg7: memref<1x4xf32, #tpu.memory_space<vmem>>, %arg8: memref<4x4xf32, #tpu.memory_space<vmem>>, %arg9: memref<1x4xf32, #tpu.memory_space<vmem>>, %arg10: memref<16x4xf32, #tpu.memory_space<vmem>>, %arg11: memref<16x1xf32, #tpu.memory_space<vmem>>, %arg12: memref<1x16x256xf32, #tpu.memory_space<vmem>>) attributes {dimension_semantics = [#tpu.dimension_semantics<parallel>, #tpu.dimension_semantics<parallel>], iteration_bounds = array<i64: 2, 4>, scalar_prefetch = 0 : i64, scratch_operands = 0 : i64, tpu.core_type = #tpu.core_type<tc>, window_params = [{transform_indices = @transform_0, window_bounds = array<i64: 1, 4, 256>}, {transform_indices = @transform_1, window_bounds = array<i64: 1, 4, 4>}, {transform_indices = @transform_2, window_bounds = array<i64: 1, 4, 4>}, {transform_indices = @transform_3, window_bounds = array<i64: 1, 16, 256>}, {pipeline_mode = #tpu.pipeline_mode<synchronous>, transform_indices = @transform_4, window_bounds = array<i64: 4, 4>}, {pipeline_mode = #tpu.pipeline_mode<synchronous>, transform_indices = @transform_5, window_bounds = array<i64: 1, 4>}, {pipeline_mode = #tpu.pipeline_mode<synchronous>, transform_indices = @transform_6, window_bounds = array<i64: 4, 4>}, {pipeline_mode = #tpu.pipeline_mode<synchronous>, transform_indices = @transform_7, window_bounds = array<i64: 1, 4>}, {pipeline_mode = #tpu.pipeline_mode<synchronous>, transform_indices = @transform_8, window_bounds = array<i64: 16, 4>}, {pipeline_mode = #tpu.pipeline_mode<synchronous>, transform_indices = @transform_9, window_bounds = array<i64: 16, 1>}, {transform_indices = @transform_10, window_bounds = array<i64: 1, 16, 256>}]} {
    %c0 = arith.constant 0 : index
    %c0_0 = arith.constant 0 : index
    %c0_1 = arith.constant 0 : index
    %0 = vector.load %arg2[%c0, %c0_0, %c0_1] : memref<1x4x256xf32, #tpu.memory_space<vmem>>, vector<1x4x256xf32>
    %1 = vector.shape_cast %0 : vector<1x4x256xf32> to vector<4x256xf32>
    %2 = arith.truncf %1 : vector<4x256xf32> to vector<4x256xbf16>
    %c0_2 = arith.constant 0 : index
    %c0_3 = arith.constant 0 : index
    %3 = vector.load %arg6[%c0_2, %c0_3] : memref<4x4xf32, #tpu.memory_space<vmem>>, vector<4x4xf32>
    %4 = arith.truncf %3 : vector<4x4xf32> to vector<4x4xbf16>
    %cst = arith.constant dense<0.000000e+00> : vector<256x4xf32>
    %5 = tpu.matmul %2, %4, %cst {dimension_numbers = #tpu.dot_dimension_numbers<[0], [1], [1], [0], [0, 1, 1, 0], [], []>} : vector<4x256xbf16>, vector<4x4xbf16>, vector<256x4xf32> -> vector<256x4xf32>
    %c0_4 = arith.constant 0 : index
    %c0_5 = arith.constant 0 : index
    %6 = vector.load %arg7[%c0_4, %c0_5] : memref<1x4xf32, #tpu.memory_space<vmem>>, vector<1x4xf32>
    %7 = vector.broadcast %6 : vector<1x4xf32> to vector<256x4xf32>
    %8 = arith.addf %5, %7 : vector<256x4xf32>
    %cst_6 = arith.constant 5.000000e-01 : f32
    %9 = vector.broadcast %cst_6 : f32 to vector<256x4xf32>
    %10 = arith.mulf %8, %9 : vector<256x4xf32>
    %c0_7 = arith.constant 0 : index
    %c0_8 = arith.constant 0 : index
    %c0_9 = arith.constant 0 : index
    %11 = vector.load %arg3[%c0_7, %c0_8, %c0_9] : memref<1x4x4xf32, #tpu.memory_space<vmem>>, vector<1x4x4xf32>
    %12 = vector.shape_cast %11 : vector<1x4x4xf32> to vector<4x4xf32>
    %13 = arith.truncf %12 : vector<4x4xf32> to vector<4x4xbf16>
    %c0_10 = arith.constant 0 : index
    %c0_11 = arith.constant 0 : index
    %c0_12 = arith.constant 0 : index
    %14 = vector.load %arg4[%c0_10, %c0_11, %c0_12] : memref<1x4x4xf32, #tpu.memory_space<vmem>>, vector<1x4x4xf32>
    %15 = vector.shape_cast %14 : vector<1x4x4xf32> to vector<4x4xf32>
    %16 = arith.truncf %15 : vector<4x4xf32> to vector<4x4xbf16>
    %17 = arith.truncf %10 : vector<256x4xf32> to vector<256x4xbf16>
    %cst_13 = arith.constant dense<0.000000e+00> : vector<256x4xf32>
    %18 = tpu.matmul %17, %13, %cst_13 {dimension_numbers = #tpu.dot_dimension_numbers<[1], [1], [0], [0], [0, 0, 1, 0], [], []>} : vector<256x4xbf16>, vector<4x4xbf16>, vector<256x4xf32> -> vector<256x4xf32>
    %cst_14 = arith.constant dense<0xFF800000> : vector<256xf32>
    %19 = vector.multi_reduction <maximumf>, %18, %cst_14 [1] : vector<256x4xf32> to vector<256xf32>
    %20 = vector.shape_cast %19 : vector<256xf32> to vector<256x1xf32>
    %21 = vector.broadcast %20 : vector<256x1xf32> to vector<256x4xf32>
    %22 = arith.subf %18, %21 : vector<256x4xf32>
    %23 = math.exp %22 : vector<256x4xf32>
    %cst_15 = arith.constant dense<0.000000e+00> : vector<256xf32>
    %24 = vector.multi_reduction <add>, %23, %cst_15 [1] : vector<256x4xf32> to vector<256xf32>
    %25 = vector.shape_cast %24 : vector<256xf32> to vector<256x1xf32>
    %26 = arith.truncf %23 : vector<256x4xf32> to vector<256x4xbf16>
    %cst_16 = arith.constant dense<0.000000e+00> : vector<256x4xf32>
    %27 = tpu.matmul %26, %16, %cst_16 {dimension_numbers = #tpu.dot_dimension_numbers<[1], [0], [0], [1], [0, 0, 1, 1], [], []>} : vector<256x4xbf16>, vector<4x4xbf16>, vector<256x4xf32> -> vector<256x4xf32>
    %28 = tpu.reciprocal %25 {approx = true} : vector<256x1xf32> -> vector<256x1xf32>
    %29 = vector.broadcast %28 : vector<256x1xf32> to vector<256x4xf32>
    %30 = arith.mulf %27, %29 : vector<256x4xf32>
    %31 = arith.truncf %30 : vector<256x4xf32> to vector<256x4xbf16>
    %c0_17 = arith.constant 0 : index
    %c0_18 = arith.constant 0 : index
    %32 = vector.load %arg8[%c0_17, %c0_18] : memref<4x4xf32, #tpu.memory_space<vmem>>, vector<4x4xf32>
    %33 = arith.truncf %32 : vector<4x4xf32> to vector<4x4xbf16>
    %cst_19 = arith.constant dense<0.000000e+00> : vector<256x4xf32>
    %34 = tpu.matmul %31, %33, %cst_19 {dimension_numbers = #tpu.dot_dimension_numbers<[1], [1], [0], [0], [0, 0, 1, 0], [], []>} : vector<256x4xbf16>, vector<4x4xbf16>, vector<256x4xf32> -> vector<256x4xf32>
    %c0_20 = arith.constant 0 : index
    %c0_21 = arith.constant 0 : index
    %35 = vector.load %arg9[%c0_20, %c0_21] : memref<1x4xf32, #tpu.memory_space<vmem>>, vector<1x4xf32>
    %36 = vector.broadcast %35 : vector<1x4xf32> to vector<256x4xf32>
    %37 = arith.addf %34, %36 : vector<256x4xf32>
    %c0_22 = arith.constant 0 : index
    %c0_23 = arith.constant 0 : index
    %38 = vector.load %arg10[%c0_22, %c0_23] : memref<16x4xf32, #tpu.memory_space<vmem>>, vector<16x4xf32>
    %39 = arith.truncf %38 : vector<16x4xf32> to vector<16x4xbf16>
    %40 = arith.truncf %37 : vector<256x4xf32> to vector<256x4xbf16>
    %cst_24 = arith.constant dense<0.000000e+00> : vector<16x256xf32>
    %41 = tpu.matmul %39, %40, %cst_24 {dimension_numbers = #tpu.dot_dimension_numbers<[1], [1], [0], [0], [0, 0, 1, 0], [], []>} : vector<16x4xbf16>, vector<256x4xbf16>, vector<16x256xf32> -> vector<16x256xf32>
    %c0_25 = arith.constant 0 : index
    %c0_26 = arith.constant 0 : index
    %c0_27 = arith.constant 0 : index
    %42 = vector.load %arg5[%c0_25, %c0_26, %c0_27] : memref<1x16x256xf32, #tpu.memory_space<vmem>>, vector<1x16x256xf32>
    %43 = vector.shape_cast %42 : vector<1x16x256xf32> to vector<16x256xf32>
    %44 = arith.addf %43, %41 : vector<16x256xf32>
    %c0_28 = arith.constant 0 : index
    %c0_29 = arith.constant 0 : index
    %45 = vector.load %arg11[%c0_28, %c0_29] : memref<16x1xf32, #tpu.memory_space<vmem>>, vector<16x1xf32>
    %46 = vector.broadcast %45 : vector<16x1xf32> to vector<16x256xf32>
    %47 = arith.addf %44, %46 : vector<16x256xf32>
    %c0_30 = arith.constant 0 : index
    %c0_31 = arith.constant 0 : index
    %c0_32 = arith.constant 0 : index
    %48 = vector.load %arg12[%c0_30, %c0_31, %c0_32] : memref<1x16x256xf32, #tpu.memory_space<vmem>>, vector<1x16x256xf32>
    %49 = vector.shape_cast %48 : vector<1x16x256xf32> to vector<16x256xf32>
    %50 = vector.shape_cast %47 : vector<16x256xf32> to vector<1x16x256xf32>
    tpu.vector_store %arg12[%c0_30, %c0_31, %c0_32], %50 {strides = array<i32>} : memref<1x16x256xf32, #tpu.memory_space<vmem>>, vector<1x16x256xf32>,
    return
  }
  func.func @transform_0(%arg0: i32, %arg1: i32) -> (i32, i32, i32) {
    %c0_i32 = arith.constant 0 : i32
    %c0_i32_0 = arith.constant 0 : i32
    return %arg0, %c0_i32, %arg1 : i32, i32, i32
  }
  func.func @transform_1(%arg0: i32, %arg1: i32) -> (i32, i32, i32) {
    %c0_i32 = arith.constant 0 : i32
    %c0_i32_0 = arith.constant 0 : i32
    %c0_i32_1 = arith.constant 0 : i32
    return %arg0, %c0_i32, %c0_i32_0 : i32, i32, i32
  }
  func.func @transform_2(%arg0: i32, %arg1: i32) -> (i32, i32, i32) {
    %c0_i32 = arith.constant 0 : i32
    %c0_i32_0 = arith.constant 0 : i32
    %c0_i32_1 = arith.constant 0 : i32
    return %arg0, %c0_i32, %c0_i32_0 : i32, i32, i32
  }
  func.func @transform_3(%arg0: i32, %arg1: i32) -> (i32, i32, i32) {
    %c0_i32 = arith.constant 0 : i32
    %c0_i32_0 = arith.constant 0 : i32
    return %arg0, %c0_i32, %arg1 : i32, i32, i32
  }
  func.func @transform_4(%arg0: i32, %arg1: i32) -> (i32, i32) {
    %c0_i32 = arith.constant 0 : i32
    %c0_i32_0 = arith.constant 0 : i32
    %c0_i32_1 = arith.constant 0 : i32
    return %c0_i32, %c0_i32_0 : i32, i32
  }
  func.func @transform_5(%arg0: i32, %arg1: i32) -> (i32, i32) {
    %c0_i32 = arith.constant 0 : i32
    %c0_i32_0 = arith.constant 0 : i32
    %c0_i32_1 = arith.constant 0 : i32
    return %c0_i32, %c0_i32_0 : i32, i32
  }
  func.func @transform_6(%arg0: i32, %arg1: i32) -> (i32, i32) {
    %c0_i32 = arith.constant 0 : i32
    %c0_i32_0 = arith.constant 0 : i32
    %c0_i32_1 = arith.constant 0 : i32
    return %c0_i32, %c0_i32_0 : i32, i32
  }
  func.func @transform_7(%arg0: i32, %arg1: i32) -> (i32, i32) {
    %c0_i32 = arith.constant 0 : i32
    %c0_i32_0 = arith.constant 0 : i32
    %c0_i32_1 = arith.constant 0 : i32
    return %c0_i32, %c0_i32_0 : i32, i32
  }
  func.func @transform_8(%arg0: i32, %arg1: i32) -> (i32, i32) {
    %c0_i32 = arith.constant 0 : i32
    %c0_i32_0 = arith.constant 0 : i32
    %c0_i32_1 = arith.constant 0 : i32
    return %c0_i32, %c0_i32_0 : i32, i32
  }
  func.func @transform_9(%arg0: i32, %arg1: i32) -> (i32, i32) {
    %c0_i32 = arith.constant 0 : i32
    %c0_i32_0 = arith.constant 0 : i32
    %c0_i32_1 = arith.constant 0 : i32
    return %c0_i32, %c0_i32_0 : i32, i32
  }
  func.func @transform_10(%arg0: i32, %arg1: i32) -> (i32, i32, i32) {
    %c0_i32 = arith.constant 0 : i32
    %c0_i32_0 = arith.constant 0 : i32
    return %arg0, %c0_i32, %arg1 : i32, i32, i32
  }
}

</mosaic_0001>

<llo_original>
// kernel: forward.6
$region0: #{forward.6}
  #allocation0 [shape = 'u32[]', space=smem, size = 0x4, offset = 0x4, fixed_abs, tag = 'smem constant byte address 0x4 - core index']
  #allocation1 [shape = 'u32[144,128]{1,0:T(1,128)}', space=vmem, size = 0x12000, scoped, tag = 'internal scratch']
  %s0 = inlined_call_operand.vmem [shape: f32[8,32,32], index: 0, kind: input, shape index: {}]
  %s1 = inlined_call_operand.vmem [shape: bf16[2,32], index: 1, kind: input, shape index: {}]
  %s2 = inlined_call_operand.vmem [shape: bf16[32,2], index: 2, kind: input, shape index: {}]
  %s3 = inlined_call_operand.vmem [shape: f32[8,2,2], index: 3, kind: output, shape index: {}]
  %s4 = sld [smem:[#allocation0]]
  $region45: #{forward.6} parent=0
    _
  %s6 = ssub.s32 1, %s4
  %s7 = scalar_select 0, %s6, %s4
  loop: start=0, step=1, limit=10
  $region2: #{forward.6} parent=0 // loop_pre_header
    _
  $region3: #{forward.6} parent=0 // loop_header
    %s9 = sphi 0, %s13
    %p10 = scmp.ge.s32.totalorder %s9, 10
    %s19 = sphi 0, %s21
    %s22 = sphi 0, %s19
    %s23 = sphi 0, %s22
    %s39 = sphi 0, %s23
    %s43 = sphi 0, %s43
    %s45 = sphi 0, %s43
    %s46 = sphi 0, %s45
    %s60 = sphi 0, %s46
    %s64 = sphi 0, %s64
    %s66 = sphi 0, %s64
    %s67 = sphi 0, %s66
    %s81 = sphi 0, %s67
    %s87 = sphi 0, %s89
    %s90 = sphi 0, %s87
    %s91 = sphi 0, %s90
    %s107 = sphi 0, %s91
  $region4: #{forward.6} parent=0 // loop_header_branch
    %12 = sbr.rel (%p10) target = $region8
  $region5: #{forward.6} parent=0 // loop_body
    %s14 = ssub.s32 %s9, 1
    %s15 = ssub.s32 %s9, 2
    %s16 = sadd.s32 %s9, 1
    %s17 = ssub.s32 %s9, %s16
    %p18 = scmp.eq.s32.totalorder %s17, 0
    %s20 = sadd.s32 %s19, 1
    %s21 = scalar_select %p18, %s19, %s20
    %p24 = pneg %p18
    %p25 = scmp.eq.s32.totalorder %s9, 7
    %p26 = por %p24, %p25
    %p27 = scmp.ne.s32.totalorder %s19, %s22
    %p28 = scmp.eq.s32.totalorder %s9, 0
    %p29 = por %p27, %p28
    %p30 = scmp.ne.s32.totalorder %s19, %s22
    %p31 = scmp.eq.s32.totalorder %s14, 7
    %p32 = por %p30, %p31
    %p33 = scmp.ne.s32.totalorder %s22, %s23
    %p34 = scmp.eq.s32.totalorder %s14, 0
    %p35 = por %p33, %p34
    %p36 = scmp.ne.s32.totalorder %s22, %s23
    %p37 = scmp.eq.s32.totalorder %s15, 7
    %p38 = por %p36, %p37
    %p40 = scmp.ne.s32.totalorder %s23, %s39
    %p41 = scmp.eq.s32.totalorder %s15, 0
    %p42 = por %p40, %p41
    %s44 = sadd.s32 %s43, 1
    %p47 = scmp.eq.s32.totalorder %s9, 7
    %p48 = scmp.ne.s32.totalorder %s43, %s45
    %p49 = scmp.eq.s32.totalorder %s9, 0
    %p50 = por %p48, %p49
    %p51 = scmp.ne.s32.totalorder %s43, %s45
    %p52 = scmp.eq.s32.totalorder %s14, 7
    %p53 = por %p51, %p52
    %p54 = scmp.ne.s32.totalorder %s45, %s46
    %p55 = scmp.eq.s32.totalorder %s14, 0
    %p56 = por %p54, %p55
    %p57 = scmp.ne.s32.totalorder %s45, %s46
    %p58 = scmp.eq.s32.totalorder %s15, 7
    %p59 = por %p57, %p58
    %p61 = scmp.ne.s32.totalorder %s46, %s60
    %p62 = scmp.eq.s32.totalorder %s15, 0
    %p63 = por %p61, %p62
    %s65 = sadd.s32 %s64, 1
    %p68 = scmp.eq.s32.totalorder %s9, 7
    %p69 = scmp.ne.s32.totalorder %s64, %s66
    %p70 = scmp.eq.s32.totalorder %s9, 0
    %p71 = por %p69, %p70
    %p72 = scmp.ne.s32.totalorder %s64, %s66
    %p73 = scmp.eq.s32.totalorder %s14, 7
    %p74 = por %p72, %p73
    %p75 = scmp.ne.s32.totalorder %s66, %s67
    %p76 = scmp.eq.s32.totalorder %s14, 0
    %p77 = por %p75, %p76
    %p78 = scmp.ne.s32.totalorder %s66, %s67
    %p79 = scmp.eq.s32.totalorder %s15, 7
    %p80 = por %p78, %p79
    %p82 = scmp.ne.s32.totalorder %s67, %s81
    %p83 = scmp.eq.s32.totalorder %s15, 0
    %p84 = por %p82, %p83
    %s85 = ssub.s32 %s9, %s16
    %p86 = scmp.eq.s32.totalorder %s85, 0
    %s88 = sadd.s32 %s87, 1
    %s89 = scalar_select %p86, %s87, %s88
    %p92 = pneg %p86
    %p93 = scmp.eq.s32.totalorder %s9, 7
    %p94 = por %p92, %p93
    %p95 = scmp.ne.s32.totalorder %s87, %s90
    %p96 = scmp.eq.s32.totalorder %s9, 0
    %p97 = por %p95, %p96
    %p98 = scmp.ne.s32.totalorder %s87, %s90
    %p99 = scmp.eq.s32.totalorder %s14, 7
    %p100 = por %p98, %p99
    %p101 = scmp.ne.s32.totalorder %s90, %s91
    %p102 = scmp.eq.s32.totalorder %s14, 0
    %p103 = por %p101, %p102
    %p104 = scmp.ne.s32.totalorder %s90, %s91
    %p105 = scmp.eq.s32.totalorder %s15, 7
    %p106 = por %p104, %p105
    %p108 = scmp.ne.s32.totalorder %s91, %s107
    %p109 = scmp.eq.s32.totalorder %s15, 0
    %p110 = por %p108, %p109
    %p111 = scmp.le.s32.totalorder 1, %s9
    %p112 = scmp.lt.s32.totalorder %s9, 9
    %p113 = pnand %p111, %p112
    %p114 = pneg %p113
    // Predicated region
    $region9: #{forward.6} parent=5 // pred_check
      _
    $region10: #{forward.6} parent=5 // pred_check_branch
      %116 = sbr.rel (%p113) target = $region12
    $region11: #{forward.6} parent=5 // pred_region
      %s117 = ssub.s32 %s9, 1
      // Predicated region
      $region13: #{forward.6} parent=11 // pred_check
        %p118 = pneg %p56
      $region14: #{forward.6} parent=11 // pred_check_branch
        %120 = sbr.rel (%p118) target = $region16
      $region15: #{forward.6} parent=11 // pred_region
        _
      $region16: #{forward.6} parent=11 // pred_fallthru
        _
      // Predicated region
      $region17: #{forward.6} parent=11 // pred_check
        %p121 = pneg %p77
      $region18: #{forward.6} parent=11 // pred_check_branch
        %123 = sbr.rel (%p121) target = $region20
      $region19: #{forward.6} parent=11 // pred_region
        _
      $region20: #{forward.6} parent=11 // pred_fallthru
        _
    $region12: #{forward.6} parent=5 // pred_fallthru
      _
    %p124 = scmp.lt.s32.totalorder %s9, 8
    // Predicated region
    $region21: #{forward.6} parent=5 // pred_check
      %p125 = pneg %p124
    $region22: #{forward.6} parent=5 // pred_check_branch
      %127 = sbr.rel (%p125) target = $region24
    $region23: #{forward.6} parent=5 // pred_region
      // Predicated region
      $region25: #{forward.6} parent=23 // pred_check
        %p128 = pneg %p29
      $region26: #{forward.6} parent=23 // pred_check_branch
        %130 = sbr.rel (%p128) target = $region28
      $region27: #{forward.6} parent=23 // pred_region
        %p131 = scmp.lt.s32.totalorder %s9, 7
        %s132 = scalar_select %p131, %s9, 7
        %s133 = smul.addr %s132, 4
        %s134 = smul.addr %s133, 8
        %s135 = scalar_lea.vmem %s0, %s134
      $region28: #{forward.6} parent=23 // pred_fallthru
        _
    $region24: #{forward.6} parent=5 // pred_fallthru
      _
    %p136 = scmp.le.s32.totalorder 1, %s9
    %p137 = scmp.lt.s32.totalorder %s9, 9
    %p138 = pnand %p136, %p137
    %p139 = pneg %p138
    // Predicated region
    $region29: #{forward.6} parent=5 // pred_check
      _
    $region30: #{forward.6} parent=5 // pred_check_branch
      %141 = sbr.rel (%p138) target = $region32
    $region31: #{forward.6} parent=5 // pred_region
      %s142 = ssub.s32 %s9, 1
      %p143 = scmp.lt.s32.totalorder %s14, 7
      %s144 = scalar_select %p143, %s14, 7
      %s145 = smul.addr %s144, 4
      %s146 = smul.addr %s145, 8
      %s147 = scalar_lea.vmem %s0, %s146
      %p148 = pneg %p35
      %p149 = pneg %p32
      %p150 = pneg %p56
      %p151 = pneg %p53
      %p152 = pneg %p77
      %p153 = pneg %p74
      %p154 = pneg %p103
      %p155 = pneg %p100
      %p156 = scmp.lt.s32.totalorder %s14, 7
      %s157 = scalar_select %p156, %s14, 7
      %s158 = smul.addr %s157, 2
      %s159 = scalar_lea.vmem %s3, %s158
      %p160 = scmp.lt.s32.totalorder %s14, 7
      %s161 = scalar_select %p160, %s14, 7
      %s162 = smul.addr %s161, 4
      %s163 = smul.addr %s162, 8
      %s164 = scalar_lea.vmem %s0, %s163
      %p165 = scmp.lt.s32.totalorder %s14, 7
      %s166 = scalar_select %p165, %s14, 7
      %s167 = smul.addr %s166, 2
      %s168 = scalar_lea.vmem %s3, %s167
      %v170 = vld [vmem:[%s164] sm:$0xff]
      %v171 = vld [vmem:[%s164 + $0x8] sm:$0xff]
      %v172 = vld [vmem:[%s164 + $0x10] sm:$0xff]
      %v173 = vld [vmem:[%s164 + $0x18] sm:$0xff]
      %v174 = vpack.c.bf16 %v171, %v170
      %v175 = vpack.c.bf16 %v173, %v172
      %v176 = vld [vmem:[%s2] sm:$0xf]
      %v177 = vld [vmem:[%s2 + $0x4] sm:$0xf]
      %v178 = vld [vmem:[%s2 + $0x8] sm:$0xf]
      %v179 = vld [vmem:[%s2 + $0xc] sm:$0xf]
      %v184 = vunpack.c.l.b16 %v176
      %v185 = vunpack.c.l.b16 %v177
      %v186 = vunpack.c.l.b16 %v178
      %v187 = vunpack.c.l.b16 %v179
      %v188 = vpack.c.b16 %v185, %v184
      %v189 = vpack.c.b16 %v187, %v186
      %vm192 = vcmask 261120
      %v194 = vsel %vm192, %v174, 0
      %v197 = vsel %vm192, %v175, 0
      %199 = vmatprep.subr.bf16.mxu0 0
      %200 = vmatpush1.bf16.msra.mxu0 %v188
      %201 = vmatprep.subr.bf16.mxu0 0
      %202 = vmatpush1.bf16.msra.mxu0 %v189
      %203 = vmatprep.subr.bf16.mxu0 0
      %204 = vmatpush1.bf16.msra.mxu0 0
      %205 = vmatprep.subr.bf16.mxu0 0
      %206 = vmatpush1.bf16.msra.mxu0 0
      %207 = vmatprep.subr.bf16.mxu0 0
      %208 = vmatpush1.bf16.msra.mxu0 0
      %209 = vmatprep.subr.bf16.mxu0 0
      %210 = vmatpush1.bf16.msra.mxu0 0
      %211 = vmatprep.subr.bf16.mxu0 0
      %212 = vmatpush1.bf16.msra.mxu0 0
      %213 = vmatprep.subr.bf16.mxu0 0
      %214 = vmatpush1.bf16.msra.mxu0 0
      %215 = vmatprep.subr.bf16.mxu0 0
      %216 = vmatpush1.bf16.msra.mxu0 0
      %217 = vmatprep.subr.bf16.mxu0 0
      %218 = vmatpush1.bf16.msra.mxu0 0
      %219 = vmatprep.subr.bf16.mxu0 0
      %220 = vmatpush1.bf16.msra.mxu0 0
      %221 = vmatprep.subr.bf16.mxu0 0
      %222 = vmatpush1.bf16.msra.mxu0 0
      %223 = vmatprep.subr.bf16.mxu0 0
      %224 = vmatpush1.bf16.msra.mxu0 0
      %225 = vmatprep.subr.bf16.mxu0 0
      %226 = vmatpush1.bf16.msra.mxu0 0
      %227 = vmatprep.subr.bf16.mxu0 0
      %228 = vmatpush1.bf16.msra.mxu0 0
      %229 = vmatprep.subr.bf16.mxu0 0
      %230 = vmatpush1.bf16.msra.mxu0 0
      %231 = vmatprep.mubr.bf16.mxu0 0
      %232 = vmatmul.mubr.bf16.gmra.mrb[0].mxu0 %v194
      %v233 = vpop.f32.mrb[0].mxu0
      %v234 = vadd.f32 0.0, %v233
      %v235 = vpop.f32.mrb[0].mxu0
      %v236 = vpop.f32.mrb[0].mxu0
      %v237 = vadd.f32 0.0, %v236
      %v238 = vpop.f32.mrb[0].mxu0
      %239 = vmatprep.mubr.bf16.mxu0 0
      %240 = vmatmul.mubr.bf16.gmra.mrb[0].mxu0 %v197
      %v241 = vpop.f32.mrb[0].mxu0
      %v242 = vadd.f32 0.0, %v241
      %v243 = vpop.f32.mrb[0].mxu0
      %v244 = vpop.f32.mrb[0].mxu0
      %v245 = vadd.f32 0.0, %v244
      %v246 = vpop.f32.mrb[0].mxu0
      %247 = vdwg.mxu0
      %v248 = vpack.c.bf16 %v237, %v234
      %v249 = vpack.c.bf16 %v245, %v242
      %v250 = vld [vmem:[%s1] sm:$0x1]
      %v252 = vsel %vm192, %v250, 0
      %254 = vmatprep.subr.bf16.mxu0 0
      %255 = vmatpush1.bf16.msra.mxu0 %v248
      %256 = vmatprep.subr.bf16.mxu0 0
      %257 = vmatpush1.bf16.msra.mxu0 %v249
      %258 = vmatprep.subr.bf16.mxu0 0
      %259 = vmatpush1.bf16.msra.mxu0 0
      %260 = vmatprep.subr.bf16.mxu0 0
      %261 = vmatpush1.bf16.msra.mxu0 0
      %262 = vmatprep.subr.bf16.mxu0 0
      %263 = vmatpush1.bf16.msra.mxu0 0
      %264 = vmatprep.subr.bf16.mxu0 0
      %265 = vmatpush1.bf16.msra.mxu0 0
      %266 = vmatprep.subr.bf16.mxu0 0
      %267 = vmatpush1.bf16.msra.mxu0 0
      %268 = vmatprep.subr.bf16.mxu0 0
      %269 = vmatpush1.bf16.msra.mxu0 0
      %270 = vmatprep.subr.bf16.mxu0 0
      %271 = vmatpush1.bf16.msra.mxu0 0
      %272 = vmatprep.subr.bf16.mxu0 0
      %273 = vmatpush1.bf16.msra.mxu0 0
      %274 = vmatprep.subr.bf16.mxu0 0
      %275 = vmatpush1.bf16.msra.mxu0 0
      %276 = vmatprep.subr.bf16.mxu0 0
      %277 = vmatpush1.bf16.msra.mxu0 0
      %278 = vmatprep.subr.bf16.mxu0 0
      %279 = vmatpush1.bf16.msra.mxu0 0
      %280 = vmatprep.subr.bf16.mxu0 0
      %281 = vmatpush1.bf16.msra.mxu0 0
      %282 = vmatprep.subr.bf16.mxu0 0
      %283 = vmatpush1.bf16.msra.mxu0 0
      %284 = vmatprep.subr.bf16.mxu0 0
      %285 = vmatpush1.bf16.msra.mxu0 0
      %286 = vmatprep.mubr.bf16.mxu0 0
      %287 = vmatmul.mubr.bf16.gmra.mrb[0].mxu0 %v252
      %v288 = vpop.f32.mrb[0].mxu0
      %v289 = vadd.f32 0.0, %v288
      %v290 = vpop.f32.mrb[0].mxu0
      %v291 = vpop.f32.mrb[0].mxu0
      %v292 = vpop.f32.mrb[0].mxu0
      %293 = vdwg.mxu0
      %vm294 = vcmask 9216
      %295 = vst.msk [vmem:[%s168] sm:$0x3] %vm294, %v289
      %p296 = scmp.lt.s32.totalorder %s14, 7
      %s297 = scalar_select %p296, %s14, 7
      %s298 = smul.addr %s297, 2
      %s299 = scalar_lea.vmem %s3, %s298
      // Predicated region
      $region33: #{forward.6} parent=31 // pred_check
        %p300 = pneg %p100
      $region34: #{forward.6} parent=31 // pred_check_branch
        %302 = sbr.rel (%p300) target = $region36
      $region35: #{forward.6} parent=31 // pred_region
        _
      $region36: #{forward.6} parent=31 // pred_fallthru
        _
    $region32: #{forward.6} parent=5 // pred_fallthru
      _
    %p303 = scmp.le.s32.totalorder 2, %s9
    // Predicated region
    $region37: #{forward.6} parent=5 // pred_check
      %p304 = pneg %p303
    $region38: #{forward.6} parent=5 // pred_check_branch
      %306 = sbr.rel (%p304) target = $region40
    $region39: #{forward.6} parent=5 // pred_region
      %s307 = ssub.s32 %s9, 2
      // Predicated region
      $region41: #{forward.6} parent=39 // pred_check
        %p308 = pneg %p106
      $region42: #{forward.6} parent=39 // pred_check_branch
        %310 = sbr.rel (%p308) target = $region44
      $region43: #{forward.6} parent=39 // pred_region
        %p311 = scmp.lt.s32.totalorder %s15, 7
        %s312 = scalar_select %p311, %s15, 7
        %s313 = smul.addr %s312, 2
        %s314 = scalar_lea.vmem %s3, %s313
      $region44: #{forward.6} parent=39 // pred_fallthru
        _
    $region40: #{forward.6} parent=5 // pred_fallthru
      _
  $region6: #{forward.6} parent=0 // loop_footer
    %s13 = sadd.s32 1, %s9
  $region7: #{forward.6} parent=0 // loop_footer_branch
    %8 = sbr.rel target = $region3
  $region8: #{forward.6} parent=0 // loop_exit
    _

// kernel: forward.4
$region0: #{forward.4}
  #allocation0 [shape = 'u32[]', space=smem, size = 0x4, offset = 0x4, fixed_abs, tag = 'smem constant byte address 0x4 - core index']
  #allocation1 [shape = 'u32[144,128]{1,0:T(1,128)}', space=vmem, size = 0x12000, scoped, tag = 'internal scratch']
  %s0 = inlined_call_operand.vmem [shape: f32[32,16,16], index: 0, kind: input, shape index: {}]
  %s1 = inlined_call_operand.vmem [shape: bf16[32,16], index: 1, kind: input, shape index: {}]
  %s2 = inlined_call_operand.vmem [shape: bf16[16,32], index: 2, kind: input, shape index: {}]
  %s3 = inlined_call_operand.vmem [shape: f32[32,32,32], index: 3, kind: output, shape index: {}]
  %s4 = sld [smem:[#allocation0]]
  $region45: #{forward.4} parent=0
    _
  %s6 = ssub.s32 1, %s4
  %s7 = scalar_select 0, %s6, %s4
  loop: start=0, step=1, limit=10
  $region2: #{forward.4} parent=0 // loop_pre_header
    _
  $region3: #{forward.4} parent=0 // loop_header
    %s9 = sphi 0, %s13
    %p10 = scmp.ge.s32.totalorder %s9, 10
    %s19 = sphi 0, %s21
    %s22 = sphi 0, %s19
    %s23 = sphi 0, %s22
    %s39 = sphi 0, %s23
    %s43 = sphi 0, %s43
    %s45 = sphi 0, %s43
    %s46 = sphi 0, %s45
    %s60 = sphi 0, %s46
    %s64 = sphi 0, %s64
    %s66 = sphi 0, %s64
    %s67 = sphi 0, %s66
    %s81 = sphi 0, %s67
    %s87 = sphi 0, %s89
    %s90 = sphi 0, %s87
    %s91 = sphi 0, %s90
    %s107 = sphi 0, %s91
  $region4: #{forward.4} parent=0 // loop_header_branch
    %12 = sbr.rel (%p10) target = $region8
  $region5: #{forward.4} parent=0 // loop_body
    %s14 = ssub.s32 %s9, 1
    %s15 = ssub.s32 %s9, 2
    %s16 = sadd.s32 %s9, 1
    %s17 = ssub.s32 %s9, %s16
    %p18 = scmp.eq.s32.totalorder %s17, 0
    %s20 = sadd.s32 %s19, 1
    %s21 = scalar_select %p18, %s19, %s20
    %p24 = pneg %p18
    %p25 = scmp.eq.s32.totalorder %s9, 7
    %p26 = por %p24, %p25
    %p27 = scmp.ne.s32.totalorder %s19, %s22
    %p28 = scmp.eq.s32.totalorder %s9, 0
    %p29 = por %p27, %p28
    %p30 = scmp.ne.s32.totalorder %s19, %s22
    %p31 = scmp.eq.s32.totalorder %s14, 7
    %p32 = por %p30, %p31
    %p33 = scmp.ne.s32.totalorder %s22, %s23
    %p34 = scmp.eq.s32.totalorder %s14, 0
    %p35 = por %p33, %p34
    %p36 = scmp.ne.s32.totalorder %s22, %s23
    %p37 = scmp.eq.s32.totalorder %s15, 7
    %p38 = por %p36, %p37
    %p40 = scmp.ne.s32.totalorder %s23, %s39
    %p41 = scmp.eq.s32.totalorder %s15, 0
    %p42 = por %p40, %p41
    %s44 = sadd.s32 %s43, 1
    %p47 = scmp.eq.s32.totalorder %s9, 7
    %p48 = scmp.ne.s32.totalorder %s43, %s45
    %p49 = scmp.eq.s32.totalorder %s9, 0
    %p50 = por %p48, %p49
    %p51 = scmp.ne.s32.totalorder %s43, %s45
    %p52 = scmp.eq.s32.totalorder %s14, 7
    %p53 = por %p51, %p52
    %p54 = scmp.ne.s32.totalorder %s45, %s46
    %p55 = scmp.eq.s32.totalorder %s14, 0
    %p56 = por %p54, %p55
    %p57 = scmp.ne.s32.totalorder %s45, %s46
    %p58 = scmp.eq.s32.totalorder %s15, 7
    %p59 = por %p57, %p58
    %p61 = scmp.ne.s32.totalorder %s46, %s60
    %p62 = scmp.eq.s32.totalorder %s15, 0
    %p63 = por %p61, %p62
    %s65 = sadd.s32 %s64, 1
    %p68 = scmp.eq.s32.totalorder %s9, 7
    %p69 = scmp.ne.s32.totalorder %s64, %s66
    %p70 = scmp.eq.s32.totalorder %s9, 0
    %p71 = por %p69, %p70
    %p72 = scmp.ne.s32.totalorder %s64, %s66
    %p73 = scmp.eq.s32.totalorder %s14, 7
    %p74 = por %p72, %p73
    %p75 = scmp.ne.s32.totalorder %s66, %s67
    %p76 = scmp.eq.s32.totalorder %s14, 0
    %p77 = por %p75, %p76
    %p78 = scmp.ne.s32.totalorder %s66, %s67
    %p79 = scmp.eq.s32.totalorder %s15, 7
    %p80 = por %p78, %p79
    %p82 = scmp.ne.s32.totalorder %s67, %s81
    %p83 = scmp.eq.s32.totalorder %s15, 0
    %p84 = por %p82, %p83
    %s85 = ssub.s32 %s9, %s16
    %p86 = scmp.eq.s32.totalorder %s85, 0
    %s88 = sadd.s32 %s87, 1
    %s89 = scalar_select %p86, %s87, %s88
    %p92 = pneg %p86
    %p93 = scmp.eq.s32.totalorder %s9, 7
    %p94 = por %p92, %p93
    %p95 = scmp.ne.s32.totalorder %s87, %s90
    %p96 = scmp.eq.s32.totalorder %s9, 0
    %p97 = por %p95, %p96
    %p98 = scmp.ne.s32.totalorder %s87, %s90
    %p99 = scmp.eq.s32.totalorder %s14, 7
    %p100 = por %p98, %p99
    %p101 = scmp.ne.s32.totalorder %s90, %s91
    %p102 = scmp.eq.s32.totalorder %s14, 0
    %p103 = por %p101, %p102
    %p104 = scmp.ne.s32.totalorder %s90, %s91
    %p105 = scmp.eq.s32.totalorder %s15, 7
    %p106 = por %p104, %p105
    %p108 = scmp.ne.s32.totalorder %s91, %s107
    %p109 = scmp.eq.s32.totalorder %s15, 0
    %p110 = por %p108, %p109
    %p111 = scmp.le.s32.totalorder 1, %s9
    %p112 = scmp.lt.s32.totalorder %s9, 9
    %p113 = pnand %p111, %p112
    %p114 = pneg %p113
    // Predicated region
    $region9: #{forward.4} parent=5 // pred_check
      _
    $region10: #{forward.4} parent=5 // pred_check_branch
      %116 = sbr.rel (%p113) target = $region12
    $region11: #{forward.4} parent=5 // pred_region
      %s117 = ssub.s32 %s9, 1
      // Predicated region
      $region13: #{forward.4} parent=11 // pred_check
        %p118 = pneg %p56
      $region14: #{forward.4} parent=11 // pred_check_branch
        %120 = sbr.rel (%p118) target = $region16
      $region15: #{forward.4} parent=11 // pred_region
        _
      $region16: #{forward.4} parent=11 // pred_fallthru
        _
      // Predicated region
      $region17: #{forward.4} parent=11 // pred_check
        %p121 = pneg %p77
      $region18: #{forward.4} parent=11 // pred_check_branch
        %123 = sbr.rel (%p121) target = $region20
      $region19: #{forward.4} parent=11 // pred_region
        _
      $region20: #{forward.4} parent=11 // pred_fallthru
        _
    $region12: #{forward.4} parent=5 // pred_fallthru
      _
    %p124 = scmp.lt.s32.totalorder %s9, 8
    // Predicated region
    $region21: #{forward.4} parent=5 // pred_check
      %p125 = pneg %p124
    $region22: #{forward.4} parent=5 // pred_check_branch
      %127 = sbr.rel (%p125) target = $region24
    $region23: #{forward.4} parent=5 // pred_region
      // Predicated region
      $region25: #{forward.4} parent=23 // pred_check
        %p128 = pneg %p29
      $region26: #{forward.4} parent=23 // pred_check_branch
        %130 = sbr.rel (%p128) target = $region28
      $region27: #{forward.4} parent=23 // pred_region
        %s131 = smul.u32 4, %s9
        %p132 = scmp.lt.s32.totalorder %s131, 31
        %s133 = scalar_select %p132, %s131, 31
        %s134 = smul.addr %s133, 2
        %s135 = smul.addr %s134, 8
        %s136 = scalar_lea.vmem %s0, %s135
        %s137 = smul.u32 4, %s9
      $region28: #{forward.4} parent=23 // pred_fallthru
        _
    $region24: #{forward.4} parent=5 // pred_fallthru
      _
    %p138 = scmp.le.s32.totalorder 1, %s9
    %p139 = scmp.lt.s32.totalorder %s9, 9
    %p140 = pnand %p138, %p139
    %p141 = pneg %p140
    // Predicated region
    $region29: #{forward.4} parent=5 // pred_check
      _
    $region30: #{forward.4} parent=5 // pred_check_branch
      %143 = sbr.rel (%p140) target = $region32
    $region31: #{forward.4} parent=5 // pred_region
      %s144 = ssub.s32 %s9, 1
      %s145 = smul.u32 4, %s14
      %p146 = scmp.lt.s32.totalorder %s145, 31
      %s147 = scalar_select %p146, %s145, 31
      %s148 = smul.addr %s147, 2
      %s149 = smul.addr %s148, 8
      %s150 = scalar_lea.vmem %s0, %s149
      %p151 = pneg %p35
      %p152 = pneg %p32
      %p153 = pneg %p56
      %p154 = pneg %p53
      %p155 = pneg %p77
      %p156 = pneg %p74
      %p157 = pneg %p103
      %p158 = pneg %p100
      %s159 = smul.u32 4, %s14
      %p160 = scmp.lt.s32.totalorder %s159, 31
      %s161 = scalar_select %p160, %s159, 31
      %s162 = smul.addr %s161, 4
      %s163 = smul.addr %s162, 8
      %s164 = scalar_lea.vmem %s3, %s163
      %s165 = smul.u32 4, %s14
      %p166 = scmp.lt.s32.totalorder %s165, 31
      %s167 = scalar_select %p166, %s165, 31
      %s168 = smul.addr %s167, 2
      %s169 = smul.addr %s168, 8
      %s170 = scalar_lea.vmem %s0, %s169
      %s171 = smul.u32 4, %s14
      %s172 = smul.u32 4, %s14
      %p173 = scmp.lt.s32.totalorder %s172, 31
      %s174 = scalar_select %p173, %s172, 31
      %s175 = smul.addr %s174, 4
      %s176 = smul.addr %s175, 8
      %s177 = scalar_lea.vmem %s3, %s176
      %s178 = smul.u32 4, %s14
      %v180 = vld [vmem:[%s170] sm:$0xff]
      %v181 = vld [vmem:[%s170 + $0x8] sm:$0xff]
      %v182 = vld [vmem:[%s170 + $0x10] sm:$0xff]
      %v183 = vld [vmem:[%s170 + $0x18] sm:$0xff]
      %v184 = vld [vmem:[%s170 + $0x20] sm:$0xff]
      %v185 = vld [vmem:[%s170 + $0x28] sm:$0xff]
      %v186 = vld [vmem:[%s170 + $0x30] sm:$0xff]
      %v187 = vld [vmem:[%s170 + $0x38] sm:$0xff]
      %v188 = vpack.c.bf16 %v181, %v180
      %v189 = vpack.c.bf16 %v183, %v182
      %v190 = vpack.c.bf16 %v185, %v184
      %v191 = vpack.c.bf16 %v187, %v186
      %v192 = vld [vmem:[%s2] sm:$0xf]
      %v193 = vld [vmem:[%s2 + $0x4] sm:$0xf]
      %v196 = vunpack.c.l.b16 %v192
      %v197 = vunpack.c.l.b16 %v193
      %v198 = vpack.c.b16 %v197, %v196
      %vm200 = vcmask 130048
      %v202 = vsel %vm200, %v188, 0
      %v205 = vsel %vm200, %v189, 0
      %v208 = vsel %vm200, %v190, 0
      %v211 = vsel %vm200, %v191, 0
      %213 = vmatprep.subr.bf16.mxu0 0
      %214 = vmatpush1.bf16.msra.mxu0 %v198
      %215 = vmatprep.subr.bf16.mxu0 0
      %216 = vmatpush1.bf16.msra.mxu0 0
      %217 = vmatprep.subr.bf16.mxu0 0
      %218 = vmatpush1.bf16.msra.mxu0 0
      %219 = vmatprep.subr.bf16.mxu0 0
      %220 = vmatpush1.bf16.msra.mxu0 0
      %221 = vmatprep.subr.bf16.mxu0 0
      %222 = vmatpush1.bf16.msra.mxu0 0
      %223 = vmatprep.subr.bf16.mxu0 0
      %224 = vmatpush1.bf16.msra.mxu0 0
      %225 = vmatprep.subr.bf16.mxu0 0
      %226 = vmatpush1.bf16.msra.mxu0 0
      %227 = vmatprep.subr.bf16.mxu0 0
      %228 = vmatpush1.bf16.msra.mxu0 0
      %229 = vmatprep.subr.bf16.mxu0 0
      %230 = vmatpush1.bf16.msra.mxu0 0
      %231 = vmatprep.subr.bf16.mxu0 0
      %232 = vmatpush1.bf16.msra.mxu0 0
      %233 = vmatprep.subr.bf16.mxu0 0
      %234 = vmatpush1.bf16.msra.mxu0 0
      %235 = vmatprep.subr.bf16.mxu0 0
      %236 = vmatpush1.bf16.msra.mxu0 0
      %237 = vmatprep.subr.bf16.mxu0 0
      %238 = vmatpush1.bf16.msra.mxu0 0
      %239 = vmatprep.subr.bf16.mxu0 0
      %240 = vmatpush1.bf16.msra.mxu0 0
      %241 = vmatprep.subr.bf16.mxu0 0
      %242 = vmatpush1.bf16.msra.mxu0 0
      %243 = vmatprep.subr.bf16.mxu0 0
      %244 = vmatpush1.bf16.msra.mxu0 0
      %245 = vmatprep.mubr.bf16.mxu0 0
      %246 = vmatmul.mubr.bf16.gmra.mrb[0].mxu0 %v202
      %v247 = vpop.f32.mrb[0].mxu0
      %v248 = vadd.f32 0.0, %v247
      %v249 = vpop.f32.mrb[0].mxu0
      %v250 = vpop.f32.mrb[0].mxu0
      %v251 = vadd.f32 0.0, %v250
      %v252 = vpop.f32.mrb[0].mxu0
      %253 = vmatprep.mubr.bf16.mxu0 0
      %254 = vmatmul.mubr.bf16.gmra.mrb[0].mxu0 %v205
      %v255 = vpop.f32.mrb[0].mxu0
      %v256 = vadd.f32 0.0, %v255
      %v257 = vpop.f32.mrb[0].mxu0
      %v258 = vpop.f32.mrb[0].mxu0
      %v259 = vadd.f32 0.0, %v258
      %v260 = vpop.f32.mrb[0].mxu0
      %261 = vmatprep.mubr.bf16.mxu0 0
      %262 = vmatmul.mubr.bf16.gmra.mrb[0].mxu0 %v208
      %v263 = vpop.f32.mrb[0].mxu0
      %v264 = vadd.f32 0.0, %v263
      %v265 = vpop.f32.mrb[0].mxu0
      %v266 = vpop.f32.mrb[0].mxu0
      %v267 = vadd.f32 0.0, %v266
      %v268 = vpop.f32.mrb[0].mxu0
      %269 = vmatprep.mubr.bf16.mxu0 0
      %270 = vmatmul.mubr.bf16.gmra.mrb[0].mxu0 %v211
      %v271 = vpop.f32.mrb[0].mxu0
      %v272 = vadd.f32 0.0, %v271
      %v273 = vpop.f32.mrb[0].mxu0
      %v274 = vpop.f32.mrb[0].mxu0
      %v275 = vadd.f32 0.0, %v274
      %v276 = vpop.f32.mrb[0].mxu0
      %277 = vdwg.mxu0
      %v278 = vpack.c.bf16 %v251, %v248
      %v279 = vpack.c.bf16 %v259, %v256
      %v280 = vpack.c.bf16 %v267, %v264
      %v281 = vpack.c.bf16 %v275, %v272
      %v282 = vld [vmem:[%s1] sm:$0xf]
      %v283 = vld [vmem:[%s1 + $0x4] sm:$0xf]
      %v284 = vld [vmem:[%s1 + $0x8] sm:$0xf]
      %v285 = vld [vmem:[%s1 + $0xc] sm:$0xf]
      %v290 = vunpack.c.l.b16 %v282
      %v291 = vunpack.c.l.b16 %v283
      %v292 = vunpack.c.l.b16 %v284
      %v293 = vunpack.c.l.b16 %v285
      %v294 = vpack.c.b16 %v291, %v290
      %v295 = vpack.c.b16 %v293, %v292
      %v297 = vsel %vm200, %v294, 0
      %v300 = vsel %vm200, %v295, 0
      %302 = vmatprep.subr.bf16.mxu0 0
      %303 = vmatpush1.bf16.msra.mxu0 %v278
      %304 = vmatprep.subr.bf16.mxu0 0
      %305 = vmatpush1.bf16.msra.mxu0 0
      %306 = vmatprep.subr.bf16.mxu0 0
      %307 = vmatpush1.bf16.msra.mxu0 0
      %308 = vmatprep.subr.bf16.mxu0 0
      %309 = vmatpush1.bf16.msra.mxu0 0
      %310 = vmatprep.subr.bf16.mxu0 0
      %311 = vmatpush1.bf16.msra.mxu0 0
      %312 = vmatprep.subr.bf16.mxu0 0
      %313 = vmatpush1.bf16.msra.mxu0 0
      %314 = vmatprep.subr.bf16.mxu0 0
      %315 = vmatpush1.bf16.msra.mxu0 0
      %316 = vmatprep.subr.bf16.mxu0 0
      %317 = vmatpush1.bf16.msra.mxu0 0
      %318 = vmatprep.subr.bf16.mxu0 0
      %319 = vmatpush1.bf16.msra.mxu0 0
      %320 = vmatprep.subr.bf16.mxu0 0
      %321 = vmatpush1.bf16.msra.mxu0 0
      %322 = vmatprep.subr.bf16.mxu0 0
      %323 = vmatpush1.bf16.msra.mxu0 0
      %324 = vmatprep.subr.bf16.mxu0 0
      %325 = vmatpush1.bf16.msra.mxu0 0
      %326 = vmatprep.subr.bf16.mxu0 0
      %327 = vmatpush1.bf16.msra.mxu0 0
      %328 = vmatprep.subr.bf16.mxu0 0
      %329 = vmatpush1.bf16.msra.mxu0 0
      %330 = vmatprep.subr.bf16.mxu0 0
      %331 = vmatpush1.bf16.msra.mxu0 0
      %332 = vmatprep.subr.bf16.mxu0 0
      %333 = vmatpush1.bf16.msra.mxu0 0
      %334 = vmatprep.mubr.bf16.mxu0 0
      %335 = vmatmul.mubr.bf16.gmra.mrb[0].mxu0 %v297
      %v336 = vpop.f32.mrb[0].mxu0
      %v337 = vadd.f32 0.0, %v336
      %v338 = vpop.f32.mrb[0].mxu0
      %v339 = vpop.f32.mrb[0].mxu0
      %v340 = vadd.f32 0.0, %v339
      %v341 = vpop.f32.mrb[0].mxu0
      %342 = vmatprep.mubr.bf16.mxu0 0
      %343 = vmatmul.mubr.bf16.gmra.mrb[0].mxu0 %v300
      %v344 = vpop.f32.mrb[0].mxu0
      %v345 = vadd.f32 0.0, %v344
      %v346 = vpop.f32.mrb[0].mxu0
      %v347 = vpop.f32.mrb[0].mxu0
      %v348 = vadd.f32 0.0, %v347
      %v349 = vpop.f32.mrb[0].mxu0
      %350 = vdwg.mxu0
      %351 = vmatprep.subr.bf16.mxu0 0
      %352 = vmatpush1.bf16.msra.mxu0 %v279
      %353 = vmatprep.subr.bf16.mxu0 0
      %354 = vmatpush1.bf16.msra.mxu0 0
      %355 = vmatprep.subr.bf16.mxu0 0
      %356 = vmatpush1.bf16.msra.mxu0 0
      %357 = vmatprep.subr.bf16.mxu0 0
      %358 = vmatpush1.bf16.msra.mxu0 0
      %359 = vmatprep.subr.bf16.mxu0 0
      %360 = vmatpush1.bf16.msra.mxu0 0
      %361 = vmatprep.subr.bf16.mxu0 0
      %362 = vmatpush1.bf16.msra.mxu0 0
      %363 = vmatprep.subr.bf16.mxu0 0
      %364 = vmatpush1.bf16.msra.mxu0 0
      %365 = vmatprep.subr.bf16.mxu0 0
      %366 = vmatpush1.bf16.msra.mxu0 0
      %367 = vmatprep.subr.bf16.mxu0 0
      %368 = vmatpush1.bf16.msra.mxu0 0
      %369 = vmatprep.subr.bf16.mxu0 0
      %370 = vmatpush1.bf16.msra.mxu0 0
      %371 = vmatprep.subr.bf16.mxu0 0
      %372 = vmatpush1.bf16.msra.mxu0 0
      %373 = vmatprep.subr.bf16.mxu0 0
      %374 = vmatpush1.bf16.msra.mxu0 0
      %375 = vmatprep.subr.bf16.mxu0 0
      %376 = vmatpush1.bf16.msra.mxu0 0
      %377 = vmatprep.subr.bf16.mxu0 0
      %378 = vmatpush1.bf16.msra.mxu0 0
      %379 = vmatprep.subr.bf16.mxu0 0
      %380 = vmatpush1.bf16.msra.mxu0 0
      %381 = vmatprep.subr.bf16.mxu0 0
      %382 = vmatpush1.bf16.msra.mxu0 0
      %383 = vmatprep.mubr.bf16.mxu0 0
      %384 = vmatmul.mubr.bf16.gmra.mrb[0].mxu0 %v297
      %v385 = vpop.f32.mrb[0].mxu0
      %v386 = vadd.f32 0.0, %v385
      %v387 = vpop.f32.mrb[0].mxu0
      %v388 = vpop.f32.mrb[0].mxu0
      %v389 = vadd.f32 0.0, %v388
      %v390 = vpop.f32.mrb[0].mxu0
      %391 = vmatprep.mubr.bf16.mxu0 0
      %392 = vmatmul.mubr.bf16.gmra.mrb[0].mxu0 %v300
      %v393 = vpop.f32.mrb[0].mxu0
      %v394 = vadd.f32 0.0, %v393
      %v395 = vpop.f32.mrb[0].mxu0
      %v396 = vpop.f32.mrb[0].mxu0
      %v397 = vadd.f32 0.0, %v396
      %v398 = vpop.f32.mrb[0].mxu0
      %399 = vdwg.mxu0
      %400 = vmatprep.subr.bf16.mxu0 0
      %401 = vmatpush1.bf16.msra.mxu0 %v280
      %402 = vmatprep.subr.bf16.mxu0 0
      %403 = vmatpush1.bf16.msra.mxu0 0
      %404 = vmatprep.subr.bf16.mxu0 0
      %405 = vmatpush1.bf16.msra.mxu0 0
      %406 = vmatprep.subr.bf16.mxu0 0
      %407 = vmatpush1.bf16.msra.mxu0 0
      %408 = vmatprep.subr.bf16.mxu0 0
      %409 = vmatpush1.bf16.msra.mxu0 0
      %410 = vmatprep.subr.bf16.mxu0 0
      %411 = vmatpush1.bf16.msra.mxu0 0
      %412 = vmatprep.subr.bf16.mxu0 0
      %413 = vmatpush1.bf16.msra.mxu0 0
      %414 = vmatprep.subr.bf16.mxu0 0
      %415 = vmatpush1.bf16.msra.mxu0 0
      %416 = vmatprep.subr.bf16.mxu0 0
      %417 = vmatpush1.bf16.msra.mxu0 0
      %418 = vmatprep.subr.bf16.mxu0 0
      %419 = vmatpush1.bf16.msra.mxu0 0
      %420 = vmatprep.subr.bf16.mxu0 0
      %421 = vmatpush1.bf16.msra.mxu0 0
      %422 = vmatprep.subr.bf16.mxu0 0
      %423 = vmatpush1.bf16.msra.mxu0 0
      %424 = vmatprep.subr.bf16.mxu0 0
      %425 = vmatpush1.bf16.msra.mxu0 0
      %426 = vmatprep.subr.bf16.mxu0 0
      %427 = vmatpush1.bf16.msra.mxu0 0
      %428 = vmatprep.subr.bf16.mxu0 0
      %429 = vmatpush1.bf16.msra.mxu0 0
      %430 = vmatprep.subr.bf16.mxu0 0
      %431 = vmatpush1.bf16.msra.mxu0 0
      %432 = vmatprep.mubr.bf16.mxu0 0
      %433 = vmatmul.mubr.bf16.gmra.mrb[0].mxu0 %v297
      %v434 = vpop.f32.mrb[0].mxu0
      %v435 = vadd.f32 0.0, %v434
      %v436 = vpop.f32.mrb[0].mxu0
      %v437 = vpop.f32.mrb[0].mxu0
      %v438 = vadd.f32 0.0, %v437
      %v439 = vpop.f32.mrb[0].mxu0
      %440 = vmatprep.mubr.bf16.mxu0 0
      %441 = vmatmul.mubr.bf16.gmra.mrb[0].mxu0 %v300
      %v442 = vpop.f32.mrb[0].mxu0
      %v443 = vadd.f32 0.0, %v442
      %v444 = vpop.f32.mrb[0].mxu0
      %v445 = vpop.f32.mrb[0].mxu0
      %v446 = vadd.f32 0.0, %v445
      %v447 = vpop.f32.mrb[0].mxu0
      %448 = vdwg.mxu0
      %449 = vmatprep.subr.bf16.mxu0 0
      %450 = vmatpush1.bf16.msra.mxu0 %v281
      %451 = vmatprep.subr.bf16.mxu0 0
      %452 = vmatpush1.bf16.msra.mxu0 0
      %453 = vmatprep.subr.bf16.mxu0 0
      %454 = vmatpush1.bf16.msra.mxu0 0
      %455 = vmatprep.subr.bf16.mxu0 0
      %456 = vmatpush1.bf16.msra.mxu0 0
      %457 = vmatprep.subr.bf16.mxu0 0
      %458 = vmatpush1.bf16.msra.mxu0 0
      %459 = vmatprep.subr.bf16.mxu0 0
      %460 = vmatpush1.bf16.msra.mxu0 0
      %461 = vmatprep.subr.bf16.mxu0 0
      %462 = vmatpush1.bf16.msra.mxu0 0
      %463 = vmatprep.subr.bf16.mxu0 0
      %464 = vmatpush1.bf16.msra.mxu0 0
      %465 = vmatprep.subr.bf16.mxu0 0
      %466 = vmatpush1.bf16.msra.mxu0 0
      %467 = vmatprep.subr.bf16.mxu0 0
      %468 = vmatpush1.bf16.msra.mxu0 0
      %469 = vmatprep.subr.bf16.mxu0 0
      %470 = vmatpush1.bf16.msra.mxu0 0
      %471 = vmatprep.subr.bf16.mxu0 0
      %472 = vmatpush1.bf16.msra.mxu0 0
      %473 = vmatprep.subr.bf16.mxu0 0
      %474 = vmatpush1.bf16.msra.mxu0 0
      %475 = vmatprep.subr.bf16.mxu0 0
      %476 = vmatpush1.bf16.msra.mxu0 0
      %477 = vmatprep.subr.bf16.mxu0 0
      %478 = vmatpush1.bf16.msra.mxu0 0
      %479 = vmatprep.subr.bf16.mxu0 0
      %480 = vmatpush1.bf16.msra.mxu0 0
      %481 = vmatprep.mubr.bf16.mxu0 0
      %482 = vmatmul.mubr.bf16.gmra.mrb[0].mxu0 %v297
      %v483 = vpop.f32.mrb[0].mxu0
      %v484 = vadd.f32 0.0, %v483
      %v485 = vpop.f32.mrb[0].mxu0
      %v486 = vpop.f32.mrb[0].mxu0
      %v487 = vadd.f32 0.0, %v486
      %v488 = vpop.f32.mrb[0].mxu0
      %489 = vmatprep.mubr.bf16.mxu0 0
      %490 = vmatmul.mubr.bf16.gmra.mrb[0].mxu0 %v300
      %v491 = vpop.f32.mrb[0].mxu0
      %v492 = vadd.f32 0.0, %v491
      %v493 = vpop.f32.mrb[0].mxu0
      %v494 = vpop.f32.mrb[0].mxu0
      %v495 = vadd.f32 0.0, %v494
      %v496 = vpop.f32.mrb[0].mxu0
      %497 = vdwg.mxu0
      %vm498 = vcmask 261120
      %499 = vst.msk [vmem:[%s177] sm:$0xff] %vm498, %v337
      %500 = vst.msk [vmem:[%s177 + $0x8] sm:$0xff] %vm498, %v340
      %501 = vst.msk [vmem:[%s177 + $0x10] sm:$0xff] %vm498, %v345
      %502 = vst.msk [vmem:[%s177 + $0x18] sm:$0xff] %vm498, %v348
      %503 = vst.msk [vmem:[%s177 + $0x20] sm:$0xff] %vm498, %v386
      %504 = vst.msk [vmem:[%s177 + $0x28] sm:$0xff] %vm498, %v389
      %505 = vst.msk [vmem:[%s177 + $0x30] sm:$0xff] %vm498, %v394
      %506 = vst.msk [vmem:[%s177 + $0x38] sm:$0xff] %vm498, %v397
      %507 = vst.msk [vmem:[%s177 + $0x40] sm:$0xff] %vm498, %v435
      %508 = vst.msk [vmem:[%s177 + $0x48] sm:$0xff] %vm498, %v438
      %509 = vst.msk [vmem:[%s177 + $0x50] sm:$0xff] %vm498, %v443
      %510 = vst.msk [vmem:[%s177 + $0x58] sm:$0xff] %vm498, %v446
      %511 = vst.msk [vmem:[%s177 + $0x60] sm:$0xff] %vm498, %v484
      %512 = vst.msk [vmem:[%s177 + $0x68] sm:$0xff] %vm498, %v487
      %513 = vst.msk [vmem:[%s177 + $0x70] sm:$0xff] %vm498, %v492
      %514 = vst.msk [vmem:[%s177 + $0x78] sm:$0xff] %vm498, %v495
      %s515 = smul.u32 4, %s14
      %p516 = scmp.lt.s32.totalorder %s515, 31
      %s517 = scalar_select %p516, %s515, 31
      %s518 = smul.addr %s517, 4
      %s519 = smul.addr %s518, 8
      %s520 = scalar_lea.vmem %s3, %s519
      // Predicated region
      $region33: #{forward.4} parent=31 // pred_check
        %p521 = pneg %p100
      $region34: #{forward.4} parent=31 // pred_check_branch
        %523 = sbr.rel (%p521) target = $region36
      $region35: #{forward.4} parent=31 // pred_region
        %s524 = smul.u32 4, %s14
      $region36: #{forward.4} parent=31 // pred_fallthru
        _
    $region32: #{forward.4} parent=5 // pred_fallthru
      _
    %p525 = scmp.le.s32.totalorder 2, %s9
    // Predicated region
    $region37: #{forward.4} parent=5 // pred_check
      %p526 = pneg %p525
    $region38: #{forward.4} parent=5 // pred_check_branch
      %528 = sbr.rel (%p526) target = $region40
    $region39: #{forward.4} parent=5 // pred_region
      %s529 = ssub.s32 %s9, 2
      // Predicated region
      $region41: #{forward.4} parent=39 // pred_check
        %p530 = pneg %p106
      $region42: #{forward.4} parent=39 // pred_check_branch
        %532 = sbr.rel (%p530) target = $region44
      $region43: #{forward.4} parent=39 // pred_region
        %s533 = smul.u32 4, %s15
        %p534 = scmp.lt.s32.totalorder %s533, 31
        %s535 = scalar_select %p534, %s533, 31
        %s536 = smul.addr %s535, 4
        %s537 = smul.addr %s536, 8
        %s538 = scalar_lea.vmem %s3, %s537
      $region44: #{forward.4} parent=39 // pred_fallthru
        _
    $region40: #{forward.4} parent=5 // pred_fallthru
      _
  $region6: #{forward.4} parent=0 // loop_footer
    %s13 = sadd.s32 1, %s9
  $region7: #{forward.4} parent=0 // loop_footer_branch
    %8 = sbr.rel target = $region3
  $region8: #{forward.4} parent=0 // loop_exit
    _

// kernel: forward.7
$region0: #{forward.7}
  #allocation0 [shape = 'u32[]', space=smem, size = 0x4, offset = 0x4, fixed_abs, tag = 'smem constant byte address 0x4 - core index']
  #allocation1 [shape = 'u32[144,128]{1,0:T(1,128)}', space=vmem, size = 0x12000, scoped, tag = 'internal scratch']
  %s0 = inlined_call_operand.vmem [shape: f32[2,4,1024], index: 0, kind: input, shape index: {}]
  %s1 = inlined_call_operand.vmem [shape: f32[2,4,4], index: 1, kind: input, shape index: {}]
  %s2 = inlined_call_operand.vmem [shape: f32[2,4,4], index: 2, kind: input, shape index: {}]
  %s3 = inlined_call_operand.vmem [shape: f32[2,16,1024], index: 3, kind: input, shape index: {}]
  %s4 = inlined_call_operand.vmem [shape: f32[4,4], index: 4, kind: input, shape index: {}]
  %s5 = inlined_call_operand.vmem [shape: f32[1,4], index: 5, kind: input, shape index: {}]
  %s6 = inlined_call_operand.vmem [shape: f32[4,4], index: 6, kind: input, shape index: {}]
  %s7 = inlined_call_operand.vmem [shape: f32[1,4], index: 7, kind: input, shape index: {}]
  %s8 = inlined_call_operand.vmem [shape: f32[16,4], index: 8, kind: input, shape index: {}]
  %s9 = inlined_call_operand.vmem [shape: f32[16,1], index: 9, kind: input, shape index: {}]
  %s10 = inlined_call_operand.vmem [shape: f32[2,16,1024], index: 10, kind: output, shape index: {}]
  %s11 = sld [smem:[#allocation0]]
  $region115: #{forward.7} parent=0
    _
  %s13 = ssub.s32 1, %s11
  %s14 = scalar_select 0, %s13, %s11
  $region1: #{forward.7} parent=0
    #allocation2 [shape = 'u8[32768]{0}', space=vmem, size = 0x8000, scoped, tag = 'input window, operand 3']
    #allocation3 [shape = 'u8[32768]{0}', space=vmem, size = 0x8000, scoped, tag = 'output window, operand 0']
    loop: start=0, step=1, limit=10
    $region2: #{forward.7} parent=1 // loop_pre_header
      _
    $region3: #{forward.7} parent=1 // loop_header
      %s16 = sphi 0, %s20
      %p17 = scmp.ge.s32.totalorder %s16, 10
      %s23 = sphi 0, %s35
      %s24 = sphi 0, %s31
      %s25 = sphi 0, %s23
      %s26 = sphi 0, %s24
      %s27 = sphi 0, %s25
      %s28 = sphi 0, %s26
      %s40 = sphi 0, %s42
      %s43 = sphi 0, %s40
      %s44 = sphi 0, %s43
      %s60 = sphi 0, %s44
      %s66 = sphi 0, %s68
      %s69 = sphi 0, %s66
      %s70 = sphi 0, %s69
      %s86 = sphi 0, %s70
      %s92 = sphi 0, %s94
      %s95 = sphi 0, %s92
      %s96 = sphi 0, %s95
      %s112 = sphi 0, %s96
      %s120 = sphi 0, %s122
      %s123 = sphi 0, %s120
      %s124 = sphi 0, %s123
      %s140 = sphi 0, %s124
      %s144 = sphi 0, %s144
      %s146 = sphi 0, %s144
      %s147 = sphi 0, %s146
      %s161 = sphi 0, %s147
      %s165 = sphi 0, %s165
      %s167 = sphi 0, %s165
      %s168 = sphi 0, %s167
      %s182 = sphi 0, %s168
      %s186 = sphi 0, %s186
      %s188 = sphi 0, %s186
      %s189 = sphi 0, %s188
      %s203 = sphi 0, %s189
      %s207 = sphi 0, %s207
      %s209 = sphi 0, %s207
      %s210 = sphi 0, %s209
      %s224 = sphi 0, %s210
      %s228 = sphi 0, %s228
      %s230 = sphi 0, %s228
      %s231 = sphi 0, %s230
      %s245 = sphi 0, %s231
      %s249 = sphi 0, %s249
      %s251 = sphi 0, %s249
      %s252 = sphi 0, %s251
      %s266 = sphi 0, %s252
      %s274 = sphi 0, %s276
      %s277 = sphi 0, %s274
      %s278 = sphi 0, %s277
      %s294 = sphi 0, %s278
    $region4: #{forward.7} parent=1 // loop_header_branch
      %19 = sbr.rel (%p17) target = $region8
    $region5: #{forward.7} parent=1 // loop_body
      %s21 = ssub.s32 %s16, 1
      %s22 = ssub.s32 %s16, 2
      %s29 = sadd.s32 1, %s24
      %p30 = scmp.ge.s32.totalorder %s29, 4
      %s31 = scalar_select %p30, 0, %s29
      %s32 = sadd.s32 1, %s23
      %s33 = scalar_select %p30, %s32, %s23
      %p34 = scmp.ge.s32.totalorder %s33, 2
      %s35 = scalar_select %p34, 0, %s33
      %s36 = ssub.s32 %s23, %s35
      %s37 = ssub.s32 %s24, %s31
      %s38 = sor.u32 %s36, %s37
      %p39 = scmp.eq.s32.totalorder %s38, 0
      %s41 = sadd.s32 %s40, 1
      %s42 = scalar_select %p39, %s40, %s41
      %p45 = pneg %p39
      %p46 = scmp.eq.s32.totalorder %s16, 7
      %p47 = por %p45, %p46
      %p48 = scmp.ne.s32.totalorder %s40, %s43
      %p49 = scmp.eq.s32.totalorder %s16, 0
      %p50 = por %p48, %p49
      %p51 = scmp.ne.s32.totalorder %s40, %s43
      %p52 = scmp.eq.s32.totalorder %s21, 7
      %p53 = por %p51, %p52
      %p54 = scmp.ne.s32.totalorder %s43, %s44
      %p55 = scmp.eq.s32.totalorder %s21, 0
      %p56 = por %p54, %p55
      %p57 = scmp.ne.s32.totalorder %s43, %s44
      %p58 = scmp.eq.s32.totalorder %s22, 7
      %p59 = por %p57, %p58
      %p61 = scmp.ne.s32.totalorder %s44, %s60
      %p62 = scmp.eq.s32.totalorder %s22, 0
      %p63 = por %p61, %p62
      %s64 = ssub.s32 %s23, %s35
      %p65 = scmp.eq.s32.totalorder %s64, 0
      %s67 = sadd.s32 %s66, 1
      %s68 = scalar_select %p65, %s66, %s67
      %p71 = pneg %p65
      %p72 = scmp.eq.s32.totalorder %s16, 7
      %p73 = por %p71, %p72
      %p74 = scmp.ne.s32.totalorder %s66, %s69
      %p75 = scmp.eq.s32.totalorder %s16, 0
      %p76 = por %p74, %p75
      %p77 = scmp.ne.s32.totalorder %s66, %s69
      %p78 = scmp.eq.s32.totalorder %s21, 7
      %p79 = por %p77, %p78
      %p80 = scmp.ne.s32.totalorder %s69, %s70
      %p81 = scmp.eq.s32.totalorder %s21, 0
      %p82 = por %p80, %p81
      %p83 = scmp.ne.s32.totalorder %s69, %s70
      %p84 = scmp.eq.s32.totalorder %s22, 7
      %p85 = por %p83, %p84
      %p87 = scmp.ne.s32.totalorder %s70, %s86
      %p88 = scmp.eq.s32.totalorder %s22, 0
      %p89 = por %p87, %p88
      %s90 = ssub.s32 %s23, %s35
      %p91 = scmp.eq.s32.totalorder %s90, 0
      %s93 = sadd.s32 %s92, 1
      %s94 = scalar_select %p91, %s92, %s93
      %p97 = pneg %p91
      %p98 = scmp.eq.s32.totalorder %s16, 7
      %p99 = por %p97, %p98
      %p100 = scmp.ne.s32.totalorder %s92, %s95
      %p101 = scmp.eq.s32.totalorder %s16, 0
      %p102 = por %p100, %p101
      %p103 = scmp.ne.s32.totalorder %s92, %s95
      %p104 = scmp.eq.s32.totalorder %s21, 7
      %p105 = por %p103, %p104
      %p106 = scmp.ne.s32.totalorder %s95, %s96
      %p107 = scmp.eq.s32.totalorder %s21, 0
      %p108 = por %p106, %p107
      %p109 = scmp.ne.s32.totalorder %s95, %s96
      %p110 = scmp.eq.s32.totalorder %s22, 7
      %p111 = por %p109, %p110
      %p113 = scmp.ne.s32.totalorder %s96, %s112
      %p114 = scmp.eq.s32.totalorder %s22, 0
      %p115 = por %p113, %p114
      %s116 = ssub.s32 %s23, %s35
      %s117 = ssub.s32 %s24, %s31
      %s118 = sor.u32 %s116, %s117
      %p119 = scmp.eq.s32.totalorder %s118, 0
      %s121 = sadd.s32 %s120, 1
      %s122 = scalar_select %p119, %s120, %s121
      %p125 = pneg %p119
      %p126 = scmp.eq.s32.totalorder %s16, 7
      %p127 = por %p125, %p126
      %p128 = scmp.ne.s32.totalorder %s120, %s123
      %p129 = scmp.eq.s32.totalorder %s16, 0
      %p130 = por %p128, %p129
      %p131 = scmp.ne.s32.totalorder %s120, %s123
      %p132 = scmp.eq.s32.totalorder %s21, 7
      %p133 = por %p131, %p132
      %p134 = scmp.ne.s32.totalorder %s123, %s124
      %p135 = scmp.eq.s32.totalorder %s21, 0
      %p136 = por %p134, %p135
      %p137 = scmp.ne.s32.totalorder %s123, %s124
      %p138 = scmp.eq.s32.totalorder %s22, 7
      %p139 = por %p137, %p138
      %p141 = scmp.ne.s32.totalorder %s124, %s140
      %p142 = scmp.eq.s32.totalorder %s22, 0
      %p143 = por %p141, %p142
      %s145 = sadd.s32 %s144, 1
      %p148 = scmp.eq.s32.totalorder %s16, 7
      %p149 = scmp.ne.s32.totalorder %s144, %s146
      %p150 = scmp.eq.s32.totalorder %s16, 0
      %p151 = por %p149, %p150
      %p152 = scmp.ne.s32.totalorder %s144, %s146
      %p153 = scmp.eq.s32.totalorder %s21, 7
      %p154 = por %p152, %p153
      %p155 = scmp.ne.s32.totalorder %s146, %s147
      %p156 = scmp.eq.s32.totalorder %s21, 0
      %p157 = por %p155, %p156
      %p158 = scmp.ne.s32.totalorder %s146, %s147
      %p159 = scmp.eq.s32.totalorder %s22, 7
      %p160 = por %p158, %p159
      %p162 = scmp.ne.s32.totalorder %s147, %s161
      %p163 = scmp.eq.s32.totalorder %s22, 0
      %p164 = por %p162, %p163
      %s166 = sadd.s32 %s165, 1
      %p169 = scmp.eq.s32.totalorder %s16, 7
      %p170 = scmp.ne.s32.totalorder %s165, %s167
      %p171 = scmp.eq.s32.totalorder %s16, 0
      %p172 = por %p170, %p171
      %p173 = scmp.ne.s32.totalorder %s165, %s167
      %p174 = scmp.eq.s32.totalorder %s21, 7
      %p175 = por %p173, %p174
      %p176 = scmp.ne.s32.totalorder %s167, %s168
      %p177 = scmp.eq.s32.totalorder %s21, 0
      %p178 = por %p176, %p177
      %p179 = scmp.ne.s32.totalorder %s167, %s168
      %p180 = scmp.eq.s32.totalorder %s22, 7
      %p181 = por %p179, %p180
      %p183 = scmp.ne.s32.totalorder %s168, %s182
      %p184 = scmp.eq.s32.totalorder %s22, 0
      %p185 = por %p183, %p184
      %s187 = sadd.s32 %s186, 1
      %p190 = scmp.eq.s32.totalorder %s16, 7
      %p191 = scmp.ne.s32.totalorder %s186, %s188
      %p192 = scmp.eq.s32.totalorder %s16, 0
      %p193 = por %p191, %p192
      %p194 = scmp.ne.s32.totalorder %s186, %s188
      %p195 = scmp.eq.s32.totalorder %s21, 7
      %p196 = por %p194, %p195
      %p197 = scmp.ne.s32.totalorder %s188, %s189
      %p198 = scmp.eq.s32.totalorder %s21, 0
      %p199 = por %p197, %p198
      %p200 = scmp.ne.s32.totalorder %s188, %s189
      %p201 = scmp.eq.s32.totalorder %s22, 7
      %p202 = por %p200, %p201
      %p204 = scmp.ne.s32.totalorder %s189, %s203
      %p205 = scmp.eq.s32.totalorder %s22, 0
      %p206 = por %p204, %p205
      %s208 = sadd.s32 %s207, 1
      %p211 = scmp.eq.s32.totalorder %s16, 7
      %p212 = scmp.ne.s32.totalorder %s207, %s209
      %p213 = scmp.eq.s32.totalorder %s16, 0
      %p214 = por %p212, %p213
      %p215 = scmp.ne.s32.totalorder %s207, %s209
      %p216 = scmp.eq.s32.totalorder %s21, 7
      %p217 = por %p215, %p216
      %p218 = scmp.ne.s32.totalorder %s209, %s210
      %p219 = scmp.eq.s32.totalorder %s21, 0
      %p220 = por %p218, %p219
      %p221 = scmp.ne.s32.totalorder %s209, %s210
      %p222 = scmp.eq.s32.totalorder %s22, 7
      %p223 = por %p221, %p222
      %p225 = scmp.ne.s32.totalorder %s210, %s224
      %p226 = scmp.eq.s32.totalorder %s22, 0
      %p227 = por %p225, %p226
      %s229 = sadd.s32 %s228, 1
      %p232 = scmp.eq.s32.totalorder %s16, 7
      %p233 = scmp.ne.s32.totalorder %s228, %s230
      %p234 = scmp.eq.s32.totalorder %s16, 0
      %p235 = por %p233, %p234
      %p236 = scmp.ne.s32.totalorder %s228, %s230
      %p237 = scmp.eq.s32.totalorder %s21, 7
      %p238 = por %p236, %p237
      %p239 = scmp.ne.s32.totalorder %s230, %s231
      %p240 = scmp.eq.s32.totalorder %s21, 0
      %p241 = por %p239, %p240
      %p242 = scmp.ne.s32.totalorder %s230, %s231
      %p243 = scmp.eq.s32.totalorder %s22, 7
      %p244 = por %p242, %p243
      %p246 = scmp.ne.s32.totalorder %s231, %s245
      %p247 = scmp.eq.s32.totalorder %s22, 0
      %p248 = por %p246, %p247
      %s250 = sadd.s32 %s249, 1
      %p253 = scmp.eq.s32.totalorder %s16, 7
      %p254 = scmp.ne.s32.totalorder %s249, %s251
      %p255 = scmp.eq.s32.totalorder %s16, 0
      %p256 = por %p254, %p255
      %p257 = scmp.ne.s32.totalorder %s249, %s251
      %p258 = scmp.eq.s32.totalorder %s21, 7
      %p259 = por %p257, %p258
      %p260 = scmp.ne.s32.totalorder %s251, %s252
      %p261 = scmp.eq.s32.totalorder %s21, 0
      %p262 = por %p260, %p261
      %p263 = scmp.ne.s32.totalorder %s251, %s252
      %p264 = scmp.eq.s32.totalorder %s22, 7
      %p265 = por %p263, %p264
      %p267 = scmp.ne.s32.totalorder %s252, %s266
      %p268 = scmp.eq.s32.totalorder %s22, 0
      %p269 = por %p267, %p268
      %s270 = ssub.s32 %s23, %s35
      %s271 = ssub.s32 %s24, %s31
      %s272 = sor.u32 %s270, %s271
      %p273 = scmp.eq.s32.totalorder %s272, 0
      %s275 = sadd.s32 %s274, 1
      %s276 = scalar_select %p273, %s274, %s275
      %p279 = pneg %p273
      %p280 = scmp.eq.s32.totalorder %s16, 7
      %p281 = por %p279, %p280
      %p282 = scmp.ne.s32.totalorder %s274, %s277
      %p283 = scmp.eq.s32.totalorder %s16, 0
      %p284 = por %p282, %p283
      %p285 = scmp.ne.s32.totalorder %s274, %s277
      %p286 = scmp.eq.s32.totalorder %s21, 7
      %p287 = por %p285, %p286
      %p288 = scmp.ne.s32.totalorder %s277, %s278
      %p289 = scmp.eq.s32.totalorder %s21, 0
      %p290 = por %p288, %p289
      %p291 = scmp.ne.s32.totalorder %s277, %s278
      %p292 = scmp.eq.s32.totalorder %s22, 7
      %p293 = por %p291, %p292
      %p295 = scmp.ne.s32.totalorder %s278, %s294
      %p296 = scmp.eq.s32.totalorder %s22, 0
      %p297 = por %p295, %p296
      %p298 = scmp.le.s32.totalorder 1, %s16
      %p299 = scmp.lt.s32.totalorder %s16, 9
      %p300 = pnand %p298, %p299
      %p301 = pneg %p300
      // Predicated region
      $region9: #{forward.7} parent=5 // pred_check
        _
      $region10: #{forward.7} parent=5 // pred_check_branch
        %303 = sbr.rel (%p300) target = $region12
      $region11: #{forward.7} parent=5 // pred_region
        %s304 = ssub.s32 %s16, 1
        // Predicated region
        $region13: #{forward.7} parent=11 // pred_check
          %p305 = pneg %p157
        $region14: #{forward.7} parent=11 // pred_check_branch
          %307 = sbr.rel (%p305) target = $region16
        $region15: #{forward.7} parent=11 // pred_region
          _
        $region16: #{forward.7} parent=11 // pred_fallthru
          _
        // Predicated region
        $region17: #{forward.7} parent=11 // pred_check
          %p308 = pneg %p178
        $region18: #{forward.7} parent=11 // pred_check_branch
          %310 = sbr.rel (%p308) target = $region20
        $region19: #{forward.7} parent=11 // pred_region
          _
        $region20: #{forward.7} parent=11 // pred_fallthru
          _
        // Predicated region
        $region21: #{forward.7} parent=11 // pred_check
          %p311 = pneg %p199
        $region22: #{forward.7} parent=11 // pred_check_branch
          %313 = sbr.rel (%p311) target = $region24
        $region23: #{forward.7} parent=11 // pred_region
          _
        $region24: #{forward.7} parent=11 // pred_fallthru
          _
        // Predicated region
        $region25: #{forward.7} parent=11 // pred_check
          %p314 = pneg %p220
        $region26: #{forward.7} parent=11 // pred_check_branch
          %316 = sbr.rel (%p314) target = $region28
        $region27: #{forward.7} parent=11 // pred_region
          _
        $region28: #{forward.7} parent=11 // pred_fallthru
          _
        // Predicated region
        $region29: #{forward.7} parent=11 // pred_check
          %p317 = pneg %p241
        $region30: #{forward.7} parent=11 // pred_check_branch
          %319 = sbr.rel (%p317) target = $region32
        $region31: #{forward.7} parent=11 // pred_region
          _
        $region32: #{forward.7} parent=11 // pred_fallthru
          _
        // Predicated region
        $region33: #{forward.7} parent=11 // pred_check
          %p320 = pneg %p262
        $region34: #{forward.7} parent=11 // pred_check_branch
          %322 = sbr.rel (%p320) target = $region36
        $region35: #{forward.7} parent=11 // pred_region
          _
        $region36: #{forward.7} parent=11 // pred_fallthru
          _
      $region12: #{forward.7} parent=5 // pred_fallthru
        _
      %p323 = scmp.lt.s32.totalorder %s16, 8
      // Predicated region
      $region37: #{forward.7} parent=5 // pred_check
        %p324 = pneg %p323
      $region38: #{forward.7} parent=5 // pred_check_branch
        %326 = sbr.rel (%p324) target = $region40
      $region39: #{forward.7} parent=5 // pred_region
        // Predicated region
        $region41: #{forward.7} parent=39 // pred_check
          %p327 = pneg %p50
        $region42: #{forward.7} parent=39 // pred_check_branch
          %329 = sbr.rel (%p327) target = $region44
        $region43: #{forward.7} parent=39 // pred_region
          %s330 = smul.u32 2, %s24
          %p331 = scmp.lt.s32.totalorder %s23, 1
          %s332 = scalar_select %p331, %s23, 1
          %p333 = scmp.lt.s32.totalorder %s330, 7
          %s334 = scalar_select %p333, %s330, 7
          %s335 = smul.addr %s332, 8
          %s336 = sadd.s32 %s334, %s335
          %s337 = smul.addr %s336, 4
          %s338 = scalar_lea.vmem %s0, %s337
          %s339 = smul.u32 2, %s24
        $region44: #{forward.7} parent=39 // pred_fallthru
          _
        // Predicated region
        $region45: #{forward.7} parent=39 // pred_check
          %p340 = pneg %p76
        $region46: #{forward.7} parent=39 // pred_check_branch
          %342 = sbr.rel (%p340) target = $region48
        $region47: #{forward.7} parent=39 // pred_region
          %p343 = scmp.lt.s32.totalorder %s23, 1
          %s344 = scalar_select %p343, %s23, 1
          %s345 = smul.addr %s344, 4
          %s346 = scalar_lea.vmem %s1, %s345
        $region48: #{forward.7} parent=39 // pred_fallthru
          _
        // Predicated region
        $region49: #{forward.7} parent=39 // pred_check
          %p347 = pneg %p102
        $region50: #{forward.7} parent=39 // pred_check_branch
          %349 = sbr.rel (%p347) target = $region52
        $region51: #{forward.7} parent=39 // pred_region
          %p350 = scmp.lt.s32.totalorder %s23, 1
          %s351 = scalar_select %p350, %s23, 1
          %s352 = smul.addr %s351, 4
          %s353 = scalar_lea.vmem %s2, %s352
        $region52: #{forward.7} parent=39 // pred_fallthru
          _
        // Predicated region
        $region53: #{forward.7} parent=39 // pred_check
          %p354 = pneg %p130
        $region54: #{forward.7} parent=39 // pred_check_branch
          %356 = sbr.rel (%p354) target = $region56
        $region55: #{forward.7} parent=39 // pred_region
          %s357 = sand.u32 %s120, 1
          %s358 = sand.u32 %s120, 1
          %s359 = smul.addr %s358, 32
          %s360 = scalar_lea.vmem [#allocation2], %s359
          %s361 = smul.u32 2, %s24
          %s362 = smul.addr %s23, 16
          %s363 = sadd.s32 %s361, %s362
          %s364 = smul.addr %s363, 8
          %s365 = scalar_lea.vmem %s3, %s364
          // Predicated region
          $region57: #{forward.7} parent=55 // pred_check
            _
          $region58: #{forward.7} parent=55 // pred_check_branch
            %367 = sbr.rel (0) target = $region60
          $region59: #{forward.7} parent=55 // pred_region
            // Predicated region
            $region61: #{forward.7} parent=59 // pred_check
              _
            $region62: #{forward.7} parent=59 // pred_check_branch
              %369 = sbr.rel (0) target = $region64
            $region63: #{forward.7} parent=59 // pred_region
              loop: start=0, step=1, limit=1
              $region65: #{forward.7} parent=63 // loop_pre_header
                _
              $region66: #{forward.7} parent=63 // loop_header
                %s371 = sphi 0, %s375
                %p372 = scmp.ge.s32.totalorder %s371, 1
                %s376 = sphi %s365, %s365
                %s377 = sphi %s360, %s360
              $region67: #{forward.7} parent=63 // loop_header_branch
                %374 = sbr.rel (%p372) target = $region71
              $region68: #{forward.7} parent=63 // loop_body
                %v378 = vld [vmem:[%s376] sm:$0xff]
                %379 = vst [vmem:[%s377] sm:$0xff] %v378
                %v380 = vld [vmem:[%s376 + $0x8] sm:$0xff]
                %381 = vst [vmem:[%s377 + $0x8] sm:$0xff] %v380
                %v382 = vld [vmem:[%s376 + $0x40] sm:$0xff]
                %383 = vst [vmem:[%s377 + $0x10] sm:$0xff] %v382
                %v384 = vld [vmem:[%s376 + $0x48] sm:$0xff]
                %385 = vst [vmem:[%s377 + $0x18] sm:$0xff] %v384
              $region69: #{forward.7} parent=63 // loop_footer
                %s375 = sadd.s32 1, %s371
              $region70: #{forward.7} parent=63 // loop_footer_branch
                %370 = sbr.rel target = $region66
              $region71: #{forward.7} parent=63 // loop_exit
                _
            $region64: #{forward.7} parent=59 // pred_fallthru
              _
            // Predicated region
            $region72: #{forward.7} parent=59 // pred_check
              _
            $region73: #{forward.7} parent=59 // pred_check_branch
              %387 = sbr.rel target = $region75
            $region74: #{forward.7} parent=59 // pred_region
              _
            $region75: #{forward.7} parent=59 // pred_fallthru
              _
          $region60: #{forward.7} parent=55 // pred_fallthru
            _
          %388 = vnop
        $region56: #{forward.7} parent=39 // pred_fallthru
          _
      $region40: #{forward.7} parent=5 // pred_fallthru
        _
      %p389 = scmp.le.s32.totalorder 1, %s16
      %p390 = scmp.lt.s32.totalorder %s16, 9
      %p391 = pnand %p389, %p390
      %p392 = pneg %p391
      // Predicated region
      $region76: #{forward.7} parent=5 // pred_check
        _
      $region77: #{forward.7} parent=5 // pred_check_branch
        %394 = sbr.rel (%p391) target = $region79
      $region78: #{forward.7} parent=5 // pred_region
        %s395 = ssub.s32 %s16, 1
        %s396 = sand.u32 %s123, 1
        %s397 = sand.u32 %s123, 1
        %s398 = smul.addr %s397, 32
        %s399 = scalar_lea.vmem [#allocation2], %s398
        // Predicated region
        $region80: #{forward.7} parent=78 // pred_check
          %p400 = pneg %p136
        $region81: #{forward.7} parent=78 // pred_check_branch
          %402 = sbr.rel (%p400) target = $region83
        $region82: #{forward.7} parent=78 // pred_region
          _
        $region83: #{forward.7} parent=78 // pred_fallthru
          _
        %s403 = smul.u32 2, %s26
        %p404 = scmp.lt.s32.totalorder %s25, 1
        %s405 = scalar_select %p404, %s25, 1
        %p406 = scmp.lt.s32.totalorder %s403, 7
        %s407 = scalar_select %p406, %s403, 7
        %s408 = smul.addr %s405, 8
        %s409 = sadd.s32 %s407, %s408
        %s410 = smul.addr %s409, 4
        %s411 = scalar_lea.vmem %s0, %s410
        %p412 = pneg %p56
        %p413 = pneg %p53
        %p414 = scmp.lt.s32.totalorder %s25, 1
        %s415 = scalar_select %p414, %s25, 1
        %s416 = smul.addr %s415, 4
        %s417 = scalar_lea.vmem %s1, %s416
        %p418 = pneg %p82
        %p419 = pneg %p79
        %p420 = scmp.lt.s32.totalorder %s25, 1
        %s421 = scalar_select %p420, %s25, 1
        %s422 = smul.addr %s421, 4
        %s423 = scalar_lea.vmem %s2, %s422
        %p424 = pneg %p108
        %p425 = pneg %p105
        %s426 = sand.u32 %s123, 1
        %s427 = sand.u32 %s123, 1
        %s428 = smul.addr %s427, 32
        %s429 = scalar_lea.vmem [#allocation2], %s428
        %p430 = pneg %p136
        %p431 = pneg %p133
        %p432 = pneg %p157
        %p433 = pneg %p154
        %p434 = pneg %p178
        %p435 = pneg %p175
        %p436 = pneg %p199
        %p437 = pneg %p196
        %p438 = pneg %p220
        %p439 = pneg %p217
        %p440 = pneg %p241
        %p441 = pneg %p238
        %p442 = pneg %p262
        %p443 = pneg %p259
        %p444 = pneg %p290
        %p445 = pneg %p287
        %s446 = sand.u32 %s277, 1
        %s447 = sand.u32 %s277, 1
        %s448 = smul.addr %s447, 32
        %s449 = scalar_lea.vmem [#allocation3], %s448
        %s450 = smul.u32 2, %s26
        %p451 = scmp.lt.s32.totalorder %s25, 1
        %s452 = scalar_select %p451, %s25, 1
        %p453 = scmp.lt.s32.totalorder %s450, 7
        %s454 = scalar_select %p453, %s450, 7
        %s455 = smul.addr %s452, 8
        %s456 = sadd.s32 %s454, %s455
        %s457 = smul.addr %s456, 4
        %s458 = scalar_lea.vmem %s0, %s457
        %s459 = smul.u32 2, %s26
        %p460 = scmp.lt.s32.totalorder %s25, 1
        %s461 = scalar_select %p460, %s25, 1
        %s462 = smul.addr %s461, 4
        %s463 = scalar_lea.vmem %s1, %s462
        %p464 = scmp.lt.s32.totalorder %s25, 1
        %s465 = scalar_select %p464, %s25, 1
        %s466 = smul.addr %s465, 4
        %s467 = scalar_lea.vmem %s2, %s466
        %s468 = smul.u32 2, %s26
        %s469 = smul.u32 2, %s26
        %v471 = vld [vmem:[%s458] sm:$0xff]
        %v473 = vcombine.high %v471, %v471
        %v475 = vpack.c.bf16 %v471, %v471
        %v476 = vpack.c.bf16 %v473, %v473
        %v477 = vld [vmem:[%s4] sm:$0xf]
        %v478 = vpack.c.bf16 %v477, %v477
        %v479 = vld [vmem:[%s5] sm:$0x1]
        %v481 = vlaneseq
        %v482 = vshrl.u32 %v481, 7
        %v483 = vsub.s32 0, %v482
        %v484 = vrot.slane %v479, %v483
        %486 = vxpose.xlu0.c.b16.start [1/8] %v475, 128
        %487 = vxpose.xlu0.c.b16.cont [2/8] 0, 128
        %488 = vxpose.xlu0.c.b16.cont [3/8] 0, 128
        %489 = vxpose.xlu0.c.b16.cont [4/8] 0, 128
        %490 = vxpose.xlu0.c.b16.cont [5/8] 0, 128
        %491 = vxpose.xlu0.c.b16.cont [6/8] 0, 128
        %492 = vxpose.xlu0.c.b16.cont [7/8] 0, 128
        %493 = vxpose.xlu0.c.b16.end [8/8] 0, 128
        %v494 = vpop.trf.xlu0
        %v495 = vpop.trf.xlu0
        %v496 = vpop.trf.xlu0
        %v497 = vpop.trf.xlu0
        %v498 = vpop.trf.xlu0
        %v499 = vpop.trf.xlu0
        %v500 = vpop.trf.xlu0
        %v501 = vpop.trf.xlu0
        %502 = vxpose.xlu0.c.b16.start [1/8] %v476, 128
        %503 = vxpose.xlu0.c.b16.cont [2/8] 0, 128
        %504 = vxpose.xlu0.c.b16.cont [3/8] 0, 128
        %505 = vxpose.xlu0.c.b16.cont [4/8] 0, 128
        %506 = vxpose.xlu0.c.b16.cont [5/8] 0, 128
        %507 = vxpose.xlu0.c.b16.cont [6/8] 0, 128
        %508 = vxpose.xlu0.c.b16.cont [7/8] 0, 128
        %509 = vxpose.xlu0.c.b16.end [8/8] 0, 128
        %v510 = vpop.trf.xlu0
        %v511 = vpop.trf.xlu0
        %v512 = vpop.trf.xlu0
        %v513 = vpop.trf.xlu0
        %v514 = vpop.trf.xlu0
        %v515 = vpop.trf.xlu0
        %v516 = vpop.trf.xlu0
        %v517 = vpop.trf.xlu0
        %vm518 = vcmask 31744
        %v520 = vsel %vm518, %v494, 0
        %v523 = vsel %vm518, %v495, 0
        %v526 = vsel %vm518, %v496, 0
        %v529 = vsel %vm518, %v497, 0
        %v532 = vsel %vm518, %v498, 0
        %v535 = vsel %vm518, %v499, 0
        %v538 = vsel %vm518, %v500, 0
        %v541 = vsel %vm518, %v501, 0
        %v544 = vsel %vm518, %v510, 0
        %v547 = vsel %vm518, %v511, 0
        %v550 = vsel %vm518, %v512, 0
        %v553 = vsel %vm518, %v513, 0
        %v556 = vsel %vm518, %v514, 0
        %v559 = vsel %vm518, %v515, 0
        %v562 = vsel %vm518, %v516, 0
        %v565 = vsel %vm518, %v517, 0
        %v568 = vsel %vm518, %v478, 0
        %570 = vmatprep.subr.bf16.mxu0 0
        %571 = vmatpush1.bf16.xpose.msra.mxu0 %v568
        %572 = vmatprep.subr.bf16.mxu0 0
        %573 = vmatpush1.bf16.xpose.msra.mxu0 0
        %574 = vmatprep.subr.bf16.mxu0 0
        %575 = vmatpush1.bf16.xpose.msra.mxu0 0
        %576 = vmatprep.subr.bf16.mxu0 0
        %577 = vmatpush1.bf16.xpose.msra.mxu0 0
        %578 = vmatprep.subr.bf16.mxu0 0
        %579 = vmatpush1.bf16.xpose.msra.mxu0 0
        %580 = vmatprep.subr.bf16.mxu0 0
        %581 = vmatpush1.bf16.xpose.msra.mxu0 0
        %582 = vmatprep.subr.bf16.mxu0 0
        %583 = vmatpush1.bf16.xpose.msra.mxu0 0
        %584 = vmatprep.subr.bf16.mxu0 0
        %585 = vmatpush1.bf16.xpose.msra.mxu0 0
        %586 = vmatprep.subr.bf16.mxu0 0
        %587 = vmatpush1.bf16.xpose.msra.mxu0 0
        %588 = vmatprep.subr.bf16.mxu0 0
        %589 = vmatpush1.bf16.xpose.msra.mxu0 0
        %590 = vmatprep.subr.bf16.mxu0 0
        %591 = vmatpush1.bf16.xpose.msra.mxu0 0
        %592 = vmatprep.subr.bf16.mxu0 0
        %593 = vmatpush1.bf16.xpose.msra.mxu0 0
        %594 = vmatprep.subr.bf16.mxu0 0
        %595 = vmatpush1.bf16.xpose.msra.mxu0 0
        %596 = vmatprep.subr.bf16.mxu0 0
        %597 = vmatpush1.bf16.xpose.msra.mxu0 0
        %598 = vmatprep.subr.bf16.mxu0 0
        %599 = vmatpush1.bf16.xpose.msra.mxu0 0
        %600 = vmatprep.subr.bf16.mxu0 0
        %601 = vmatpush1.bf16.xpose.msra.mxu0 0
        %602 = vmatprep.mubr.bf16.mxu0 0
        %603 = vmatmul.mubr.bf16.gmra.mrb[0].mxu0 %v520
        %v604 = vpop.f32.mrb[0].mxu0
        %v605 = vadd.f32 %v484, %v604
        %v606 = vpop.f32.mrb[0].mxu0
        %v607 = vpop.f32.mrb[0].mxu0
        %v608 = vadd.f32 %v484, %v607
        %v609 = vpop.f32.mrb[0].mxu0
        %610 = vmatprep.mubr.bf16.mxu0 0
        %611 = vmatmul.mubr.bf16.gmra.mrb[0].mxu0 %v523
        %v612 = vpop.f32.mrb[0].mxu0
        %v613 = vadd.f32 %v484, %v612
        %v614 = vpop.f32.mrb[0].mxu0
        %v615 = vpop.f32.mrb[0].mxu0
        %v616 = vadd.f32 %v484, %v615
        %v617 = vpop.f32.mrb[0].mxu0
        %618 = vmatprep.mubr.bf16.mxu0 0
        %619 = vmatmul.mubr.bf16.gmra.mrb[0].mxu0 %v526
        %v620 = vpop.f32.mrb[0].mxu0
        %v621 = vadd.f32 %v484, %v620
        %v622 = vpop.f32.mrb[0].mxu0
        %v623 = vpop.f32.mrb[0].mxu0
        %v624 = vadd.f32 %v484, %v623
        %v625 = vpop.f32.mrb[0].mxu0
        %626 = vmatprep.mubr.bf16.mxu0 0
        %627 = vmatmul.mubr.bf16.gmra.mrb[0].mxu0 %v529
        %v628 = vpop.f32.mrb[0].mxu0
        %v629 = vadd.f32 %v484, %v628
        %v630 = vpop.f32.mrb[0].mxu0
        %v631 = vpop.f32.mrb[0].mxu0
        %v632 = vadd.f32 %v484, %v631
        %v633 = vpop.f32.mrb[0].mxu0
        %634 = vmatprep.mubr.bf16.mxu0 0
        %635 = vmatmul.mubr.bf16.gmra.mrb[0].mxu0 %v532
        %v636 = vpop.f32.mrb[0].mxu0
        %v637 = vadd.f32 %v484, %v636
        %v638 = vpop.f32.mrb[0].mxu0
        %v639 = vpop.f32.mrb[0].mxu0
        %v640 = vadd.f32 %v484, %v639
        %v641 = vpop.f32.mrb[0].mxu0
        %642 = vmatprep.mubr.bf16.mxu0 0
        %643 = vmatmul.mubr.bf16.gmra.mrb[0].mxu0 %v535
        %v644 = vpop.f32.mrb[0].mxu0
        %v645 = vadd.f32 %v484, %v644
        %v646 = vpop.f32.mrb[0].mxu0
        %v647 = vpop.f32.mrb[0].mxu0
        %v648 = vadd.f32 %v484, %v647
        %v649 = vpop.f32.mrb[0].mxu0
        %650 = vmatprep.mubr.bf16.mxu0 0
        %651 = vmatmul.mubr.bf16.gmra.mrb[0].mxu0 %v538
        %v652 = vpop.f32.mrb[0].mxu0
        %v653 = vadd.f32 %v484, %v652
        %v654 = vpop.f32.mrb[0].mxu0
        %v655 = vpop.f32.mrb[0].mxu0
        %v656 = vadd.f32 %v484, %v655
        %v657 = vpop.f32.mrb[0].mxu0
        %658 = vmatprep.mubr.bf16.mxu0 0
        %659 = vmatmul.mubr.bf16.gmra.mrb[0].mxu0 %v541
        %v660 = vpop.f32.mrb[0].mxu0
        %v661 = vadd.f32 %v484, %v660
        %v662 = vpop.f32.mrb[0].mxu0
        %v663 = vpop.f32.mrb[0].mxu0
        %v664 = vadd.f32 %v484, %v663
        %v665 = vpop.f32.mrb[0].mxu0
        %666 = vmatprep.mubr.bf16.mxu0 0
        %667 = vmatmul.mubr.bf16.gmra.mrb[0].mxu0 %v544
        %v668 = vpop.f32.mrb[0].mxu0
        %v669 = vadd.f32 %v484, %v668
        %v670 = vpop.f32.mrb[0].mxu0
        %v671 = vpop.f32.mrb[0].mxu0
        %v672 = vadd.f32 %v484, %v671
        %v673 = vpop.f32.mrb[0].mxu0
        %674 = vmatprep.mubr.bf16.mxu0 0
        %675 = vmatmul.mubr.bf16.gmra.mrb[0].mxu0 %v547
        %v676 = vpop.f32.mrb[0].mxu0
        %v677 = vadd.f32 %v484, %v676
        %v678 = vpop.f32.mrb[0].mxu0
        %v679 = vpop.f32.mrb[0].mxu0
        %v680 = vadd.f32 %v484, %v679
        %v681 = vpop.f32.mrb[0].mxu0
        %682 = vmatprep.mubr.bf16.mxu0 0
        %683 = vmatmul.mubr.bf16.gmra.mrb[0].mxu0 %v550
        %v684 = vpop.f32.mrb[0].mxu0
        %v685 = vadd.f32 %v484, %v684
        %v686 = vpop.f32.mrb[0].mxu0
        %v687 = vpop.f32.mrb[0].mxu0
        %v688 = vadd.f32 %v484, %v687
        %v689 = vpop.f32.mrb[0].mxu0
        %690 = vmatprep.mubr.bf16.mxu0 0
        %691 = vmatmul.mubr.bf16.gmra.mrb[0].mxu0 %v553
        %v692 = vpop.f32.mrb[0].mxu0
        %v693 = vadd.f32 %v484, %v692
        %v694 = vpop.f32.mrb[0].mxu0
        %v695 = vpop.f32.mrb[0].mxu0
        %v696 = vadd.f32 %v484, %v695
        %v697 = vpop.f32.mrb[0].mxu0
        %698 = vmatprep.mubr.bf16.mxu0 0
        %699 = vmatmul.mubr.bf16.gmra.mrb[0].mxu0 %v556
        %v700 = vpop.f32.mrb[0].mxu0
        %v701 = vadd.f32 %v484, %v700
        %v702 = vpop.f32.mrb[0].mxu0
        %v703 = vpop.f32.mrb[0].mxu0
        %v704 = vadd.f32 %v484, %v703
        %v705 = vpop.f32.mrb[0].mxu0
        %706 = vmatprep.mubr.bf16.mxu0 0
        %707 = vmatmul.mubr.bf16.gmra.mrb[0].mxu0 %v559
        %v708 = vpop.f32.mrb[0].mxu0
        %v709 = vadd.f32 %v484, %v708
        %v710 = vpop.f32.mrb[0].mxu0
        %v711 = vpop.f32.mrb[0].mxu0
        %v712 = vadd.f32 %v484, %v711
        %v713 = vpop.f32.mrb[0].mxu0
        %714 = vmatprep.mubr.bf16.mxu0 0
        %715 = vmatmul.mubr.bf16.gmra.mrb[0].mxu0 %v562
        %v716 = vpop.f32.mrb[0].mxu0
        %v717 = vadd.f32 %v484, %v716
        %v718 = vpop.f32.mrb[0].mxu0
        %v719 = vpop.f32.mrb[0].mxu0
        %v720 = vadd.f32 %v484, %v719
        %v721 = vpop.f32.mrb[0].mxu0
        %722 = vmatprep.mubr.bf16.mxu0 0
        %723 = vmatmul.mubr.bf16.gmra.mrb[0].mxu0 %v565
        %v724 = vpop.f32.mrb[0].mxu0
        %v725 = vadd.f32 %v484, %v724
        %v726 = vpop.f32.mrb[0].mxu0
        %v727 = vpop.f32.mrb[0].mxu0
        %v728 = vadd.f32 %v484, %v727
        %v729 = vpop.f32.mrb[0].mxu0
        %730 = vdwg.mxu0
        %v731 = vmul.f32 %v605, 0.5
        %v732 = vmul.f32 %v608, 0.5
        %v733 = vmul.f32 %v613, 0.5
        %v734 = vmul.f32 %v616, 0.5
        %v735 = vmul.f32 %v621, 0.5
        %v736 = vmul.f32 %v624, 0.5
        %v737 = vmul.f32 %v629, 0.5
        %v738 = vmul.f32 %v632, 0.5
        %v739 = vmul.f32 %v637, 0.5
        %v740 = vmul.f32 %v640, 0.5
        %v741 = vmul.f32 %v645, 0.5
        %v742 = vmul.f32 %v648, 0.5
        %v743 = vmul.f32 %v653, 0.5
        %v744 = vmul.f32 %v656, 0.5
        %v745 = vmul.f32 %v661, 0.5
        %v746 = vmul.f32 %v664, 0.5
        %v747 = vmul.f32 %v669, 0.5
        %v748 = vmul.f32 %v672, 0.5
        %v749 = vmul.f32 %v677, 0.5
        %v750 = vmul.f32 %v680, 0.5
        %v751 = vmul.f32 %v685, 0.5
        %v752 = vmul.f32 %v688, 0.5
        %v753 = vmul.f32 %v693, 0.5
        %v754 = vmul.f32 %v696, 0.5
        %v755 = vmul.f32 %v701, 0.5
        %v756 = vmul.f32 %v704, 0.5
        %v757 = vmul.f32 %v709, 0.5
        %v758 = vmul.f32 %v712, 0.5
        %v759 = vmul.f32 %v717, 0.5
        %v760 = vmul.f32 %v720, 0.5
        %v761 = vmul.f32 %v725, 0.5
        %v762 = vmul.f32 %v728, 0.5
        %v763 = vld [vmem:[%s463] sm:$0xf]
        %v764 = vpack.c.bf16 %v763, %v763
        %v765 = vld [vmem:[%s467] sm:$0xf]
        %v766 = vpack.c.bf16 %v765, %v765
        %v767 = vpack.c.bf16 %v732, %v731
        %v768 = vpack.c.bf16 %v734, %v733
        %v769 = vpack.c.bf16 %v736, %v735
        %v770 = vpack.c.bf16 %v738, %v737
        %v771 = vpack.c.bf16 %v740, %v739
        %v772 = vpack.c.bf16 %v742, %v741
        %v773 = vpack.c.bf16 %v744, %v743
        %v774 = vpack.c.bf16 %v746, %v745
        %v775 = vpack.c.bf16 %v748, %v747
        %v776 = vpack.c.bf16 %v750, %v749
        %v777 = vpack.c.bf16 %v752, %v751
        %v778 = vpack.c.bf16 %v754, %v753
        %v779 = vpack.c.bf16 %v756, %v755
        %v780 = vpack.c.bf16 %v758, %v757
        %v781 = vpack.c.bf16 %v760, %v759
        %v782 = vpack.c.bf16 %v762, %v761
        %v784 = vsel %vm518, %v767, 0
        %v787 = vsel %vm518, %v768, 0
        %v790 = vsel %vm518, %v769, 0
        %v793 = vsel %vm518, %v770, 0
        %v796 = vsel %vm518, %v771, 0
        %v799 = vsel %vm518, %v772, 0
        %v802 = vsel %vm518, %v773, 0
        %v805 = vsel %vm518, %v774, 0
        %v808 = vsel %vm518, %v775, 0
        %v811 = vsel %vm518, %v776, 0
        %v814 = vsel %vm518, %v777, 0
        %v817 = vsel %vm518, %v778, 0
        %v820 = vsel %vm518, %v779, 0
        %v823 = vsel %vm518, %v780, 0
        %v826 = vsel %vm518, %v781, 0
        %v829 = vsel %vm518, %v782, 0
        %v832 = vsel %vm518, %v764, 0
        %834 = vmatprep.subr.bf16.mxu0 0
        %835 = vmatpush1.bf16.xpose.msra.mxu0 %v832
        %836 = vmatprep.subr.bf16.mxu0 0
        %837 = vmatpush1.bf16.xpose.msra.mxu0 0
        %838 = vmatprep.subr.bf16.mxu0 0
        %839 = vmatpush1.bf16.xpose.msra.mxu0 0
        %840 = vmatprep.subr.bf16.mxu0 0
        %841 = vmatpush1.bf16.xpose.msra.mxu0 0
        %842 = vmatprep.subr.bf16.mxu0 0
        %843 = vmatpush1.bf16.xpose.msra.mxu0 0
        %844 = vmatprep.subr.bf16.mxu0 0
        %845 = vmatpush1.bf16.xpose.msra.mxu0 0
        %846 = vmatprep.subr.bf16.mxu0 0
        %847 = vmatpush1.bf16.xpose.msra.mxu0 0
        %848 = vmatprep.subr.bf16.mxu0 0
        %849 = vmatpush1.bf16.xpose.msra.mxu0 0
        %850 = vmatprep.subr.bf16.mxu0 0
        %851 = vmatpush1.bf16.xpose.msra.mxu0 0
        %852 = vmatprep.subr.bf16.mxu0 0
        %853 = vmatpush1.bf16.xpose.msra.mxu0 0
        %854 = vmatprep.subr.bf16.mxu0 0
        %855 = vmatpush1.bf16.xpose.msra.mxu0 0
        %856 = vmatprep.subr.bf16.mxu0 0
        %857 = vmatpush1.bf16.xpose.msra.mxu0 0
        %858 = vmatprep.subr.bf16.mxu0 0
        %859 = vmatpush1.bf16.xpose.msra.mxu0 0
        %860 = vmatprep.subr.bf16.mxu0 0
        %861 = vmatpush1.bf16.xpose.msra.mxu0 0
        %862 = vmatprep.subr.bf16.mxu0 0
        %863 = vmatpush1.bf16.xpose.msra.mxu0 0
        %864 = vmatprep.subr.bf16.mxu0 0
        %865 = vmatpush1.bf16.xpose.msra.mxu0 0
        %866 = vmatprep.mubr.bf16.mxu0 0
        %867 = vmatmul.mubr.bf16.gmra.mrb[0].mxu0 %v784
        %v868 = vpop.f32.mrb[0].mxu0
        %v869 = vadd.f32 0.0, %v868
        %v870 = vpop.f32.mrb[0].mxu0
        %v871 = vpop.f32.mrb[0].mxu0
        %v872 = vadd.f32 0.0, %v871
        %v873 = vpop.f32.mrb[0].mxu0
        %874 = vmatprep.mubr.bf16.mxu0 0
        %875 = vmatmul.mubr.bf16.gmra.mrb[0].mxu0 %v787
        %v876 = vpop.f32.mrb[0].mxu0
        %v877 = vadd.f32 0.0, %v876
        %v878 = vpop.f32.mrb[0].mxu0
        %v879 = vpop.f32.mrb[0].mxu0
        %v880 = vadd.f32 0.0, %v879
        %v881 = vpop.f32.mrb[0].mxu0
        %882 = vmatprep.mubr.bf16.mxu0 0
        %883 = vmatmul.mubr.bf16.gmra.mrb[0].mxu0 %v790
        %v884 = vpop.f32.mrb[0].mxu0
        %v885 = vadd.f32 0.0, %v884
        %v886 = vpop.f32.mrb[0].mxu0
        %v887 = vpop.f32.mrb[0].mxu0
        %v888 = vadd.f32 0.0, %v887
        %v889 = vpop.f32.mrb[0].mxu0
        %890 = vmatprep.mubr.bf16.mxu0 0
        %891 = vmatmul.mubr.bf16.gmra.mrb[0].mxu0 %v793
        %v892 = vpop.f32.mrb[0].mxu0
        %v893 = vadd.f32 0.0, %v892
        %v894 = vpop.f32.mrb[0].mxu0
        %v895 = vpop.f32.mrb[0].mxu0
        %v896 = vadd.f32 0.0, %v895
        %v897 = vpop.f32.mrb[0].mxu0
        %898 = vmatprep.mubr.bf16.mxu0 0
        %899 = vmatmul.mubr.bf16.gmra.mrb[0].mxu0 %v796
        %v900 = vpop.f32.mrb[0].mxu0
        %v901 = vadd.f32 0.0, %v900
        %v902 = vpop.f32.mrb[0].mxu0
        %v903 = vpop.f32.mrb[0].mxu0
        %v904 = vadd.f32 0.0, %v903
        %v905 = vpop.f32.mrb[0].mxu0
        %906 = vmatprep.mubr.bf16.mxu0 0
        %907 = vmatmul.mubr.bf16.gmra.mrb[0].mxu0 %v799
        %v908 = vpop.f32.mrb[0].mxu0
        %v909 = vadd.f32 0.0, %v908
        %v910 = vpop.f32.mrb[0].mxu0
        %v911 = vpop.f32.mrb[0].mxu0
        %v912 = vadd.f32 0.0, %v911
        %v913 = vpop.f32.mrb[0].mxu0
        %914 = vmatprep.mubr.bf16.mxu0 0
        %915 = vmatmul.mubr.bf16.gmra.mrb[0].mxu0 %v802
        %v916 = vpop.f32.mrb[0].mxu0
        %v917 = vadd.f32 0.0, %v916
        %v918 = vpop.f32.mrb[0].mxu0
        %v919 = vpop.f32.mrb[0].mxu0
        %v920 = vadd.f32 0.0, %v919
        %v921 = vpop.f32.mrb[0].mxu0
        %922 = vmatprep.mubr.bf16.mxu0 0
        %923 = vmatmul.mubr.bf16.gmra.mrb[0].mxu0 %v805
        %v924 = vpop.f32.mrb[0].mxu0
        %v925 = vadd.f32 0.0, %v924
        %v926 = vpop.f32.mrb[0].mxu0
        %v927 = vpop.f32.mrb[0].mxu0
        %v928 = vadd.f32 0.0, %v927
        %v929 = vpop.f32.mrb[0].mxu0
        %930 = vmatprep.mubr.bf16.mxu0 0
        %931 = vmatmul.mubr.bf16.gmra.mrb[0].mxu0 %v808
        %v932 = vpop.f32.mrb[0].mxu0
        %v933 = vadd.f32 0.0, %v932
        %v934 = vpop.f32.mrb[0].mxu0
        %v935 = vpop.f32.mrb[0].mxu0
        %v936 = vadd.f32 0.0, %v935
        %v937 = vpop.f32.mrb[0].mxu0
        %938 = vmatprep.mubr.bf16.mxu0 0
        %939 = vmatmul.mubr.bf16.gmra.mrb[0].mxu0 %v811
        %v940 = vpop.f32.mrb[0].mxu0
        %v941 = vadd.f32 0.0, %v940
        %v942 = vpop.f32.mrb[0].mxu0
        %v943 = vpop.f32.mrb[0].mxu0
        %v944 = vadd.f32 0.0, %v943
        %v945 = vpop.f32.mrb[0].mxu0
        %946 = vmatprep.mubr.bf16.mxu0 0
        %947 = vmatmul.mubr.bf16.gmra.mrb[0].mxu0 %v814
        %v948 = vpop.f32.mrb[0].mxu0
        %v949 = vadd.f32 0.0, %v948
        %v950 = vpop.f32.mrb[0].mxu0
        %v951 = vpop.f32.mrb[0].mxu0
        %v952 = vadd.f32 0.0, %v951
        %v953 = vpop.f32.mrb[0].mxu0
        %954 = vmatprep.mubr.bf16.mxu0 0
        %955 = vmatmul.mubr.bf16.gmra.mrb[0].mxu0 %v817
        %v956 = vpop.f32.mrb[0].mxu0
        %v957 = vadd.f32 0.0, %v956
        %v958 = vpop.f32.mrb[0].mxu0
        %v959 = vpop.f32.mrb[0].mxu0
        %v960 = vadd.f32 0.0, %v959
        %v961 = vpop.f32.mrb[0].mxu0
        %962 = vmatprep.mubr.bf16.mxu0 0
        %963 = vmatmul.mubr.bf16.gmra.mrb[0].mxu0 %v820
        %v964 = vpop.f32.mrb[0].mxu0
        %v965 = vadd.f32 0.0, %v964
        %v966 = vpop.f32.mrb[0].mxu0
        %v967 = vpop.f32.mrb[0].mxu0
        %v968 = vadd.f32 0.0, %v967
        %v969 = vpop.f32.mrb[0].mxu0
        %970 = vmatprep.mubr.bf16.mxu0 0
        %971 = vmatmul.mubr.bf16.gmra.mrb[0].mxu0 %v823
        %v972 = vpop.f32.mrb[0].mxu0
        %v973 = vadd.f32 0.0, %v972
        %v974 = vpop.f32.mrb[0].mxu0
        %v975 = vpop.f32.mrb[0].mxu0
        %v976 = vadd.f32 0.0, %v975
        %v977 = vpop.f32.mrb[0].mxu0
        %978 = vmatprep.mubr.bf16.mxu0 0
        %979 = vmatmul.mubr.bf16.gmra.mrb[0].mxu0 %v826
        %v980 = vpop.f32.mrb[0].mxu0
        %v981 = vadd.f32 0.0, %v980
        %v982 = vpop.f32.mrb[0].mxu0
        %v983 = vpop.f32.mrb[0].mxu0
        %v984 = vadd.f32 0.0, %v983
        %v985 = vpop.f32.mrb[0].mxu0
        %986 = vmatprep.mubr.bf16.mxu0 0
        %987 = vmatmul.mubr.bf16.gmra.mrb[0].mxu0 %v829
        %v988 = vpop.f32.mrb[0].mxu0
        %v989 = vadd.f32 0.0, %v988
        %v990 = vpop.f32.mrb[0].mxu0
        %v991 = vpop.f32.mrb[0].mxu0
        %v992 = vadd.f32 0.0, %v991
        %v993 = vpop.f32.mrb[0].mxu0
        %994 = vdwg.mxu0
        %v995 = vsel %vm518, %v869, -inf
        %996 = vmax.xlane.f32.xlu0 %v995
        %v997 = vpop.xlane.xlu0 %996
        %v998 = vsel %vm518, %v872, -inf
        %999 = vmax.xlane.f32.xlu0 %v998
        %v1000 = vpop.xlane.xlu0 %999
        %v1001 = vsel %vm518, %v877, -inf
        %1002 = vmax.xlane.f32.xlu0 %v1001
        %v1003 = vpop.xlane.xlu0 %1002
        %v1004 = vsel %vm518, %v880, -inf
        %1005 = vmax.xlane.f32.xlu0 %v1004
        %v1006 = vpop.xlane.xlu0 %1005
        %v1007 = vsel %vm518, %v885, -inf
        %1008 = vmax.xlane.f32.xlu0 %v1007
        %v1009 = vpop.xlane.xlu0 %1008
        %v1010 = vsel %vm518, %v888, -inf
        %1011 = vmax.xlane.f32.xlu0 %v1010
        %v1012 = vpop.xlane.xlu0 %1011
        %v1013 = vsel %vm518, %v893, -inf
        %1014 = vmax.xlane.f32.xlu0 %v1013
        %v1015 = vpop.xlane.xlu0 %1014
        %v1016 = vsel %vm518, %v896, -inf
        %1017 = vmax.xlane.f32.xlu0 %v1016
        %v1018 = vpop.xlane.xlu0 %1017
        %v1019 = vsel %vm518, %v901, -inf
        %1020 = vmax.xlane.f32.xlu0 %v1019
        %v1021 = vpop.xlane.xlu0 %1020
        %v1022 = vsel %vm518, %v904, -inf
        %1023 = vmax.xlane.f32.xlu0 %v1022
        %v1024 = vpop.xlane.xlu0 %1023
        %v1025 = vsel %vm518, %v909, -inf
        %1026 = vmax.xlane.f32.xlu0 %v1025
        %v1027 = vpop.xlane.xlu0 %1026
        %v1028 = vsel %vm518, %v912, -inf
        %1029 = vmax.xlane.f32.xlu0 %v1028
        %v1030 = vpop.xlane.xlu0 %1029
        %v1031 = vsel %vm518, %v917, -inf
        %1032 = vmax.xlane.f32.xlu0 %v1031
        %v1033 = vpop.xlane.xlu0 %1032
        %v1034 = vsel %vm518, %v920, -inf
        %1035 = vmax.xlane.f32.xlu0 %v1034
        %v1036 = vpop.xlane.xlu0 %1035
        %v1037 = vsel %vm518, %v925, -inf
        %1038 = vmax.xlane.f32.xlu0 %v1037
        %v1039 = vpop.xlane.xlu0 %1038
        %v1040 = vsel %vm518, %v928, -inf
        %1041 = vmax.xlane.f32.xlu0 %v1040
        %v1042 = vpop.xlane.xlu0 %1041
        %v1043 = vsel %vm518, %v933, -inf
        %1044 = vmax.xlane.f32.xlu0 %v1043
        %v1045 = vpop.xlane.xlu0 %1044
        %v1046 = vsel %vm518, %v936, -inf
        %1047 = vmax.xlane.f32.xlu0 %v1046
        %v1048 = vpop.xlane.xlu0 %1047
        %v1049 = vsel %vm518, %v941, -inf
        %1050 = vmax.xlane.f32.xlu0 %v1049
        %v1051 = vpop.xlane.xlu0 %1050
        %v1052 = vsel %vm518, %v944, -inf
        %1053 = vmax.xlane.f32.xlu0 %v1052
        %v1054 = vpop.xlane.xlu0 %1053
        %v1055 = vsel %vm518, %v949, -inf
        %1056 = vmax.xlane.f32.xlu0 %v1055
        %v1057 = vpop.xlane.xlu0 %1056
        %v1058 = vsel %vm518, %v952, -inf
        %1059 = vmax.xlane.f32.xlu0 %v1058
        %v1060 = vpop.xlane.xlu0 %1059
        %v1061 = vsel %vm518, %v957, -inf
        %1062 = vmax.xlane.f32.xlu0 %v1061
        %v1063 = vpop.xlane.xlu0 %1062
        %v1064 = vsel %vm518, %v960, -inf
        %1065 = vmax.xlane.f32.xlu0 %v1064
        %v1066 = vpop.xlane.xlu0 %1065
        %v1067 = vsel %vm518, %v965, -inf
        %1068 = vmax.xlane.f32.xlu0 %v1067
        %v1069 = vpop.xlane.xlu0 %1068
        %v1070 = vsel %vm518, %v968, -inf
        %1071 = vmax.xlane.f32.xlu0 %v1070
        %v1072 = vpop.xlane.xlu0 %1071
        %v1073 = vsel %vm518, %v973, -inf
        %1074 = vmax.xlane.f32.xlu0 %v1073
        %v1075 = vpop.xlane.xlu0 %1074
        %v1076 = vsel %vm518, %v976, -inf
        %1077 = vmax.xlane.f32.xlu0 %v1076
        %v1078 = vpop.xlane.xlu0 %1077
        %v1079 = vsel %vm518, %v981, -inf
        %1080 = vmax.xlane.f32.xlu0 %v1079
        %v1081 = vpop.xlane.xlu0 %1080
        %v1082 = vsel %vm518, %v984, -inf
        %1083 = vmax.xlane.f32.xlu0 %v1082
        %v1084 = vpop.xlane.xlu0 %1083
        %v1085 = vsel %vm518, %v989, -inf
        %1086 = vmax.xlane.f32.xlu0 %v1085
        %v1087 = vpop.xlane.xlu0 %1086
        %v1088 = vsel %vm518, %v992, -inf
        %1089 = vmax.xlane.f32.xlu0 %v1088
        %v1090 = vpop.xlane.xlu0 %1089
        %v1091 = vsub.f32 %v869, %v997
        %v1092 = vsub.f32 %v872, %v1000
        %v1093 = vsub.f32 %v877, %v1003
        %v1094 = vsub.f32 %v880, %v1006
        %v1095 = vsub.f32 %v885, %v1009
        %v1096 = vsub.f32 %v888, %v1012
        %v1097 = vsub.f32 %v893, %v1015
        %v1098 = vsub.f32 %v896, %v1018
        %v1099 = vsub.f32 %v901, %v1021
        %v1100 = vsub.f32 %v904, %v1024
        %v1101 = vsub.f32 %v909, %v1027
        %v1102 = vsub.f32 %v912, %v1030
        %v1103 = vsub.f32 %v917, %v1033
        %v1104 = vsub.f32 %v920, %v1036
        %v1105 = vsub.f32 %v925, %v1039
        %v1106 = vsub.f32 %v928, %v1042
        %v1107 = vsub.f32 %v933, %v1045
        %v1108 = vsub.f32 %v936, %v1048
        %v1109 = vsub.f32 %v941, %v1051
        %v1110 = vsub.f32 %v944, %v1054
        %v1111 = vsub.f32 %v949, %v1057
        %v1112 = vsub.f32 %v952, %v1060
        %v1113 = vsub.f32 %v957, %v1063
        %v1114 = vsub.f32 %v960, %v1066
        %v1115 = vsub.f32 %v965, %v1069
        %v1116 = vsub.f32 %v968, %v1072
        %v1117 = vsub.f32 %v973, %v1075
        %v1118 = vsub.f32 %v976, %v1078
        %v1119 = vsub.f32 %v981, %v1081
        %v1120 = vsub.f32 %v984, %v1084
        %v1121 = vsub.f32 %v989, %v1087
        %v1122 = vsub.f32 %v992, %v1090
        %v1123 = vmul.f32 %v1091, 1.442695
        %v1124 = vpow.pop %v1123
        %v1125 = vmul.f32 %v1092, 1.442695
        %v1126 = vpow.pop %v1125
        %v1127 = vmul.f32 %v1093, 1.442695
        %v1128 = vpow.pop %v1127
        %v1129 = vmul.f32 %v1094, 1.442695
        %v1130 = vpow.pop %v1129
        %v1131 = vmul.f32 %v1095, 1.442695
        %v1132 = vpow.pop %v1131
        %v1133 = vmul.f32 %v1096, 1.442695
        %v1134 = vpow.pop %v1133
        %v1135 = vmul.f32 %v1097, 1.442695
        %v1136 = vpow.pop %v1135
        %v1137 = vmul.f32 %v1098, 1.442695
        %v1138 = vpow.pop %v1137
        %v1139 = vmul.f32 %v1099, 1.442695
        %v1140 = vpow.pop %v1139
        %v1141 = vmul.f32 %v1100, 1.442695
        %v1142 = vpow.pop %v1141
        %v1143 = vmul.f32 %v1101, 1.442695
        %v1144 = vpow.pop %v1143
        %v1145 = vmul.f32 %v1102, 1.442695
        %v1146 = vpow.pop %v1145
        %v1147 = vmul.f32 %v1103, 1.442695
        %v1148 = vpow.pop %v1147
        %v1149 = vmul.f32 %v1104, 1.442695
        %v1150 = vpow.pop %v1149
        %v1151 = vmul.f32 %v1105, 1.442695
        %v1152 = vpow.pop %v1151
        %v1153 = vmul.f32 %v1106, 1.442695
        %v1154 = vpow.pop %v1153
        %v1155 = vmul.f32 %v1107, 1.442695
        %v1156 = vpow.pop %v1155
        %v1157 = vmul.f32 %v1108, 1.442695
        %v1158 = vpow.pop %v1157
        %v1159 = vmul.f32 %v1109, 1.442695
        %v1160 = vpow.pop %v1159
        %v1161 = vmul.f32 %v1110, 1.442695
        %v1162 = vpow.pop %v1161
        %v1163 = vmul.f32 %v1111, 1.442695
        %v1164 = vpow.pop %v1163
        %v1165 = vmul.f32 %v1112, 1.442695
        %v1166 = vpow.pop %v1165
        %v1167 = vmul.f32 %v1113, 1.442695
        %v1168 = vpow.pop %v1167
        %v1169 = vmul.f32 %v1114, 1.442695
        %v1170 = vpow.pop %v1169
        %v1171 = vmul.f32 %v1115, 1.442695
        %v1172 = vpow.pop %v1171
        %v1173 = vmul.f32 %v1116, 1.442695
        %v1174 = vpow.pop %v1173
        %v1175 = vmul.f32 %v1117, 1.442695
        %v1176 = vpow.pop %v1175
        %v1177 = vmul.f32 %v1118, 1.442695
        %v1178 = vpow.pop %v1177
        %v1179 = vmul.f32 %v1119, 1.442695
        %v1180 = vpow.pop %v1179
        %v1181 = vmul.f32 %v1120, 1.442695
        %v1182 = vpow.pop %v1181
        %v1183 = vmul.f32 %v1121, 1.442695
        %v1184 = vpow.pop %v1183
        %v1185 = vmul.f32 %v1122, 1.442695
        %v1186 = vpow.pop %v1185
        %v1187 = vsel %vm518, %v1124, 0.0
        %1188 = vadd.xlane.f32.xlu0 %v1187
        %v1189 = vpop.xlane.xlu0 %1188
        %v1190 = vsel %vm518, %v1126, 0.0
        %1191 = vadd.xlane.f32.xlu0 %v1190
        %v1192 = vpop.xlane.xlu0 %1191
        %v1193 = vsel %vm518, %v1128, 0.0
        %1194 = vadd.xlane.f32.xlu0 %v1193
        %v1195 = vpop.xlane.xlu0 %1194
        %v1196 = vsel %vm518, %v1130, 0.0
        %1197 = vadd.xlane.f32.xlu0 %v1196
        %v1198 = vpop.xlane.xlu0 %1197
        %v1199 = vsel %vm518, %v1132, 0.0
        %1200 = vadd.xlane.f32.xlu0 %v1199
        %v1201 = vpop.xlane.xlu0 %1200
        %v1202 = vsel %vm518, %v1134, 0.0
        %1203 = vadd.xlane.f32.xlu0 %v1202
        %v1204 = vpop.xlane.xlu0 %1203
        %v1205 = vsel %vm518, %v1136, 0.0
        %1206 = vadd.xlane.f32.xlu0 %v1205
        %v1207 = vpop.xlane.xlu0 %1206
        %v1208 = vsel %vm518, %v1138, 0.0
        %1209 = vadd.xlane.f32.xlu0 %v1208
        %v1210 = vpop.xlane.xlu0 %1209
        %v1211 = vsel %vm518, %v1140, 0.0
        %1212 = vadd.xlane.f32.xlu0 %v1211
        %v1213 = vpop.xlane.xlu0 %1212
        %v1214 = vsel %vm518, %v1142, 0.0
        %1215 = vadd.xlane.f32.xlu0 %v1214
        %v1216 = vpop.xlane.xlu0 %1215
        %v1217 = vsel %vm518, %v1144, 0.0
        %1218 = vadd.xlane.f32.xlu0 %v1217
        %v1219 = vpop.xlane.xlu0 %1218
        %v1220 = vsel %vm518, %v1146, 0.0
        %1221 = vadd.xlane.f32.xlu0 %v1220
        %v1222 = vpop.xlane.xlu0 %1221
        %v1223 = vsel %vm518, %v1148, 0.0
        %1224 = vadd.xlane.f32.xlu0 %v1223
        %v1225 = vpop.xlane.xlu0 %1224
        %v1226 = vsel %vm518, %v1150, 0.0
        %1227 = vadd.xlane.f32.xlu0 %v1226
        %v1228 = vpop.xlane.xlu0 %1227
        %v1229 = vsel %vm518, %v1152, 0.0
        %1230 = vadd.xlane.f32.xlu0 %v1229
        %v1231 = vpop.xlane.xlu0 %1230
        %v1232 = vsel %vm518, %v1154, 0.0
        %1233 = vadd.xlane.f32.xlu0 %v1232
        %v1234 = vpop.xlane.xlu0 %1233
        %v1235 = vsel %vm518, %v1156, 0.0
        %1236 = vadd.xlane.f32.xlu0 %v1235
        %v1237 = vpop.xlane.xlu0 %1236
        %v1238 = vsel %vm518, %v1158, 0.0
        %1239 = vadd.xlane.f32.xlu0 %v1238
        %v1240 = vpop.xlane.xlu0 %1239
        %v1241 = vsel %vm518, %v1160, 0.0
        %1242 = vadd.xlane.f32.xlu0 %v1241
        %v1243 = vpop.xlane.xlu0 %1242
        %v1244 = vsel %vm518, %v1162, 0.0
        %1245 = vadd.xlane.f32.xlu0 %v1244
        %v1246 = vpop.xlane.xlu0 %1245
        %v1247 = vsel %vm518, %v1164, 0.0
        %1248 = vadd.xlane.f32.xlu0 %v1247
        %v1249 = vpop.xlane.xlu0 %1248
        %v1250 = vsel %vm518, %v1166, 0.0
        %1251 = vadd.xlane.f32.xlu0 %v1250
        %v1252 = vpop.xlane.xlu0 %1251
        %v1253 = vsel %vm518, %v1168, 0.0
        %1254 = vadd.xlane.f32.xlu0 %v1253
        %v1255 = vpop.xlane.xlu0 %1254
        %v1256 = vsel %vm518, %v1170, 0.0
        %1257 = vadd.xlane.f32.xlu0 %v1256
        %v1258 = vpop.xlane.xlu0 %1257
        %v1259 = vsel %vm518, %v1172, 0.0
        %1260 = vadd.xlane.f32.xlu0 %v1259
        %v1261 = vpop.xlane.xlu0 %1260
        %v1262 = vsel %vm518, %v1174, 0.0
        %1263 = vadd.xlane.f32.xlu0 %v1262
        %v1264 = vpop.xlane.xlu0 %1263
        %v1265 = vsel %vm518, %v1176, 0.0
        %1266 = vadd.xlane.f32.xlu0 %v1265
        %v1267 = vpop.xlane.xlu0 %1266
        %v1268 = vsel %vm518, %v1178, 0.0
        %1269 = vadd.xlane.f32.xlu0 %v1268
        %v1270 = vpop.xlane.xlu0 %1269
        %v1271 = vsel %vm518, %v1180, 0.0
        %1272 = vadd.xlane.f32.xlu0 %v1271
        %v1273 = vpop.xlane.xlu0 %1272
        %v1274 = vsel %vm518, %v1182, 0.0
        %1275 = vadd.xlane.f32.xlu0 %v1274
        %v1276 = vpop.xlane.xlu0 %1275
        %v1277 = vsel %vm518, %v1184, 0.0
        %1278 = vadd.xlane.f32.xlu0 %v1277
        %v1279 = vpop.xlane.xlu0 %1278
        %v1280 = vsel %vm518, %v1186, 0.0
        %1281 = vadd.xlane.f32.xlu0 %v1280
        %v1282 = vpop.xlane.xlu0 %1281
        %v1283 = vpack.c.bf16 %v1126, %v1124
        %v1284 = vpack.c.bf16 %v1130, %v1128
        %v1285 = vpack.c.bf16 %v1134, %v1132
        %v1286 = vpack.c.bf16 %v1138, %v1136
        %v1287 = vpack.c.bf16 %v1142, %v1140
        %v1288 = vpack.c.bf16 %v1146, %v1144
        %v1289 = vpack.c.bf16 %v1150, %v1148
        %v1290 = vpack.c.bf16 %v1154, %v1152
        %v1291 = vpack.c.bf16 %v1158, %v1156
        %v1292 = vpack.c.bf16 %v1162, %v1160
        %v1293 = vpack.c.bf16 %v1166, %v1164
        %v1294 = vpack.c.bf16 %v1170, %v1168
        %v1295 = vpack.c.bf16 %v1174, %v1172
        %v1296 = vpack.c.bf16 %v1178, %v1176
        %v1297 = vpack.c.bf16 %v1182, %v1180
        %v1298 = vpack.c.bf16 %v1186, %v1184
        %v1300 = vsel %vm518, %v1283, 0
        %v1303 = vsel %vm518, %v1284, 0
        %v1306 = vsel %vm518, %v1285, 0
        %v1309 = vsel %vm518, %v1286, 0
        %v1312 = vsel %vm518, %v1287, 0
        %v1315 = vsel %vm518, %v1288, 0
        %v1318 = vsel %vm518, %v1289, 0
        %v1321 = vsel %vm518, %v1290, 0
        %v1324 = vsel %vm518, %v1291, 0
        %v1327 = vsel %vm518, %v1292, 0
        %v1330 = vsel %vm518, %v1293, 0
        %v1333 = vsel %vm518, %v1294, 0
        %v1336 = vsel %vm518, %v1295, 0
        %v1339 = vsel %vm518, %v1296, 0
        %v1342 = vsel %vm518, %v1297, 0
        %v1345 = vsel %vm518, %v1298, 0
        %vm1347 = vcmask 1041408
        %v1349 = vsel %vm1347, %v766, 0
        %1351 = vmatprep.subr.bf16.mxu0 0
        %1352 = vmatpush1.bf16.msra.mxu0 %v1349
        %1353 = vmatprep.subr.bf16.mxu0 0
        %1354 = vmatpush1.bf16.msra.mxu0 0
        %1355 = vmatprep.subr.bf16.mxu0 0
        %1356 = vmatpush1.bf16.msra.mxu0 0
        %1357 = vmatprep.subr.bf16.mxu0 0
        %1358 = vmatpush1.bf16.msra.mxu0 0
        %1359 = vmatprep.subr.bf16.mxu0 0
        %1360 = vmatpush1.bf16.msra.mxu0 0
        %1361 = vmatprep.subr.bf16.mxu0 0
        %1362 = vmatpush1.bf16.msra.mxu0 0
        %1363 = vmatprep.subr.bf16.mxu0 0
        %1364 = vmatpush1.bf16.msra.mxu0 0
        %1365 = vmatprep.subr.bf16.mxu0 0
        %1366 = vmatpush1.bf16.msra.mxu0 0
        %1367 = vmatprep.subr.bf16.mxu0 0
        %1368 = vmatpush1.bf16.msra.mxu0 0
        %1369 = vmatprep.subr.bf16.mxu0 0
        %1370 = vmatpush1.bf16.msra.mxu0 0
        %1371 = vmatprep.subr.bf16.mxu0 0
        %1372 = vmatpush1.bf16.msra.mxu0 0
        %1373 = vmatprep.subr.bf16.mxu0 0
        %1374 = vmatpush1.bf16.msra.mxu0 0
        %1375 = vmatprep.subr.bf16.mxu0 0
        %1376 = vmatpush1.bf16.msra.mxu0 0
        %1377 = vmatprep.subr.bf16.mxu0 0
        %1378 = vmatpush1.bf16.msra.mxu0 0
        %1379 = vmatprep.subr.bf16.mxu0 0
        %1380 = vmatpush1.bf16.msra.mxu0 0
        %1381 = vmatprep.subr.bf16.mxu0 0
        %1382 = vmatpush1.bf16.msra.mxu0 0
        %1383 = vmatprep.mubr.bf16.mxu0 0
        %1384 = vmatmul.mubr.bf16.gmra.mrb[0].mxu0 %v1300
        %v1385 = vpop.f32.mrb[0].mxu0
        %v1386 = vadd.f32 0.0, %v1385
        %v1387 = vpop.f32.mrb[0].mxu0
        %v1388 = vpop.f32.mrb[0].mxu0
        %v1389 = vadd.f32 0.0, %v1388
        %v1390 = vpop.f32.mrb[0].mxu0
        %1391 = vmatprep.mubr.bf16.mxu0 0
        %1392 = vmatmul.mubr.bf16.gmra.mrb[0].mxu0 %v1303
        %v1393 = vpop.f32.mrb[0].mxu0
        %v1394 = vadd.f32 0.0, %v1393
        %v1395 = vpop.f32.mrb[0].mxu0
        %v1396 = vpop.f32.mrb[0].mxu0
        %v1397 = vadd.f32 0.0, %v1396
        %v1398 = vpop.f32.mrb[0].mxu0
        %1399 = vmatprep.mubr.bf16.mxu0 0
        %1400 = vmatmul.mubr.bf16.gmra.mrb[0].mxu0 %v1306
        %v1401 = vpop.f32.mrb[0].mxu0
        %v1402 = vadd.f32 0.0, %v1401
        %v1403 = vpop.f32.mrb[0].mxu0
        %v1404 = vpop.f32.mrb[0].mxu0
        %v1405 = vadd.f32 0.0, %v1404
        %v1406 = vpop.f32.mrb[0].mxu0
        %1407 = vmatprep.mubr.bf16.mxu0 0
        %1408 = vmatmul.mubr.bf16.gmra.mrb[0].mxu0 %v1309
        %v1409 = vpop.f32.mrb[0].mxu0
        %v1410 = vadd.f32 0.0, %v1409
        %v1411 = vpop.f32.mrb[0].mxu0
        %v1412 = vpop.f32.mrb[0].mxu0
        %v1413 = vadd.f32 0.0, %v1412
        %v1414 = vpop.f32.mrb[0].mxu0
        %1415 = vmatprep.mubr.bf16.mxu0 0
        %1416 = vmatmul.mubr.bf16.gmra.mrb[0].mxu0 %v1312
        %v1417 = vpop.f32.mrb[0].mxu0
        %v1418 = vadd.f32 0.0, %v1417
        %v1419 = vpop.f32.mrb[0].mxu0
        %v1420 = vpop.f32.mrb[0].mxu0
        %v1421 = vadd.f32 0.0, %v1420
        %v1422 = vpop.f32.mrb[0].mxu0
        %1423 = vmatprep.mubr.bf16.mxu0 0
        %1424 = vmatmul.mubr.bf16.gmra.mrb[0].mxu0 %v1315
        %v1425 = vpop.f32.mrb[0].mxu0
        %v1426 = vadd.f32 0.0, %v1425
        %v1427 = vpop.f32.mrb[0].mxu0
        %v1428 = vpop.f32.mrb[0].mxu0
        %v1429 = vadd.f32 0.0, %v1428
        %v1430 = vpop.f32.mrb[0].mxu0
        %1431 = vmatprep.mubr.bf16.mxu0 0
        %1432 = vmatmul.mubr.bf16.gmra.mrb[0].mxu0 %v1318
        %v1433 = vpop.f32.mrb[0].mxu0
        %v1434 = vadd.f32 0.0, %v1433
        %v1435 = vpop.f32.mrb[0].mxu0
        %v1436 = vpop.f32.mrb[0].mxu0
        %v1437 = vadd.f32 0.0, %v1436
        %v1438 = vpop.f32.mrb[0].mxu0
        %1439 = vmatprep.mubr.bf16.mxu0 0
        %1440 = vmatmul.mubr.bf16.gmra.mrb[0].mxu0 %v1321
        %v1441 = vpop.f32.mrb[0].mxu0
        %v1442 = vadd.f32 0.0, %v1441
        %v1443 = vpop.f32.mrb[0].mxu0
        %v1444 = vpop.f32.mrb[0].mxu0
        %v1445 = vadd.f32 0.0, %v1444
        %v1446 = vpop.f32.mrb[0].mxu0
        %1447 = vmatprep.mubr.bf16.mxu0 0
        %1448 = vmatmul.mubr.bf16.gmra.mrb[0].mxu0 %v1324
        %v1449 = vpop.f32.mrb[0].mxu0
        %v1450 = vadd.f32 0.0, %v1449
        %v1451 = vpop.f32.mrb[0].mxu0
        %v1452 = vpop.f32.mrb[0].mxu0
        %v1453 = vadd.f32 0.0, %v1452
        %v1454 = vpop.f32.mrb[0].mxu0
        %1455 = vmatprep.mubr.bf16.mxu0 0
        %1456 = vmatmul.mubr.bf16.gmra.mrb[0].mxu0 %v1327
        %v1457 = vpop.f32.mrb[0].mxu0
        %v1458 = vadd.f32 0.0, %v1457
        %v1459 = vpop.f32.mrb[0].mxu0
        %v1460 = vpop.f32.mrb[0].mxu0
        %v1461 = vadd.f32 0.0, %v1460
        %v1462 = vpop.f32.mrb[0].mxu0
        %1463 = vmatprep.mubr.bf16.mxu0 0
        %1464 = vmatmul.mubr.bf16.gmra.mrb[0].mxu0 %v1330
        %v1465 = vpop.f32.mrb[0].mxu0
        %v1466 = vadd.f32 0.0, %v1465
        %v1467 = vpop.f32.mrb[0].mxu0
        %v1468 = vpop.f32.mrb[0].mxu0
        %v1469 = vadd.f32 0.0, %v1468
        %v1470 = vpop.f32.mrb[0].mxu0
        %1471 = vmatprep.mubr.bf16.mxu0 0
        %1472 = vmatmul.mubr.bf16.gmra.mrb[0].mxu0 %v1333
        %v1473 = vpop.f32.mrb[0].mxu0
        %v1474 = vadd.f32 0.0, %v1473
        %v1475 = vpop.f32.mrb[0].mxu0
        %v1476 = vpop.f32.mrb[0].mxu0
        %v1477 = vadd.f32 0.0, %v1476
        %v1478 = vpop.f32.mrb[0].mxu0
        %1479 = vmatprep.mubr.bf16.mxu0 0
        %1480 = vmatmul.mubr.bf16.gmra.mrb[0].mxu0 %v1336
        %v1481 = vpop.f32.mrb[0].mxu0
        %v1482 = vadd.f32 0.0, %v1481
        %v1483 = vpop.f32.mrb[0].mxu0
        %v1484 = vpop.f32.mrb[0].mxu0
        %v1485 = vadd.f32 0.0, %v1484
        %v1486 = vpop.f32.mrb[0].mxu0
        %1487 = vmatprep.mubr.bf16.mxu0 0
        %1488 = vmatmul.mubr.bf16.gmra.mrb[0].mxu0 %v1339
        %v1489 = vpop.f32.mrb[0].mxu0
        %v1490 = vadd.f32 0.0, %v1489
        %v1491 = vpop.f32.mrb[0].mxu0
        %v1492 = vpop.f32.mrb[0].mxu0
        %v1493 = vadd.f32 0.0, %v1492
        %v1494 = vpop.f32.mrb[0].mxu0
        %1495 = vmatprep.mubr.bf16.mxu0 0
        %1496 = vmatmul.mubr.bf16.gmra.mrb[0].mxu0 %v1342
        %v1497 = vpop.f32.mrb[0].mxu0
        %v1498 = vadd.f32 0.0, %v1497
        %v1499 = vpop.f32.mrb[0].mxu0
        %v1500 = vpop.f32.mrb[0].mxu0
        %v1501 = vadd.f32 0.0, %v1500
        %v1502 = vpop.f32.mrb[0].mxu0
        %1503 = vmatprep.mubr.bf16.mxu0 0
        %1504 = vmatmul.mubr.bf16.gmra.mrb[0].mxu0 %v1345
        %v1505 = vpop.f32.mrb[0].mxu0
        %v1506 = vadd.f32 0.0, %v1505
        %v1507 = vpop.f32.mrb[0].mxu0
        %v1508 = vpop.f32.mrb[0].mxu0
        %v1509 = vadd.f32 0.0, %v1508
        %v1510 = vpop.f32.mrb[0].mxu0
        %1511 = vdwg.mxu0
        %v1512 = vrcp.pop %v1189
        %v1513 = vrcp.pop %v1192
        %v1514 = vrcp.pop %v1195
        %v1515 = vrcp.pop %v1198
        %v1516 = vrcp.pop %v1201
        %v1517 = vrcp.pop %v1204
        %v1518 = vrcp.pop %v1207
        %v1519 = vrcp.pop %v1210
        %v1520 = vrcp.pop %v1213
        %v1521 = vrcp.pop %v1216
        %v1522 = vrcp.pop %v1219
        %v1523 = vrcp.pop %v1222
        %v1524 = vrcp.pop %v1225
        %v1525 = vrcp.pop %v1228
        %v1526 = vrcp.pop %v1231
        %v1527 = vrcp.pop %v1234
        %v1528 = vrcp.pop %v1237
        %v1529 = vrcp.pop %v1240
        %v1530 = vrcp.pop %v1243
        %v1531 = vrcp.pop %v1246
        %v1532 = vrcp.pop %v1249
        %v1533 = vrcp.pop %v1252
        %v1534 = vrcp.pop %v1255
        %v1535 = vrcp.pop %v1258
        %v1536 = vrcp.pop %v1261
        %v1537 = vrcp.pop %v1264
        %v1538 = vrcp.pop %v1267
        %v1539 = vrcp.pop %v1270
        %v1540 = vrcp.pop %v1273
        %v1541 = vrcp.pop %v1276
        %v1542 = vrcp.pop %v1279
        %v1543 = vrcp.pop %v1282
        %v1544 = vmul.f32 %v1386, %v1512
        %v1545 = vmul.f32 %v1389, %v1513
        %v1546 = vmul.f32 %v1394, %v1514
        %v1547 = vmul.f32 %v1397, %v1515
        %v1548 = vmul.f32 %v1402, %v1516
        %v1549 = vmul.f32 %v1405, %v1517
        %v1550 = vmul.f32 %v1410, %v1518
        %v1551 = vmul.f32 %v1413, %v1519
        %v1552 = vmul.f32 %v1418, %v1520
        %v1553 = vmul.f32 %v1421, %v1521
        %v1554 = vmul.f32 %v1426, %v1522
        %v1555 = vmul.f32 %v1429, %v1523
        %v1556 = vmul.f32 %v1434, %v1524
        %v1557 = vmul.f32 %v1437, %v1525
        %v1558 = vmul.f32 %v1442, %v1526
        %v1559 = vmul.f32 %v1445, %v1527
        %v1560 = vmul.f32 %v1450, %v1528
        %v1561 = vmul.f32 %v1453, %v1529
        %v1562 = vmul.f32 %v1458, %v1530
        %v1563 = vmul.f32 %v1461, %v1531
        %v1564 = vmul.f32 %v1466, %v1532
        %v1565 = vmul.f32 %v1469, %v1533
        %v1566 = vmul.f32 %v1474, %v1534
        %v1567 = vmul.f32 %v1477, %v1535
        %v1568 = vmul.f32 %v1482, %v1536
        %v1569 = vmul.f32 %v1485, %v1537
        %v1570 = vmul.f32 %v1490, %v1538
        %v1571 = vmul.f32 %v1493, %v1539
        %v1572 = vmul.f32 %v1498, %v1540
        %v1573 = vmul.f32 %v1501, %v1541
        %v1574 = vmul.f32 %v1506, %v1542
        %v1575 = vmul.f32 %v1509, %v1543
        %v1576 = vpack.c.bf16 %v1545, %v1544
        %v1577 = vpack.c.bf16 %v1547, %v1546
        %v1578 = vpack.c.bf16 %v1549, %v1548
        %v1579 = vpack.c.bf16 %v1551, %v1550
        %v1580 = vpack.c.bf16 %v1553, %v1552
        %v1581 = vpack.c.bf16 %v1555, %v1554
        %v1582 = vpack.c.bf16 %v1557, %v1556
        %v1583 = vpack.c.bf16 %v1559, %v1558
        %v1584 = vpack.c.bf16 %v1561, %v1560
        %v1585 = vpack.c.bf16 %v1563, %v1562
        %v1586 = vpack.c.bf16 %v1565, %v1564
        %v1587 = vpack.c.bf16 %v1567, %v1566
        %v1588 = vpack.c.bf16 %v1569, %v1568
        %v1589 = vpack.c.bf16 %v1571, %v1570
        %v1590 = vpack.c.bf16 %v1573, %v1572
        %v1591 = vpack.c.bf16 %v1575, %v1574
        %v1592 = vld [vmem:[%s6] sm:$0xf]
        %v1593 = vpack.c.bf16 %v1592, %v1592
        %v1594 = vld [vmem:[%s7] sm:$0x1]
        %v1596 = vlaneseq
        %v1597 = vshrl.u32 %v1596, 7
        %v1598 = vsub.s32 0, %v1597
        %v1599 = vrot.slane %v1594, %v1598
        %v1602 = vsel %vm518, %v1576, 0
        %v1605 = vsel %vm518, %v1577, 0
        %v1608 = vsel %vm518, %v1578, 0
        %v1611 = vsel %vm518, %v1579, 0
        %v1614 = vsel %vm518, %v1580, 0
        %v1617 = vsel %vm518, %v1581, 0
        %v1620 = vsel %vm518, %v1582, 0
        %v1623 = vsel %vm518, %v1583, 0
        %v1626 = vsel %vm518, %v1584, 0
        %v1629 = vsel %vm518, %v1585, 0
        %v1632 = vsel %vm518, %v1586, 0
        %v1635 = vsel %vm518, %v1587, 0
        %v1638 = vsel %vm518, %v1588, 0
        %v1641 = vsel %vm518, %v1589, 0
        %v1644 = vsel %vm518, %v1590, 0
        %v1647 = vsel %vm518, %v1591, 0
        %v1650 = vsel %vm518, %v1593, 0
        %1652 = vmatprep.subr.bf16.mxu0 0
        %1653 = vmatpush1.bf16.xpose.msra.mxu0 %v1650
        %1654 = vmatprep.subr.bf16.mxu0 0
        %1655 = vmatpush1.bf16.xpose.msra.mxu0 0
        %1656 = vmatprep.subr.bf16.mxu0 0
        %1657 = vmatpush1.bf16.xpose.msra.mxu0 0
        %1658 = vmatprep.subr.bf16.mxu0 0
        %1659 = vmatpush1.bf16.xpose.msra.mxu0 0
        %1660 = vmatprep.subr.bf16.mxu0 0
        %1661 = vmatpush1.bf16.xpose.msra.mxu0 0
        %1662 = vmatprep.subr.bf16.mxu0 0
        %1663 = vmatpush1.bf16.xpose.msra.mxu0 0
        %1664 = vmatprep.subr.bf16.mxu0 0
        %1665 = vmatpush1.bf16.xpose.msra.mxu0 0
        %1666 = vmatprep.subr.bf16.mxu0 0
        %1667 = vmatpush1.bf16.xpose.msra.mxu0 0
        %1668 = vmatprep.subr.bf16.mxu0 0
        %1669 = vmatpush1.bf16.xpose.msra.mxu0 0
        %1670 = vmatprep.subr.bf16.mxu0 0
        %1671 = vmatpush1.bf16.xpose.msra.mxu0 0
        %1672 = vmatprep.subr.bf16.mxu0 0
        %1673 = vmatpush1.bf16.xpose.msra.mxu0 0
        %1674 = vmatprep.subr.bf16.mxu0 0
        %1675 = vmatpush1.bf16.xpose.msra.mxu0 0
        %1676 = vmatprep.subr.bf16.mxu0 0
        %1677 = vmatpush1.bf16.xpose.msra.mxu0 0
        %1678 = vmatprep.subr.bf16.mxu0 0
        %1679 = vmatpush1.bf16.xpose.msra.mxu0 0
        %1680 = vmatprep.subr.bf16.mxu0 0
        %1681 = vmatpush1.bf16.xpose.msra.mxu0 0
        %1682 = vmatprep.subr.bf16.mxu0 0
        %1683 = vmatpush1.bf16.xpose.msra.mxu0 0
        %1684 = vmatprep.mubr.bf16.mxu0 0
        %1685 = vmatmul.mubr.bf16.gmra.mrb[0].mxu0 %v1602
        %v1686 = vpop.f32.mrb[0].mxu0
        %v1687 = vadd.f32 %v1599, %v1686
        %v1688 = vpop.f32.mrb[0].mxu0
        %v1689 = vpop.f32.mrb[0].mxu0
        %v1690 = vadd.f32 %v1599, %v1689
        %v1691 = vpop.f32.mrb[0].mxu0
        %1692 = vmatprep.mubr.bf16.mxu0 0
        %1693 = vmatmul.mubr.bf16.gmra.mrb[0].mxu0 %v1605
        %v1694 = vpop.f32.mrb[0].mxu0
        %v1695 = vadd.f32 %v1599, %v1694
        %v1696 = vpop.f32.mrb[0].mxu0
        %v1697 = vpop.f32.mrb[0].mxu0
        %v1698 = vadd.f32 %v1599, %v1697
        %v1699 = vpop.f32.mrb[0].mxu0
        %1700 = vmatprep.mubr.bf16.mxu0 0
        %1701 = vmatmul.mubr.bf16.gmra.mrb[0].mxu0 %v1608
        %v1702 = vpop.f32.mrb[0].mxu0
        %v1703 = vadd.f32 %v1599, %v1702
        %v1704 = vpop.f32.mrb[0].mxu0
        %v1705 = vpop.f32.mrb[0].mxu0
        %v1706 = vadd.f32 %v1599, %v1705
        %v1707 = vpop.f32.mrb[0].mxu0
        %1708 = vmatprep.mubr.bf16.mxu0 0
        %1709 = vmatmul.mubr.bf16.gmra.mrb[0].mxu0 %v1611
        %v1710 = vpop.f32.mrb[0].mxu0
        %v1711 = vadd.f32 %v1599, %v1710
        %v1712 = vpop.f32.mrb[0].mxu0
        %v1713 = vpop.f32.mrb[0].mxu0
        %v1714 = vadd.f32 %v1599, %v1713
        %v1715 = vpop.f32.mrb[0].mxu0
        %1716 = vmatprep.mubr.bf16.mxu0 0
        %1717 = vmatmul.mubr.bf16.gmra.mrb[0].mxu0 %v1614
        %v1718 = vpop.f32.mrb[0].mxu0
        %v1719 = vadd.f32 %v1599, %v1718
        %v1720 = vpop.f32.mrb[0].mxu0
        %v1721 = vpop.f32.mrb[0].mxu0
        %v1722 = vadd.f32 %v1599, %v1721
        %v1723 = vpop.f32.mrb[0].mxu0
        %1724 = vmatprep.mubr.bf16.mxu0 0
        %1725 = vmatmul.mubr.bf16.gmra.mrb[0].mxu0 %v1617
        %v1726 = vpop.f32.mrb[0].mxu0
        %v1727 = vadd.f32 %v1599, %v1726
        %v1728 = vpop.f32.mrb[0].mxu0
        %v1729 = vpop.f32.mrb[0].mxu0
        %v1730 = vadd.f32 %v1599, %v1729
        %v1731 = vpop.f32.mrb[0].mxu0
        %1732 = vmatprep.mubr.bf16.mxu0 0
        %1733 = vmatmul.mubr.bf16.gmra.mrb[0].mxu0 %v1620
        %v1734 = vpop.f32.mrb[0].mxu0
        %v1735 = vadd.f32 %v1599, %v1734
        %v1736 = vpop.f32.mrb[0].mxu0
        %v1737 = vpop.f32.mrb[0].mxu0
        %v1738 = vadd.f32 %v1599, %v1737
        %v1739 = vpop.f32.mrb[0].mxu0
        %1740 = vmatprep.mubr.bf16.mxu0 0
        %1741 = vmatmul.mubr.bf16.gmra.mrb[0].mxu0 %v1623
        %v1742 = vpop.f32.mrb[0].mxu0
        %v1743 = vadd.f32 %v1599, %v1742
        %v1744 = vpop.f32.mrb[0].mxu0
        %v1745 = vpop.f32.mrb[0].mxu0
        %v1746 = vadd.f32 %v1599, %v1745
        %v1747 = vpop.f32.mrb[0].mxu0
        %1748 = vmatprep.mubr.bf16.mxu0 0
        %1749 = vmatmul.mubr.bf16.gmra.mrb[0].mxu0 %v1626
        %v1750 = vpop.f32.mrb[0].mxu0
        %v1751 = vadd.f32 %v1599, %v1750
        %v1752 = vpop.f32.mrb[0].mxu0
        %v1753 = vpop.f32.mrb[0].mxu0
        %v1754 = vadd.f32 %v1599, %v1753
        %v1755 = vpop.f32.mrb[0].mxu0
        %1756 = vmatprep.mubr.bf16.mxu0 0
        %1757 = vmatmul.mubr.bf16.gmra.mrb[0].mxu0 %v1629
        %v1758 = vpop.f32.mrb[0].mxu0
        %v1759 = vadd.f32 %v1599, %v1758
        %v1760 = vpop.f32.mrb[0].mxu0
        %v1761 = vpop.f32.mrb[0].mxu0
        %v1762 = vadd.f32 %v1599, %v1761
        %v1763 = vpop.f32.mrb[0].mxu0
        %1764 = vmatprep.mubr.bf16.mxu0 0
        %1765 = vmatmul.mubr.bf16.gmra.mrb[0].mxu0 %v1632
        %v1766 = vpop.f32.mrb[0].mxu0
        %v1767 = vadd.f32 %v1599, %v1766
        %v1768 = vpop.f32.mrb[0].mxu0
        %v1769 = vpop.f32.mrb[0].mxu0
        %v1770 = vadd.f32 %v1599, %v1769
        %v1771 = vpop.f32.mrb[0].mxu0
        %1772 = vmatprep.mubr.bf16.mxu0 0
        %1773 = vmatmul.mubr.bf16.gmra.mrb[0].mxu0 %v1635
        %v1774 = vpop.f32.mrb[0].mxu0
        %v1775 = vadd.f32 %v1599, %v1774
        %v1776 = vpop.f32.mrb[0].mxu0
        %v1777 = vpop.f32.mrb[0].mxu0
        %v1778 = vadd.f32 %v1599, %v1777
        %v1779 = vpop.f32.mrb[0].mxu0
        %1780 = vmatprep.mubr.bf16.mxu0 0
        %1781 = vmatmul.mubr.bf16.gmra.mrb[0].mxu0 %v1638
        %v1782 = vpop.f32.mrb[0].mxu0
        %v1783 = vadd.f32 %v1599, %v1782
        %v1784 = vpop.f32.mrb[0].mxu0
        %v1785 = vpop.f32.mrb[0].mxu0
        %v1786 = vadd.f32 %v1599, %v1785
        %v1787 = vpop.f32.mrb[0].mxu0
        %1788 = vmatprep.mubr.bf16.mxu0 0
        %1789 = vmatmul.mubr.bf16.gmra.mrb[0].mxu0 %v1641
        %v1790 = vpop.f32.mrb[0].mxu0
        %v1791 = vadd.f32 %v1599, %v1790
        %v1792 = vpop.f32.mrb[0].mxu0
        %v1793 = vpop.f32.mrb[0].mxu0
        %v1794 = vadd.f32 %v1599, %v1793
        %v1795 = vpop.f32.mrb[0].mxu0
        %1796 = vmatprep.mubr.bf16.mxu0 0
        %1797 = vmatmul.mubr.bf16.gmra.mrb[0].mxu0 %v1644
        %v1798 = vpop.f32.mrb[0].mxu0
        %v1799 = vadd.f32 %v1599, %v1798
        %v1800 = vpop.f32.mrb[0].mxu0
        %v1801 = vpop.f32.mrb[0].mxu0
        %v1802 = vadd.f32 %v1599, %v1801
        %v1803 = vpop.f32.mrb[0].mxu0
        %1804 = vmatprep.mubr.bf16.mxu0 0
        %1805 = vmatmul.mubr.bf16.gmra.mrb[0].mxu0 %v1647
        %v1806 = vpop.f32.mrb[0].mxu0
        %v1807 = vadd.f32 %v1599, %v1806
        %v1808 = vpop.f32.mrb[0].mxu0
        %v1809 = vpop.f32.mrb[0].mxu0
        %v1810 = vadd.f32 %v1599, %v1809
        %v1811 = vpop.f32.mrb[0].mxu0
        %1812 = vdwg.mxu0
        %v1813 = vld [vmem:[%s8] sm:$0xff]
        %v1814 = vld [vmem:[%s8 + $0x8] sm:$0xff]
        %v1815 = vpack.c.bf16 %v1814, %v1813
        %v1816 = vpack.c.bf16 %v1690, %v1687
        %v1817 = vpack.c.bf16 %v1698, %v1695
        %v1818 = vpack.c.bf16 %v1706, %v1703
        %v1819 = vpack.c.bf16 %v1714, %v1711
        %v1820 = vpack.c.bf16 %v1722, %v1719
        %v1821 = vpack.c.bf16 %v1730, %v1727
        %v1822 = vpack.c.bf16 %v1738, %v1735
        %v1823 = vpack.c.bf16 %v1746, %v1743
        %v1824 = vpack.c.bf16 %v1754, %v1751
        %v1825 = vpack.c.bf16 %v1762, %v1759
        %v1826 = vpack.c.bf16 %v1770, %v1767
        %v1827 = vpack.c.bf16 %v1778, %v1775
        %v1828 = vpack.c.bf16 %v1786, %v1783
        %v1829 = vpack.c.bf16 %v1794, %v1791
        %v1830 = vpack.c.bf16 %v1802, %v1799
        %v1831 = vpack.c.bf16 %v1810, %v1807
        %v1833 = vsel %vm518, %v1815, 0
        %v1836 = vsel %vm518, %v1816, 0
        %v1839 = vsel %vm518, %v1817, 0
        %v1842 = vsel %vm518, %v1818, 0
        %v1845 = vsel %vm518, %v1819, 0
        %v1848 = vsel %vm518, %v1820, 0
        %v1851 = vsel %vm518, %v1821, 0
        %v1854 = vsel %vm518, %v1822, 0
        %v1857 = vsel %vm518, %v1823, 0
        %v1860 = vsel %vm518, %v1824, 0
        %v1863 = vsel %vm518, %v1825, 0
        %v1866 = vsel %vm518, %v1826, 0
        %v1869 = vsel %vm518, %v1827, 0
        %v1872 = vsel %vm518, %v1828, 0
        %v1875 = vsel %vm518, %v1829, 0
        %v1878 = vsel %vm518, %v1830, 0
        %v1881 = vsel %vm518, %v1831, 0
        %1883 = vmatprep.subr.bf16.mxu0 0
        %1884 = vmatpush1.bf16.xpose.msra.mxu0 %v1836
        %1885 = vmatprep.subr.bf16.mxu0 0
        %1886 = vmatpush1.bf16.xpose.msra.mxu0 %v1839
        %1887 = vmatprep.subr.bf16.mxu0 0
        %1888 = vmatpush1.bf16.xpose.msra.mxu0 %v1842
        %1889 = vmatprep.subr.bf16.mxu0 0
        %1890 = vmatpush1.bf16.xpose.msra.mxu0 %v1845
        %1891 = vmatprep.subr.bf16.mxu0 0
        %1892 = vmatpush1.bf16.xpose.msra.mxu0 %v1848
        %1893 = vmatprep.subr.bf16.mxu0 0
        %1894 = vmatpush1.bf16.xpose.msra.mxu0 %v1851
        %1895 = vmatprep.subr.bf16.mxu0 0
        %1896 = vmatpush1.bf16.xpose.msra.mxu0 %v1854
        %1897 = vmatprep.subr.bf16.mxu0 0
        %1898 = vmatpush1.bf16.xpose.msra.mxu0 %v1857
        %1899 = vmatprep.subr.bf16.mxu0 0
        %1900 = vmatpush1.bf16.xpose.msra.mxu0 %v1860
        %1901 = vmatprep.subr.bf16.mxu0 0
        %1902 = vmatpush1.bf16.xpose.msra.mxu0 %v1863
        %1903 = vmatprep.subr.bf16.mxu0 0
        %1904 = vmatpush1.bf16.xpose.msra.mxu0 %v1866
        %1905 = vmatprep.subr.bf16.mxu0 0
        %1906 = vmatpush1.bf16.xpose.msra.mxu0 %v1869
        %1907 = vmatprep.subr.bf16.mxu0 0
        %1908 = vmatpush1.bf16.xpose.msra.mxu0 %v1872
        %1909 = vmatprep.subr.bf16.mxu0 0
        %1910 = vmatpush1.bf16.xpose.msra.mxu0 %v1875
        %1911 = vmatprep.subr.bf16.mxu0 0
        %1912 = vmatpush1.bf16.xpose.msra.mxu0 %v1878
        %1913 = vmatprep.subr.bf16.mxu0 0
        %1914 = vmatpush1.bf16.xpose.msra.mxu0 %v1881
        %1915 = vmatprep.mubr.bf16.mxu0 0
        %1916 = vmatmul.mubr.bf16.gmra.mrb[0].mxu0 %v1833
        %v1917 = vpop.f32.mrb[0].mxu0
        %v1918 = vadd.f32 0.0, %v1917
        %v1919 = vpop.f32.mrb[0].mxu0
        %v1920 = vadd.f32 0.0, %v1919
        %v1921 = vpop.f32.mrb[0].mxu0
        %v1922 = vadd.f32 0.0, %v1921
        %v1923 = vpop.f32.mrb[0].mxu0
        %v1924 = vadd.f32 0.0, %v1923
        %1925 = vdwg.mxu0
        %v1926 = vld [vmem:[%s399] sm:$0xff]
        %v1927 = vld [vmem:[%s399 + $0x8] sm:$0xff]
        %v1928 = vld [vmem:[%s399 + $0x10] sm:$0xff]
        %v1929 = vld [vmem:[%s399 + $0x18] sm:$0xff]
        %v1930 = vadd.f32 %v1926, %v1918
        %v1931 = vadd.f32 %v1927, %v1920
        %v1932 = vadd.f32 %v1928, %v1922
        %v1933 = vadd.f32 %v1929, %v1924
        %v1934 = vld [vmem:[%s9] sm:$0xff]
        %v1935 = vld [vmem:[%s9 + $0x8] sm:$0xff]
        %1937 = vset.pattern.permute.xlu0 0
        %1938 = vperm.xlu0 %1937, %v1934
        %v1939 = vpop.permute.xlu0 %1938
        %1942 = vset.pattern.permute.xlu0 0
        %1943 = vperm.xlu0 %1942, %v1935
        %v1944 = vpop.permute.xlu0 %1943
        %v1946 = vadd.f32 %v1930, %v1939
        %v1947 = vadd.f32 %v1931, %v1939
        %v1948 = vadd.f32 %v1932, %v1944
        %v1949 = vadd.f32 %v1933, %v1944
        %1950 = vst [vmem:[%s449] sm:$0xff] %v1946
        %1951 = vst [vmem:[%s449 + $0x8] sm:$0xff] %v1947
        %1952 = vst [vmem:[%s449 + $0x10] sm:$0xff] %v1948
        %1953 = vst [vmem:[%s449 + $0x18] sm:$0xff] %v1949
        %s1954 = sand.u32 %s277, 1
        %s1955 = sand.u32 %s277, 1
        %s1956 = smul.addr %s1955, 32
        %s1957 = scalar_lea.vmem [#allocation3], %s1956
        // Predicated region
        $region84: #{forward.7} parent=78 // pred_check
          %p1958 = pneg %p287
        $region85: #{forward.7} parent=78 // pred_check_branch
          %1960 = sbr.rel (%p1958) target = $region87
        $region86: #{forward.7} parent=78 // pred_region
          %s1961 = smul.u32 2, %s26
          %s1962 = smul.addr %s25, 16
          %s1963 = sadd.s32 %s1961, %s1962
          %s1964 = smul.addr %s1963, 8
          %s1965 = scalar_lea.vmem %s10, %s1964
          // Predicated region
          $region88: #{forward.7} parent=86 // pred_check
            _
          $region89: #{forward.7} parent=86 // pred_check_branch
            %1967 = sbr.rel (0) target = $region91
          $region90: #{forward.7} parent=86 // pred_region
            // Predicated region
            $region92: #{forward.7} parent=90 // pred_check
              _
            $region93: #{forward.7} parent=90 // pred_check_branch
              %1969 = sbr.rel (0) target = $region95
            $region94: #{forward.7} parent=90 // pred_region
              loop: start=0, step=1, limit=1
              $region96: #{forward.7} parent=94 // loop_pre_header
                _
              $region97: #{forward.7} parent=94 // loop_header
                %s1971 = sphi 0, %s1975
                %p1972 = scmp.ge.s32.totalorder %s1971, 1
                %s1976 = sphi %s1957, %s1957
                %s1977 = sphi %s1965, %s1965
              $region98: #{forward.7} parent=94 // loop_header_branch
                %1974 = sbr.rel (%p1972) target = $region102
              $region99: #{forward.7} parent=94 // loop_body
                %v1978 = vld [vmem:[%s1976] sm:$0xff]
                %1979 = vst [vmem:[%s1977] sm:$0xff] %v1978
                %v1980 = vld [vmem:[%s1976 + $0x8] sm:$0xff]
                %1981 = vst [vmem:[%s1977 + $0x8] sm:$0xff] %v1980
                %v1982 = vld [vmem:[%s1976 + $0x10] sm:$0xff]
                %1983 = vst [vmem:[%s1977 + $0x40] sm:$0xff] %v1982
                %v1984 = vld [vmem:[%s1976 + $0x18] sm:$0xff]
                %1985 = vst [vmem:[%s1977 + $0x48] sm:$0xff] %v1984
              $region100: #{forward.7} parent=94 // loop_footer
                %s1975 = sadd.s32 1, %s1971
              $region101: #{forward.7} parent=94 // loop_footer_branch
                %1970 = sbr.rel target = $region97
              $region102: #{forward.7} parent=94 // loop_exit
                _
            $region95: #{forward.7} parent=90 // pred_fallthru
              _
            // Predicated region
            $region103: #{forward.7} parent=90 // pred_check
              _
            $region104: #{forward.7} parent=90 // pred_check_branch
              %1987 = sbr.rel target = $region106
            $region105: #{forward.7} parent=90 // pred_region
              _
            $region106: #{forward.7} parent=90 // pred_fallthru
              _
          $region91: #{forward.7} parent=86 // pred_fallthru
            _
          %1988 = vnop
        $region87: #{forward.7} parent=78 // pred_fallthru
          _
      $region79: #{forward.7} parent=5 // pred_fallthru
        _
      %p1989 = scmp.le.s32.totalorder 2, %s16
      // Predicated region
      $region107: #{forward.7} parent=5 // pred_check
        %p1990 = pneg %p1989
      $region108: #{forward.7} parent=5 // pred_check_branch
        %1992 = sbr.rel (%p1990) target = $region110
      $region109: #{forward.7} parent=5 // pred_region
        %s1993 = ssub.s32 %s16, 2
        // Predicated region
        $region111: #{forward.7} parent=109 // pred_check
          %p1994 = pneg %p293
        $region112: #{forward.7} parent=109 // pred_check_branch
          %1996 = sbr.rel (%p1994) target = $region114
        $region113: #{forward.7} parent=109 // pred_region
          %s1997 = sand.u32 %s278, 1
          %s1998 = sand.u32 %s278, 1
          %s1999 = smul.addr %s1998, 32
          %s2000 = scalar_lea.vmem [#allocation3], %s1999
        $region114: #{forward.7} parent=109 // pred_fallthru
          _
      $region110: #{forward.7} parent=5 // pred_fallthru
        _
    $region6: #{forward.7} parent=1 // loop_footer
      %s20 = sadd.s32 1, %s16
    $region7: #{forward.7} parent=1 // loop_footer_branch
      %15 = sbr.rel target = $region3
    $region8: #{forward.7} parent=1 // loop_exit
      _

</llo_original>
